<compile_context>
chip_gen: v7x
topology: tpu7x:2x2x1
jax: 0.10.0
libtpu: 0.0.40
codegen_flags: <defaults>
</compile_context>

<pallas_src>
import numpy as np
import jax
import jax.numpy as jnp
from jax.experimental import pallas as pl
from jax.experimental.pallas import tpu as pltpu


# =============================================================================
# Kernel: conv1..conv4 (+folded BN, ReLU), max-pool over points, both heads.
# Grid = (B, num_point_tiles).  The pooled max lives in a VMEM scratch
# accumulator; the (8, out_lanes) output block is written only in the epilogue.
# =============================================================================
def _make_encoder_kernel(n_points: int, tile_n: int, d_in: int):
    mask_tail = (n_points % tile_n) != 0

    def kernel(x_ref, w1_ref, b1_ref, w2_ref, b2_ref, w3_ref, b3_ref,
               w4_ref, b4_ref, hw1_ref, hb1_ref, hw2_ref, hb2_ref,
               hw3_ref, hb3_ref, o_ref, acc_ref):
        nt = pl.program_id(1)

        x = x_ref[0].astype(jnp.float32)                       # (tile_n, d_in)

        # Layer 1: K = d_in (=3) is tiny -> VPU broadcast MACs, not MXU.
        h = b1_ref[...] + x[:, 0:1] * w1_ref[0:1, :]
        for d in range(1, d_in):
            h = h + x[:, d:d + 1] * w1_ref[d:d + 1, :]
        h = jnp.maximum(h, 0.0)                                 # (tile_n, 128)

        # Layers 2..4: bf16 operands, f32 accumulation (single-pass MXU).
        h = jnp.dot(h.astype(jnp.bfloat16), w2_ref[...],
                    preferred_element_type=jnp.float32) + b2_ref[...]
        h = jnp.maximum(h, 0.0)                                 # (tile_n, 128)
        h = jnp.dot(h.astype(jnp.bfloat16), w3_ref[...],
                    preferred_element_type=jnp.float32) + b3_ref[...]
        h = jnp.maximum(h, 0.0)                                 # (tile_n, 256)
        h = jnp.dot(h.astype(jnp.bfloat16), w4_ref[...],
                    preferred_element_type=jnp.float32) + b4_ref[...]
        # bn4 output, NO ReLU (matches the PyTorch forward)     # (tile_n, 512)

        if mask_tail:
            # Narrow (tile_n, 1) iota; jnp.where broadcasts it over the lanes.
            idx = (jax.lax.broadcasted_iota(jnp.int32, (h.shape[0], 1), 0)
                   + nt * tile_n)
            h = jnp.where(idx < n_points, h, -jnp.inf)

        tile_max = jnp.max(h, axis=0, keepdims=True)            # (1, 512)

        @pl.when(nt == 0)
        def _():
            acc_ref[...] = jnp.full(acc_ref.shape, -jnp.inf, acc_ref.dtype)

        acc_ref[...] = jnp.maximum(acc_ref[...], tile_max)      # (8, 512)

        # Epilogue: both MLP heads fused on the pooled feature (8 tiny rows).
        @pl.when(nt == pl.num_programs(1) - 1)
        def _():
            f = acc_ref[...]                                    # (8, 512)
            g = jnp.dot(f.astype(jnp.bfloat16), hw1_ref[...],
                        preferred_element_type=jnp.float32) + hb1_ref[...]
            g = jnp.maximum(g, 0.0)                             # (8, 512)
            g = jnp.dot(g.astype(jnp.bfloat16), hw2_ref[...],
                        preferred_element_type=jnp.float32) + hb2_ref[...]
            g = jnp.maximum(g, 0.0)                             # (8, 256)
            g = jnp.dot(g.astype(jnp.bfloat16), hw3_ref[...],
                        preferred_element_type=jnp.float32) + hb3_ref[...]
            o_ref[...] = g                       # (8, out_lanes) = [m | v | 0]

    return kernel


def encoder_fused(x, p):
    """x: (B, N, d_in) -> (B*8, out_lanes) f32 slab [m | v | pad] per batch."""
    B, N, d_in = x.shape
    tile_cap = 2048                              # bf16 matmuls -> bigger tiles
    tile_n = N if N <= tile_cap else tile_cap
    num_tiles = pl.cdiv(N, tile_n)

    args = [x.astype(jnp.bfloat16),
            p['w1'], p['b1'], p['w2'], p['b2'], p['w3'], p['b3'],
            p['w4'], p['b4'],
            p['hw1'], p['hb1'], p['hw2'], p['hb2'], p['hw3'], p['hb3']]
    out_lanes = p['hw3'].shape[1]
    c4 = p['w4'].shape[1]

    def const_spec(shape):
        nd = len(shape)
        return pl.BlockSpec(shape, lambda b, t, _nd=nd: (0,) * _nd)

    in_specs = [pl.BlockSpec((1, tile_n, d_in), lambda b, t: (b, t, 0))]
    in_specs += [const_spec(a.shape) for a in args[1:]]

    return pl.pallas_call(
        _make_encoder_kernel(N, tile_n, d_in),
        out_shape=jax.ShapeDtypeStruct((B * 8, out_lanes), jnp.float32),
        grid_spec=pltpu.PrefetchScalarGridSpec(
            num_scalar_prefetch=0,
            grid=(B, num_tiles),
            in_specs=in_specs,
            out_specs=pl.BlockSpec((8, out_lanes), lambda b, t: (b, 0)),
            scratch_shapes=[pltpu.VMEM((8, c4), jnp.float32)],
        ),
        compiler_params=pltpu.CompilerParams(
            dimension_semantics=("parallel", "arbitrary"),
            vmem_limit_bytes=48 * 1024 * 1024),
    )(*args)


def encoder_forward(x, params):
    B = x.shape[0]
    zdim = params['zdim']
    slab = encoder_fused(x, params)              # (B*8, out_lanes)
    slab = slab.reshape(B, 8, -1)
    m = slab[:, 0, :zdim]
    v = slab[:, 0, zdim:2 * zdim]
    return m, v


# =============================================================================
# Parameter construction, BN folding, head-weight fusion, pure-JAX reference.
# =============================================================================
def fold_bn(W, b, gamma, beta, mean, var, eps=1e-5):
    """Fold eval-mode BatchNorm1d into the preceding linear / 1x1-conv layer.
    Returns (W_t:(Cin,Cout), bias:(1,Cout)) so kernels compute x @ W_t + bias."""
    s = gamma / jnp.sqrt(var + eps)
    w_t = (W * s[:, None]).T
    bias = b * s + (beta - mean * s)
    return w_t.astype(jnp.float32), bias.reshape(1, -1).astype(jnp.float32)


def fold_plain(W, b):
    return W.T.astype(jnp.float32), b.reshape(1, -1).astype(jnp.float32)


def _block_diag2(a, b):
    r1, c1 = a.shape
    r2, c2 = b.shape
    out = jnp.zeros((r1 + r2, c1 + c2), jnp.float32)
    out = out.at[:r1, :c1].set(a)
    out = out.at[r1:, c1:].set(b)
    return out


def prepare_params(raw, zdim):
    conv = [fold_bn(*raw['conv'][i], *raw['bn'][i]) for i in range(4)]
    fcm = [fold_bn(*raw['fc_m'][0], *raw['bn_m'][0]),
           fold_bn(*raw['fc_m'][1], *raw['bn_m'][1]),
           fold_plain(*raw['fc_m'][2])]
    fcv = [fold_bn(*raw['fc_v'][0], *raw['bn_v'][0]),
           fold_bn(*raw['fc_v'][1], *raw['bn_v'][1]),
           fold_plain(*raw['fc_v'][2])]

    # Both heads consume the same pooled feature: layer 1 is a lane-concat,
    # layers 2/3 are block-diagonal, and the final layer is zero-padded so the
    # kernel writes one lane-dense (>=128 lane) [m | v | pad] slab.
    hw1 = jnp.concatenate([fcm[0][0], fcv[0][0]], axis=1)       # (512, 512)
    hb1 = jnp.concatenate([fcm[0][1], fcv[0][1]], axis=1)       # (1, 512)
    hw2 = _block_diag2(fcm[1][0], fcv[1][0])                    # (512, 256)
    hb2 = jnp.concatenate([fcm[1][1], fcv[1][1]], axis=1)       # (1, 256)
    hw3 = _block_diag2(fcm[2][0], fcv[2][0])                    # (256, 2*zdim)
    hb3 = jnp.concatenate([fcm[2][1], fcv[2][1]], axis=1)       # (1, 2*zdim)
    out_lanes = ((2 * zdim + 127) // 128) * 128
    pad = out_lanes - hw3.shape[1]
    hw3 = jnp.pad(hw3, ((0, 0), (0, pad)))
    hb3 = jnp.pad(hb3, ((0, 0), (0, pad)))

    bf16 = lambda a: a.astype(jnp.bfloat16)
    return {
        'w1': conv[0][0], 'b1': conv[0][1],      # layer 1 stays f32 (VPU path)
        'w2': bf16(conv[1][0]), 'b2': conv[1][1],
        'w3': bf16(conv[2][0]), 'b3': conv[2][1],
        'w4': bf16(conv[3][0]), 'b4': conv[3][1],
        'hw1': bf16(hw1), 'hb1': hb1,
        'hw2': bf16(hw2), 'hb2': hb2,
        'hw3': bf16(hw3), 'hb3': hb3,
        'zdim': zdim,
    }


def init_linear(key, c_in, c_out):
    kw, kb = jax.random.split(key)
    bound = 1.0 / float(np.sqrt(c_in))
    W = jax.random.uniform(kw, (c_out, c_in), jnp.float32, -bound, bound)
    b = jax.random.uniform(kb, (c_out,), jnp.float32, -bound, bound)
    return W, b


def init_bn(key, c):
    k1, k2, k3, k4 = jax.random.split(key, 4)
    gamma = 1.0 + 0.1 * jax.random.normal(k1, (c,), jnp.float32)
    beta = 0.1 * jax.random.normal(k2, (c,), jnp.float32)
    mean = 0.1 * jax.random.normal(k3, (c,), jnp.float32)
    var = jax.random.uniform(k4, (c,), jnp.float32, 0.5, 1.5)
    return gamma, beta, mean, var


def encoder_ref(x, raw, eps=1e-5):
    B, N, d_in = x.shape

    def bn(h, p):
        gamma, beta, mean, var = p
        return (h - mean) / jnp.sqrt(var + eps) * gamma + beta

    h = x.reshape(B * N, d_in)
    for i in range(4):
        W, b = raw['conv'][i]
        h = bn(jnp.dot(h, W.T) + b, raw['bn'][i])
        if i < 3:
            h = jnp.maximum(h, 0.0)
    pooled = jnp.max(h.reshape(B, N, -1), axis=1)               # (B, 512)

    def head(fcs, bns):
        y = pooled
        for i in range(2):
            W, b = fcs[i]
            y = jnp.maximum(bn(jnp.dot(y, W.T) + b, bns[i]), 0.0)
        W, b = fcs[2]
        return jnp.dot(y, W.T) + b

    return head(raw['fc_m'], raw['bn_m']), head(raw['fc_v'], raw['bn_v'])


if __name__ == "__main__":
    B, N, D_IN, ZDIM = 2, 64, 3, 32

    root = jax.random.PRNGKey(0)
    keys = iter(jax.random.split(root, 32))

    x = jax.random.normal(next(keys), (B, N, D_IN), jnp.float32)

    raw = {'conv': [], 'bn': [], 'fc_m': [], 'bn_m': [], 'fc_v': [], 'bn_v': []}
    for c_in, c_out in [(D_IN, 128), (128, 128), (128, 256), (256, 512)]:
        raw['conv'].append(init_linear(next(keys), c_in, c_out))
        raw['bn'].append(init_bn(next(keys), c_out))
    head_dims = [(512, 256), (256, 128), (128, ZDIM)]
    for fc_name, bn_name in (('fc_m', 'bn_m'), ('fc_v', 'bn_v')):
        for i, (c_in, c_out) in enumerate(head_dims):
            raw[fc_name].append(init_linear(next(keys), c_in, c_out))
            if i < 2:
                raw[bn_name].append(init_bn(next(keys), c_out))

    params = prepare_params(raw, ZDIM)

    m, v = encoder_forward(x, params)
    m = jax.block_until_ready(m)
    v = jax.block_until_ready(v)

    m_ref, v_ref = encoder_ref(x, raw)

    assert m.shape == (B, ZDIM) and v.shape == (B, ZDIM)
    # Tolerance covers the intentional bf16 MXU operands (f32 accumulation).
    np.testing.assert_allclose(np.asarray(m), np.asarray(m_ref), rtol=3e-2, atol=3e-2)
    np.testing.assert_allclose(np.asarray(v), np.asarray(v_ref), rtol=3e-2, atol=3e-2)
    print("KERNEL_OK")
</pallas_src>

<mosaic_0001>
module attributes {stable_mosaic.version = 11 : i64} {
  func.func @kernel(%arg0: i32, %arg1: i32, %arg2: memref<1x64x3xbf16, #tpu.memory_space<vmem>>, %arg3: memref<3x128xf32, #tpu.memory_space<vmem>>, %arg4: memref<1x128xf32, #tpu.memory_space<vmem>>, %arg5: memref<128x128xbf16, #tpu.memory_space<vmem>>, %arg6: memref<1x128xf32, #tpu.memory_space<vmem>>, %arg7: memref<128x256xbf16, #tpu.memory_space<vmem>>, %arg8: memref<1x256xf32, #tpu.memory_space<vmem>>, %arg9: memref<256x512xbf16, #tpu.memory_space<vmem>>, %arg10: memref<1x512xf32, #tpu.memory_space<vmem>>, %arg11: memref<512x512xbf16, #tpu.memory_space<vmem>>, %arg12: memref<1x512xf32, #tpu.memory_space<vmem>>, %arg13: memref<512x256xbf16, #tpu.memory_space<vmem>>, %arg14: memref<1x256xf32, #tpu.memory_space<vmem>>, %arg15: memref<256x128xbf16, #tpu.memory_space<vmem>>, %arg16: memref<1x128xf32, #tpu.memory_space<vmem>>, %arg17: memref<8x128xf32, #tpu.memory_space<vmem>>, %arg18: memref<8x512xf32, #tpu.memory_space<vmem>>) attributes {dimension_semantics = [#tpu.dimension_semantics<parallel>, #tpu.dimension_semantics<arbitrary>], iteration_bounds = array<i64: 2, 1>, scalar_prefetch = 0 : i64, scratch_operands = 1 : i64, tpu.core_type = #tpu.core_type<tc>, window_params = [{transform_indices = @transform_0, window_bounds = array<i64: 1, 64, 3>}, {pipeline_mode = #tpu.pipeline_mode<synchronous>, transform_indices = @transform_1, window_bounds = array<i64: 3, 128>}, {pipeline_mode = #tpu.pipeline_mode<synchronous>, transform_indices = @transform_2, window_bounds = array<i64: 1, 128>}, {pipeline_mode = #tpu.pipeline_mode<synchronous>, transform_indices = @transform_3, window_bounds = array<i64: 128, 128>}, {pipeline_mode = #tpu.pipeline_mode<synchronous>, transform_indices = @transform_4, window_bounds = array<i64: 1, 128>}, {pipeline_mode = #tpu.pipeline_mode<synchronous>, transform_indices = @transform_5, window_bounds = array<i64: 128, 256>}, {pipeline_mode = #tpu.pipeline_mode<synchronous>, transform_indices = @transform_6, window_bounds = array<i64: 1, 256>}, {pipeline_mode = #tpu.pipeline_mode<synchronous>, transform_indices = @transform_7, window_bounds = array<i64: 256, 512>}, {pipeline_mode = #tpu.pipeline_mode<synchronous>, transform_indices = @transform_8, window_bounds = array<i64: 1, 512>}, {pipeline_mode = #tpu.pipeline_mode<synchronous>, transform_indices = @transform_9, window_bounds = array<i64: 512, 512>}, {pipeline_mode = #tpu.pipeline_mode<synchronous>, transform_indices = @transform_10, window_bounds = array<i64: 1, 512>}, {pipeline_mode = #tpu.pipeline_mode<synchronous>, transform_indices = @transform_11, window_bounds = array<i64: 512, 256>}, {pipeline_mode = #tpu.pipeline_mode<synchronous>, transform_indices = @transform_12, window_bounds = array<i64: 1, 256>}, {pipeline_mode = #tpu.pipeline_mode<synchronous>, transform_indices = @transform_13, window_bounds = array<i64: 256, 128>}, {pipeline_mode = #tpu.pipeline_mode<synchronous>, transform_indices = @transform_14, window_bounds = array<i64: 1, 128>}, {transform_indices = @transform_15, window_bounds = array<i64: 8, 128>}]} {
    %c0 = arith.constant 0 : index
    %c0_0 = arith.constant 0 : index
    %c0_1 = arith.constant 0 : index
    %0 = vector.load %arg2[%c0, %c0_0, %c0_1] : memref<1x64x3xbf16, #tpu.memory_space<vmem>>, vector<1x64x3xbf16>
    %1 = vector.shape_cast %0 : vector<1x64x3xbf16> to vector<64x3xbf16>
    %2 = arith.extf %1 : vector<64x3xbf16> to vector<64x3xf32>
    %c0_2 = arith.constant 0 : index
    %c0_3 = arith.constant 0 : index
    %3 = vector.load %arg4[%c0_2, %c0_3] : memref<1x128xf32, #tpu.memory_space<vmem>>, vector<1x128xf32>
    %4 = vector.extract_strided_slice %2 {offsets = [0, 0], sizes = [64, 1], strides = [1, 1]} : vector<64x3xf32> to vector<64x1xf32>
    %c0_4 = arith.constant 0 : index
    %c0_5 = arith.constant 0 : index
    %5 = vector.load %arg3[%c0_4, %c0_5] : memref<3x128xf32, #tpu.memory_space<vmem>>, vector<1x128xf32>
    %6 = vector.broadcast %4 : vector<64x1xf32> to vector<64x128xf32>
    %7 = vector.broadcast %5 : vector<1x128xf32> to vector<64x128xf32>
    %8 = arith.mulf %6, %7 : vector<64x128xf32>
    %9 = vector.broadcast %3 : vector<1x128xf32> to vector<64x128xf32>
    %10 = arith.addf %9, %8 : vector<64x128xf32>
    %11 = vector.extract_strided_slice %2 {offsets = [0, 1], sizes = [64, 1], strides = [1, 1]} : vector<64x3xf32> to vector<64x1xf32>
    %c1 = arith.constant 1 : index
    %c0_6 = arith.constant 0 : index
    %12 = vector.load %arg3[%c1, %c0_6] : memref<3x128xf32, #tpu.memory_space<vmem>>, vector<1x128xf32>
    %13 = vector.broadcast %11 : vector<64x1xf32> to vector<64x128xf32>
    %14 = vector.broadcast %12 : vector<1x128xf32> to vector<64x128xf32>
    %15 = arith.mulf %13, %14 : vector<64x128xf32>
    %16 = arith.addf %10, %15 : vector<64x128xf32>
    %17 = vector.extract_strided_slice %2 {offsets = [0, 2], sizes = [64, 1], strides = [1, 1]} : vector<64x3xf32> to vector<64x1xf32>
    %c2 = arith.constant 2 : index
    %c0_7 = arith.constant 0 : index
    %18 = vector.load %arg3[%c2, %c0_7] : memref<3x128xf32, #tpu.memory_space<vmem>>, vector<1x128xf32>
    %19 = vector.broadcast %17 : vector<64x1xf32> to vector<64x128xf32>
    %20 = vector.broadcast %18 : vector<1x128xf32> to vector<64x128xf32>
    %21 = arith.mulf %19, %20 : vector<64x128xf32>
    %22 = arith.addf %16, %21 : vector<64x128xf32>
    %cst = arith.constant 0.000000e+00 : f32
    %23 = vector.broadcast %cst : f32 to vector<64x128xf32>
    %24 = arith.maximumf %22, %23 : vector<64x128xf32>
    %25 = arith.truncf %24 : vector<64x128xf32> to vector<64x128xbf16>
    %c0_8 = arith.constant 0 : index
    %c0_9 = arith.constant 0 : index
    %26 = vector.load %arg5[%c0_8, %c0_9] : memref<128x128xbf16, #tpu.memory_space<vmem>>, vector<128x128xbf16>
    %cst_10 = arith.constant dense<0.000000e+00> : vector<64x128xf32>
    %27 = tpu.matmul %25, %26, %cst_10 {dimension_numbers = #tpu.dot_dimension_numbers<[1], [0], [0], [1], [0, 0, 1, 1], [], []>} : vector<64x128xbf16>, vector<128x128xbf16>, vector<64x128xf32> -> vector<64x128xf32>
    %c0_11 = arith.constant 0 : index
    %c0_12 = arith.constant 0 : index
    %28 = vector.load %arg6[%c0_11, %c0_12] : memref<1x128xf32, #tpu.memory_space<vmem>>, vector<1x128xf32>
    %29 = vector.broadcast %28 : vector<1x128xf32> to vector<64x128xf32>
    %30 = arith.addf %27, %29 : vector<64x128xf32>
    %cst_13 = arith.constant 0.000000e+00 : f32
    %31 = vector.broadcast %cst_13 : f32 to vector<64x128xf32>
    %32 = arith.maximumf %30, %31 : vector<64x128xf32>
    %33 = arith.truncf %32 : vector<64x128xf32> to vector<64x128xbf16>
    %c0_14 = arith.constant 0 : index
    %c0_15 = arith.constant 0 : index
    %34 = vector.load %arg7[%c0_14, %c0_15] : memref<128x256xbf16, #tpu.memory_space<vmem>>, vector<128x256xbf16>
    %cst_16 = arith.constant dense<0.000000e+00> : vector<64x256xf32>
    %35 = tpu.matmul %33, %34, %cst_16 {dimension_numbers = #tpu.dot_dimension_numbers<[1], [0], [0], [1], [0, 0, 1, 1], [], []>} : vector<64x128xbf16>, vector<128x256xbf16>, vector<64x256xf32> -> vector<64x256xf32>
    %c0_17 = arith.constant 0 : index
    %c0_18 = arith.constant 0 : index
    %36 = vector.load %arg8[%c0_17, %c0_18] : memref<1x256xf32, #tpu.memory_space<vmem>>, vector<1x256xf32>
    %37 = vector.broadcast %36 : vector<1x256xf32> to vector<64x256xf32>
    %38 = arith.addf %35, %37 : vector<64x256xf32>
    %cst_19 = arith.constant 0.000000e+00 : f32
    %39 = vector.broadcast %cst_19 : f32 to vector<64x256xf32>
    %40 = arith.maximumf %38, %39 : vector<64x256xf32>
    %41 = arith.truncf %40 : vector<64x256xf32> to vector<64x256xbf16>
    %c0_20 = arith.constant 0 : index
    %c0_21 = arith.constant 0 : index
    %42 = vector.load %arg9[%c0_20, %c0_21] : memref<256x512xbf16, #tpu.memory_space<vmem>>, vector<256x512xbf16>
    %cst_22 = arith.constant dense<0.000000e+00> : vector<64x512xf32>
    %43 = tpu.matmul %41, %42, %cst_22 {dimension_numbers = #tpu.dot_dimension_numbers<[1], [0], [0], [1], [0, 0, 1, 1], [], []>} : vector<64x256xbf16>, vector<256x512xbf16>, vector<64x512xf32> -> vector<64x512xf32>
    %c0_23 = arith.constant 0 : index
    %c0_24 = arith.constant 0 : index
    %44 = vector.load %arg10[%c0_23, %c0_24] : memref<1x512xf32, #tpu.memory_space<vmem>>, vector<1x512xf32>
    %45 = vector.broadcast %44 : vector<1x512xf32> to vector<64x512xf32>
    %46 = arith.addf %43, %45 : vector<64x512xf32>
    %cst_25 = arith.constant dense<0xFF800000> : vector<512xf32>
    %47 = vector.multi_reduction <maximumf>, %46, %cst_25 [0] : vector<64x512xf32> to vector<512xf32>
    %48 = vector.shape_cast %47 : vector<512xf32> to vector<1x512xf32>
    %c0_i32 = arith.constant 0 : i32
    %49 = arith.cmpi eq, %arg1, %c0_i32 : i32
    %50 = arith.extui %49 : i1 to i32
    %c0_i32_26 = arith.constant 0 : i32
    %51 = arith.cmpi ne, %50, %c0_i32_26 : i32
    scf.if %51 {
      %cst_33 = arith.constant 0xFF800000 : f32
      %59 = vector.broadcast %cst_33 : f32 to vector<8x512xf32>
      %c0_34 = arith.constant 0 : index
      %c0_35 = arith.constant 0 : index
      %60 = vector.load %arg18[%c0_34, %c0_35] : memref<8x512xf32, #tpu.memory_space<vmem>>, vector<8x512xf32>
      tpu.vector_store %arg18[%c0_34, %c0_35], %59 {strides = array<i32>} : memref<8x512xf32, #tpu.memory_space<vmem>>, vector<8x512xf32>,
    } else {
    }
    %c0_27 = arith.constant 0 : index
    %c0_28 = arith.constant 0 : index
    %52 = vector.load %arg18[%c0_27, %c0_28] : memref<8x512xf32, #tpu.memory_space<vmem>>, vector<8x512xf32>
    %53 = vector.broadcast %48 : vector<1x512xf32> to vector<8x512xf32>
    %54 = arith.maximumf %52, %53 : vector<8x512xf32>
    %c0_29 = arith.constant 0 : index
    %c0_30 = arith.constant 0 : index
    %55 = vector.load %arg18[%c0_29, %c0_30] : memref<8x512xf32, #tpu.memory_space<vmem>>, vector<8x512xf32>
    tpu.vector_store %arg18[%c0_29, %c0_30], %54 {strides = array<i32>} : memref<8x512xf32, #tpu.memory_space<vmem>>, vector<8x512xf32>,
    %c0_i32_31 = arith.constant 0 : i32
    %56 = arith.cmpi eq, %arg1, %c0_i32_31 : i32
    %57 = arith.extui %56 : i1 to i32
    %c0_i32_32 = arith.constant 0 : i32
    %58 = arith.cmpi ne, %57, %c0_i32_32 : i32
    scf.if %58 {
      %c0_33 = arith.constant 0 : index
      %c0_34 = arith.constant 0 : index
      %59 = vector.load %arg18[%c0_33, %c0_34] : memref<8x512xf32, #tpu.memory_space<vmem>>, vector<8x512xf32>
      %60 = arith.truncf %59 : vector<8x512xf32> to vector<8x512xbf16>
      %c0_35 = arith.constant 0 : index
      %c0_36 = arith.constant 0 : index
      %61 = vector.load %arg11[%c0_35, %c0_36] : memref<512x512xbf16, #tpu.memory_space<vmem>>, vector<512x512xbf16>
      %cst_37 = arith.constant dense<0.000000e+00> : vector<8x512xf32>
      %62 = tpu.matmul %60, %61, %cst_37 {dimension_numbers = #tpu.dot_dimension_numbers<[1], [0], [0], [1], [0, 0, 1, 1], [], []>} : vector<8x512xbf16>, vector<512x512xbf16>, vector<8x512xf32> -> vector<8x512xf32>
      %c0_38 = arith.constant 0 : index
      %c0_39 = arith.constant 0 : index
      %63 = vector.load %arg12[%c0_38, %c0_39] : memref<1x512xf32, #tpu.memory_space<vmem>>, vector<1x512xf32>
      %64 = vector.broadcast %63 : vector<1x512xf32> to vector<8x512xf32>
      %65 = arith.addf %62, %64 : vector<8x512xf32>
      %cst_40 = arith.constant 0.000000e+00 : f32
      %66 = vector.broadcast %cst_40 : f32 to vector<8x512xf32>
      %67 = arith.maximumf %65, %66 : vector<8x512xf32>
      %68 = arith.truncf %67 : vector<8x512xf32> to vector<8x512xbf16>
      %c0_41 = arith.constant 0 : index
      %c0_42 = arith.constant 0 : index
      %69 = vector.load %arg13[%c0_41, %c0_42] : memref<512x256xbf16, #tpu.memory_space<vmem>>, vector<512x256xbf16>
      %cst_43 = arith.constant dense<0.000000e+00> : vector<8x256xf32>
      %70 = tpu.matmul %68, %69, %cst_43 {dimension_numbers = #tpu.dot_dimension_numbers<[1], [0], [0], [1], [0, 0, 1, 1], [], []>} : vector<8x512xbf16>, vector<512x256xbf16>, vector<8x256xf32> -> vector<8x256xf32>
      %c0_44 = arith.constant 0 : index
      %c0_45 = arith.constant 0 : index
      %71 = vector.load %arg14[%c0_44, %c0_45] : memref<1x256xf32, #tpu.memory_space<vmem>>, vector<1x256xf32>
      %72 = vector.broadcast %71 : vector<1x256xf32> to vector<8x256xf32>
      %73 = arith.addf %70, %72 : vector<8x256xf32>
      %cst_46 = arith.constant 0.000000e+00 : f32
      %74 = vector.broadcast %cst_46 : f32 to vector<8x256xf32>
      %75 = arith.maximumf %73, %74 : vector<8x256xf32>
      %76 = arith.truncf %75 : vector<8x256xf32> to vector<8x256xbf16>
      %c0_47 = arith.constant 0 : index
      %c0_48 = arith.constant 0 : index
      %77 = vector.load %arg15[%c0_47, %c0_48] : memref<256x128xbf16, #tpu.memory_space<vmem>>, vector<256x128xbf16>
      %cst_49 = arith.constant dense<0.000000e+00> : vector<8x128xf32>
      %78 = tpu.matmul %76, %77, %cst_49 {dimension_numbers = #tpu.dot_dimension_numbers<[1], [0], [0], [1], [0, 0, 1, 1], [], []>} : vector<8x256xbf16>, vector<256x128xbf16>, vector<8x128xf32> -> vector<8x128xf32>
      %c0_50 = arith.constant 0 : index
      %c0_51 = arith.constant 0 : index
      %79 = vector.load %arg16[%c0_50, %c0_51] : memref<1x128xf32, #tpu.memory_space<vmem>>, vector<1x128xf32>
      %80 = vector.broadcast %79 : vector<1x128xf32> to vector<8x128xf32>
      %81 = arith.addf %78, %80 : vector<8x128xf32>
      %c0_52 = arith.constant 0 : index
      %c0_53 = arith.constant 0 : index
      %82 = vector.load %arg17[%c0_52, %c0_53] : memref<8x128xf32, #tpu.memory_space<vmem>>, vector<8x128xf32>
      tpu.vector_store %arg17[%c0_52, %c0_53], %81 {strides = array<i32>} : memref<8x128xf32, #tpu.memory_space<vmem>>, vector<8x128xf32>,
    } else {
    }
    return
  }
  func.func @transform_0(%arg0: i32, %arg1: i32) -> (i32, i32, i32) {
    %c0_i32 = arith.constant 0 : i32
    %c0_i32_0 = arith.constant 0 : i32
    return %arg0, %arg1, %c0_i32 : i32, i32, i32
  }
  func.func @transform_1(%arg0: i32, %arg1: i32) -> (i32, i32) {
    %c0_i32 = arith.constant 0 : i32
    %c0_i32_0 = arith.constant 0 : i32
    %c0_i32_1 = arith.constant 0 : i32
    return %c0_i32, %c0_i32_0 : i32, i32
  }
  func.func @transform_2(%arg0: i32, %arg1: i32) -> (i32, i32) {
    %c0_i32 = arith.constant 0 : i32
    %c0_i32_0 = arith.constant 0 : i32
    %c0_i32_1 = arith.constant 0 : i32
    return %c0_i32, %c0_i32_0 : i32, i32
  }
  func.func @transform_3(%arg0: i32, %arg1: i32) -> (i32, i32) {
    %c0_i32 = arith.constant 0 : i32
    %c0_i32_0 = arith.constant 0 : i32
    %c0_i32_1 = arith.constant 0 : i32
    return %c0_i32, %c0_i32_0 : i32, i32
  }
  func.func @transform_4(%arg0: i32, %arg1: i32) -> (i32, i32) {
    %c0_i32 = arith.constant 0 : i32
    %c0_i32_0 = arith.constant 0 : i32
    %c0_i32_1 = arith.constant 0 : i32
    return %c0_i32, %c0_i32_0 : i32, i32
  }
  func.func @transform_5(%arg0: i32, %arg1: i32) -> (i32, i32) {
    %c0_i32 = arith.constant 0 : i32
    %c0_i32_0 = arith.constant 0 : i32
    %c0_i32_1 = arith.constant 0 : i32
    return %c0_i32, %c0_i32_0 : i32, i32
  }
  func.func @transform_6(%arg0: i32, %arg1: i32) -> (i32, i32) {
    %c0_i32 = arith.constant 0 : i32
    %c0_i32_0 = arith.constant 0 : i32
    %c0_i32_1 = arith.constant 0 : i32
    return %c0_i32, %c0_i32_0 : i32, i32
  }
  func.func @transform_7(%arg0: i32, %arg1: i32) -> (i32, i32) {
    %c0_i32 = arith.constant 0 : i32
    %c0_i32_0 = arith.constant 0 : i32
    %c0_i32_1 = arith.constant 0 : i32
    return %c0_i32, %c0_i32_0 : i32, i32
  }
  func.func @transform_8(%arg0: i32, %arg1: i32) -> (i32, i32) {
    %c0_i32 = arith.constant 0 : i32
    %c0_i32_0 = arith.constant 0 : i32
    %c0_i32_1 = arith.constant 0 : i32
    return %c0_i32, %c0_i32_0 : i32, i32
  }
  func.func @transform_9(%arg0: i32, %arg1: i32) -> (i32, i32) {
    %c0_i32 = arith.constant 0 : i32
    %c0_i32_0 = arith.constant 0 : i32
    %c0_i32_1 = arith.constant 0 : i32
    return %c0_i32, %c0_i32_0 : i32, i32
  }
  func.func @transform_10(%arg0: i32, %arg1: i32) -> (i32, i32) {
    %c0_i32 = arith.constant 0 : i32
    %c0_i32_0 = arith.constant 0 : i32
    %c0_i32_1 = arith.constant 0 : i32
    return %c0_i32, %c0_i32_0 : i32, i32
  }
  func.func @transform_11(%arg0: i32, %arg1: i32) -> (i32, i32) {
    %c0_i32 = arith.constant 0 : i32
    %c0_i32_0 = arith.constant 0 : i32
    %c0_i32_1 = arith.constant 0 : i32
    return %c0_i32, %c0_i32_0 : i32, i32
  }
  func.func @transform_12(%arg0: i32, %arg1: i32) -> (i32, i32) {
    %c0_i32 = arith.constant 0 : i32
    %c0_i32_0 = arith.constant 0 : i32
    %c0_i32_1 = arith.constant 0 : i32
    return %c0_i32, %c0_i32_0 : i32, i32
  }
  func.func @transform_13(%arg0: i32, %arg1: i32) -> (i32, i32) {
    %c0_i32 = arith.constant 0 : i32
    %c0_i32_0 = arith.constant 0 : i32
    %c0_i32_1 = arith.constant 0 : i32
    return %c0_i32, %c0_i32_0 : i32, i32
  }
  func.func @transform_14(%arg0: i32, %arg1: i32) -> (i32, i32) {
    %c0_i32 = arith.constant 0 : i32
    %c0_i32_0 = arith.constant 0 : i32
    %c0_i32_1 = arith.constant 0 : i32
    return %c0_i32, %c0_i32_0 : i32, i32
  }
  func.func @transform_15(%arg0: i32, %arg1: i32) -> (i32, i32) {
    %c0_i32 = arith.constant 0 : i32
    %c0_i32_0 = arith.constant 0 : i32
    return %arg0, %c0_i32 : i32, i32
  }
}

</mosaic_0001>

<llo_original>
// kernel: tpu_custom_call.1
$region0: #{tpu_custom_call.1}
  #allocation0 [shape = 'u32[]', space=smem, size = 0x4, offset = 0x4, fixed_abs, tag = 'smem constant byte address 0x4 - core index']
  #allocation1 [shape = 'u32[144,128]{1,0:T(1,128)}', space=vmem, size = 0x12000, scoped, tag = 'internal scratch']
  #allocation2 [shape = 'f32[8,512]{1,0:T(8,128)}', space=vmem, size = 0x4000, scoped, tag = 'scratch operand']
  %s0 = inlined_call_operand.vmem [shape: bf16[2,64,3], index: 0, kind: input, shape index: {}]
  %s1 = inlined_call_operand.vmem [shape: f32[3,128], index: 1, kind: input, shape index: {}]
  %s2 = inlined_call_operand.hbm [shape: f32[1,128], index: 2, kind: input, shape index: {}]
  %s3 = inlined_call_operand.vmem [shape: bf16[128,128], index: 3, kind: input, shape index: {}]
  %s4 = inlined_call_operand.vmem [shape: f32[1,128], index: 4, kind: input, shape index: {}]
  %s5 = inlined_call_operand.hbm [shape: bf16[128,256], index: 5, kind: input, shape index: {}]
  %s6 = inlined_call_operand.vmem [shape: f32[1,256], index: 6, kind: input, shape index: {}]
  %s7 = inlined_call_operand.hbm [shape: bf16[256,512], index: 7, kind: input, shape index: {}]
  %s8 = inlined_call_operand.vmem [shape: f32[1,512], index: 8, kind: input, shape index: {}]
  %s9 = inlined_call_operand.hbm [shape: bf16[512,512], index: 9, kind: input, shape index: {}]
  %s10 = inlined_call_operand.vmem [shape: f32[1,512], index: 10, kind: input, shape index: {}]
  %s11 = inlined_call_operand.hbm [shape: bf16[512,256], index: 11, kind: input, shape index: {}]
  %s12 = inlined_call_operand.vmem [shape: f32[1,256], index: 12, kind: input, shape index: {}]
  %s13 = inlined_call_operand.hbm [shape: bf16[256,128], index: 13, kind: input, shape index: {}]
  %s14 = inlined_call_operand.vmem [shape: f32[1,128], index: 14, kind: input, shape index: {}]
  %s15 = inlined_call_operand.hbm [shape: f32[16,128], index: 15, kind: output, shape index: {}]
  %s16 = sld [smem:[#allocation0]]
  $region125: #{tpu_custom_call.1} parent=0
    _
  %s18 = ssub.s32 1, %s16
  %s19 = scalar_select 0, %s18, %s16
  $region1: #{tpu_custom_call.1} parent=0
    #allocation3 [shape = 'u8[512]{0}', space=vmem, size = 0x400, scoped, tag = 'input window, operand 2, single buffered']
    #allocation4 [shape = 's32[2]{0}', space=sflag, size = 0x8, scoped, tag = 'scoped memory for tpu_custom_call.1']
    #allocation5 [shape = 's32[2]{0}', space=sflag, size = 0x8, scoped, tag = 'scoped memory for tpu_custom_call.1']
    #allocation6 [shape = 'u8[65536]{0}', space=vmem, size = 0x10000, scoped, tag = 'input window, operand 5, single buffered']
    #allocation7 [shape = 's32[1]{0}', space=sflag, size = 0x4, scoped, tag = 'scoped memory for tpu_custom_call.1']
    #allocation8 [shape = 'u8[262144]{0}', space=vmem, size = 0x40000, scoped, tag = 'input window, operand 7, single buffered']
    #allocation9 [shape = 'u8[524288]{0}', space=vmem, size = 0x80000, scoped, tag = 'input window, operand 9, single buffered']
    #allocation10 [shape = 's32[1]{0}', space=sflag, size = 0x4, scoped, tag = 'scoped memory for tpu_custom_call.1']
    #allocation11 [shape = 'u8[262144]{0}', space=vmem, size = 0x40000, scoped, tag = 'input window, operand 11, single buffered']
    #allocation12 [shape = 'u8[65536]{0}', space=vmem, size = 0x10000, scoped, tag = 'input window, operand 13, single buffered']
    #allocation13 [shape = 's32[1]{0}', space=sflag, size = 0x4, scoped, tag = 'scoped memory for tpu_custom_call.1']
    #allocation14 [shape = 'u8[8192]{0}', space=vmem, size = 0x2000, scoped, tag = 'output window, operand 0']
    %20 = vsyncpa [#allocation4], 0
    %21 = vsyncpa [#allocation7], 0
    %22 = vsyncpa [#allocation10], 0
    %23 = vsyncpa [#allocation13], 0
    %24 = vsyncpa [#allocation5], 0
    %s25 = scalar_lea.sflag [#allocation5], 1
    %26 = vsyncpa %s25, 0
    loop: start=0, step=1, limit=4
    $region2: #{tpu_custom_call.1} parent=1 // loop_pre_header
      _
    $region3: #{tpu_custom_call.1} parent=1 // loop_header
      %s28 = sphi 0, %s32
      %p29 = scmp.ge.s32.totalorder %s28, 4
      %s35 = sphi 0, %s47
      %s36 = sphi 0, %s43
      %s37 = sphi 0, %s35
      %s38 = sphi 0, %s36
      %s39 = sphi 0, %s37
      %s40 = sphi 0, %s38
      %s52 = sphi 0, %s54
      %s55 = sphi 0, %s52
      %s56 = sphi 0, %s55
      %s72 = sphi 0, %s56
      %s76 = sphi 0, %s76
      %s78 = sphi 0, %s76
      %s79 = sphi 0, %s78
      %s93 = sphi 0, %s79
      %s97 = sphi 0, %s97
      %s99 = sphi 0, %s97
      %s100 = sphi 0, %s99
      %s114 = sphi 0, %s100
      %s118 = sphi 0, %s118
      %s120 = sphi 0, %s118
      %s121 = sphi 0, %s120
      %s135 = sphi 0, %s121
      %s139 = sphi 0, %s139
      %s141 = sphi 0, %s139
      %s142 = sphi 0, %s141
      %s156 = sphi 0, %s142
      %s160 = sphi 0, %s160
      %s162 = sphi 0, %s160
      %s163 = sphi 0, %s162
      %s177 = sphi 0, %s163
      %s181 = sphi 0, %s181
      %s183 = sphi 0, %s181
      %s184 = sphi 0, %s183
      %s198 = sphi 0, %s184
      %s202 = sphi 0, %s202
      %s204 = sphi 0, %s202
      %s205 = sphi 0, %s204
      %s219 = sphi 0, %s205
      %s223 = sphi 0, %s223
      %s225 = sphi 0, %s223
      %s226 = sphi 0, %s225
      %s240 = sphi 0, %s226
      %s244 = sphi 0, %s244
      %s246 = sphi 0, %s244
      %s247 = sphi 0, %s246
      %s261 = sphi 0, %s247
      %s265 = sphi 0, %s265
      %s267 = sphi 0, %s265
      %s268 = sphi 0, %s267
      %s282 = sphi 0, %s268
      %s286 = sphi 0, %s286
      %s288 = sphi 0, %s286
      %s289 = sphi 0, %s288
      %s303 = sphi 0, %s289
      %s307 = sphi 0, %s307
      %s309 = sphi 0, %s307
      %s310 = sphi 0, %s309
      %s324 = sphi 0, %s310
      %s328 = sphi 0, %s328
      %s330 = sphi 0, %s328
      %s331 = sphi 0, %s330
      %s345 = sphi 0, %s331
      %s349 = sphi 0, %s349
      %s351 = sphi 0, %s349
      %s352 = sphi 0, %s351
      %s366 = sphi 0, %s352
      %s372 = sphi 0, %s374
      %s375 = sphi 0, %s372
      %s376 = sphi 0, %s375
      %s392 = sphi 0, %s376
    $region4: #{tpu_custom_call.1} parent=1 // loop_header_branch
      %31 = sbr.rel (%p29) target = $region8
    $region5: #{tpu_custom_call.1} parent=1 // loop_body
      %s33 = ssub.s32 %s28, 1
      %s34 = ssub.s32 %s28, 2
      %s41 = sadd.s32 1, %s36
      %p42 = scmp.ge.s32.totalorder %s41, 1
      %s43 = scalar_select %p42, 0, %s41
      %s44 = sadd.s32 1, %s35
      %s45 = scalar_select %p42, %s44, %s35
      %p46 = scmp.ge.s32.totalorder %s45, 2
      %s47 = scalar_select %p46, 0, %s45
      %s48 = ssub.s32 %s35, %s47
      %s49 = ssub.s32 %s36, %s43
      %s50 = sor.u32 %s48, %s49
      %p51 = scmp.eq.s32.totalorder %s50, 0
      %s53 = sadd.s32 %s52, 1
      %s54 = scalar_select %p51, %s52, %s53
      %p57 = pneg %p51
      %p58 = scmp.eq.s32.totalorder %s28, 1
      %p59 = por %p57, %p58
      %p60 = scmp.ne.s32.totalorder %s52, %s55
      %p61 = scmp.eq.s32.totalorder %s28, 0
      %p62 = por %p60, %p61
      %p63 = scmp.ne.s32.totalorder %s52, %s55
      %p64 = scmp.eq.s32.totalorder %s33, 1
      %p65 = por %p63, %p64
      %p66 = scmp.ne.s32.totalorder %s55, %s56
      %p67 = scmp.eq.s32.totalorder %s33, 0
      %p68 = por %p66, %p67
      %p69 = scmp.ne.s32.totalorder %s55, %s56
      %p70 = scmp.eq.s32.totalorder %s34, 1
      %p71 = por %p69, %p70
      %p73 = scmp.ne.s32.totalorder %s56, %s72
      %p74 = scmp.eq.s32.totalorder %s34, 0
      %p75 = por %p73, %p74
      %s77 = sadd.s32 %s76, 1
      %p80 = scmp.eq.s32.totalorder %s28, 1
      %p81 = scmp.ne.s32.totalorder %s76, %s78
      %p82 = scmp.eq.s32.totalorder %s28, 0
      %p83 = por %p81, %p82
      %p84 = scmp.ne.s32.totalorder %s76, %s78
      %p85 = scmp.eq.s32.totalorder %s33, 1
      %p86 = por %p84, %p85
      %p87 = scmp.ne.s32.totalorder %s78, %s79
      %p88 = scmp.eq.s32.totalorder %s33, 0
      %p89 = por %p87, %p88
      %p90 = scmp.ne.s32.totalorder %s78, %s79
      %p91 = scmp.eq.s32.totalorder %s34, 1
      %p92 = por %p90, %p91
      %p94 = scmp.ne.s32.totalorder %s79, %s93
      %p95 = scmp.eq.s32.totalorder %s34, 0
      %p96 = por %p94, %p95
      %s98 = sadd.s32 %s97, 1
      %p101 = scmp.eq.s32.totalorder %s28, 1
      %p102 = scmp.ne.s32.totalorder %s97, %s99
      %p103 = scmp.eq.s32.totalorder %s28, 0
      %p104 = por %p102, %p103
      %p105 = scmp.ne.s32.totalorder %s97, %s99
      %p106 = scmp.eq.s32.totalorder %s33, 1
      %p107 = por %p105, %p106
      %p108 = scmp.ne.s32.totalorder %s99, %s100
      %p109 = scmp.eq.s32.totalorder %s33, 0
      %p110 = por %p108, %p109
      %p111 = scmp.ne.s32.totalorder %s99, %s100
      %p112 = scmp.eq.s32.totalorder %s34, 1
      %p113 = por %p111, %p112
      %p115 = scmp.ne.s32.totalorder %s100, %s114
      %p116 = scmp.eq.s32.totalorder %s34, 0
      %p117 = por %p115, %p116
      %s119 = sadd.s32 %s118, 1
      %p122 = scmp.eq.s32.totalorder %s28, 1
      %p123 = scmp.ne.s32.totalorder %s118, %s120
      %p124 = scmp.eq.s32.totalorder %s28, 0
      %p125 = por %p123, %p124
      %p126 = scmp.ne.s32.totalorder %s118, %s120
      %p127 = scmp.eq.s32.totalorder %s33, 1
      %p128 = por %p126, %p127
      %p129 = scmp.ne.s32.totalorder %s120, %s121
      %p130 = scmp.eq.s32.totalorder %s33, 0
      %p131 = por %p129, %p130
      %p132 = scmp.ne.s32.totalorder %s120, %s121
      %p133 = scmp.eq.s32.totalorder %s34, 1
      %p134 = por %p132, %p133
      %p136 = scmp.ne.s32.totalorder %s121, %s135
      %p137 = scmp.eq.s32.totalorder %s34, 0
      %p138 = por %p136, %p137
      %s140 = sadd.s32 %s139, 1
      %p143 = scmp.eq.s32.totalorder %s28, 1
      %p144 = scmp.ne.s32.totalorder %s139, %s141
      %p145 = scmp.eq.s32.totalorder %s28, 0
      %p146 = por %p144, %p145
      %p147 = scmp.ne.s32.totalorder %s139, %s141
      %p148 = scmp.eq.s32.totalorder %s33, 1
      %p149 = por %p147, %p148
      %p150 = scmp.ne.s32.totalorder %s141, %s142
      %p151 = scmp.eq.s32.totalorder %s33, 0
      %p152 = por %p150, %p151
      %p153 = scmp.ne.s32.totalorder %s141, %s142
      %p154 = scmp.eq.s32.totalorder %s34, 1
      %p155 = por %p153, %p154
      %p157 = scmp.ne.s32.totalorder %s142, %s156
      %p158 = scmp.eq.s32.totalorder %s34, 0
      %p159 = por %p157, %p158
      %s161 = sadd.s32 %s160, 1
      %p164 = scmp.eq.s32.totalorder %s28, 1
      %p165 = scmp.ne.s32.totalorder %s160, %s162
      %p166 = scmp.eq.s32.totalorder %s28, 0
      %p167 = por %p165, %p166
      %p168 = scmp.ne.s32.totalorder %s160, %s162
      %p169 = scmp.eq.s32.totalorder %s33, 1
      %p170 = por %p168, %p169
      %p171 = scmp.ne.s32.totalorder %s162, %s163
      %p172 = scmp.eq.s32.totalorder %s33, 0
      %p173 = por %p171, %p172
      %p174 = scmp.ne.s32.totalorder %s162, %s163
      %p175 = scmp.eq.s32.totalorder %s34, 1
      %p176 = por %p174, %p175
      %p178 = scmp.ne.s32.totalorder %s163, %s177
      %p179 = scmp.eq.s32.totalorder %s34, 0
      %p180 = por %p178, %p179
      %s182 = sadd.s32 %s181, 1
      %p185 = scmp.eq.s32.totalorder %s28, 1
      %p186 = scmp.ne.s32.totalorder %s181, %s183
      %p187 = scmp.eq.s32.totalorder %s28, 0
      %p188 = por %p186, %p187
      %p189 = scmp.ne.s32.totalorder %s181, %s183
      %p190 = scmp.eq.s32.totalorder %s33, 1
      %p191 = por %p189, %p190
      %p192 = scmp.ne.s32.totalorder %s183, %s184
      %p193 = scmp.eq.s32.totalorder %s33, 0
      %p194 = por %p192, %p193
      %p195 = scmp.ne.s32.totalorder %s183, %s184
      %p196 = scmp.eq.s32.totalorder %s34, 1
      %p197 = por %p195, %p196
      %p199 = scmp.ne.s32.totalorder %s184, %s198
      %p200 = scmp.eq.s32.totalorder %s34, 0
      %p201 = por %p199, %p200
      %s203 = sadd.s32 %s202, 1
      %p206 = scmp.eq.s32.totalorder %s28, 1
      %p207 = scmp.ne.s32.totalorder %s202, %s204
      %p208 = scmp.eq.s32.totalorder %s28, 0
      %p209 = por %p207, %p208
      %p210 = scmp.ne.s32.totalorder %s202, %s204
      %p211 = scmp.eq.s32.totalorder %s33, 1
      %p212 = por %p210, %p211
      %p213 = scmp.ne.s32.totalorder %s204, %s205
      %p214 = scmp.eq.s32.totalorder %s33, 0
      %p215 = por %p213, %p214
      %p216 = scmp.ne.s32.totalorder %s204, %s205
      %p217 = scmp.eq.s32.totalorder %s34, 1
      %p218 = por %p216, %p217
      %p220 = scmp.ne.s32.totalorder %s205, %s219
      %p221 = scmp.eq.s32.totalorder %s34, 0
      %p222 = por %p220, %p221
      %s224 = sadd.s32 %s223, 1
      %p227 = scmp.eq.s32.totalorder %s28, 1
      %p228 = scmp.ne.s32.totalorder %s223, %s225
      %p229 = scmp.eq.s32.totalorder %s28, 0
      %p230 = por %p228, %p229
      %p231 = scmp.ne.s32.totalorder %s223, %s225
      %p232 = scmp.eq.s32.totalorder %s33, 1
      %p233 = por %p231, %p232
      %p234 = scmp.ne.s32.totalorder %s225, %s226
      %p235 = scmp.eq.s32.totalorder %s33, 0
      %p236 = por %p234, %p235
      %p237 = scmp.ne.s32.totalorder %s225, %s226
      %p238 = scmp.eq.s32.totalorder %s34, 1
      %p239 = por %p237, %p238
      %p241 = scmp.ne.s32.totalorder %s226, %s240
      %p242 = scmp.eq.s32.totalorder %s34, 0
      %p243 = por %p241, %p242
      %s245 = sadd.s32 %s244, 1
      %p248 = scmp.eq.s32.totalorder %s28, 1
      %p249 = scmp.ne.s32.totalorder %s244, %s246
      %p250 = scmp.eq.s32.totalorder %s28, 0
      %p251 = por %p249, %p250
      %p252 = scmp.ne.s32.totalorder %s244, %s246
      %p253 = scmp.eq.s32.totalorder %s33, 1
      %p254 = por %p252, %p253
      %p255 = scmp.ne.s32.totalorder %s246, %s247
      %p256 = scmp.eq.s32.totalorder %s33, 0
      %p257 = por %p255, %p256
      %p258 = scmp.ne.s32.totalorder %s246, %s247
      %p259 = scmp.eq.s32.totalorder %s34, 1
      %p260 = por %p258, %p259
      %p262 = scmp.ne.s32.totalorder %s247, %s261
      %p263 = scmp.eq.s32.totalorder %s34, 0
      %p264 = por %p262, %p263
      %s266 = sadd.s32 %s265, 1
      %p269 = scmp.eq.s32.totalorder %s28, 1
      %p270 = scmp.ne.s32.totalorder %s265, %s267
      %p271 = scmp.eq.s32.totalorder %s28, 0
      %p272 = por %p270, %p271
      %p273 = scmp.ne.s32.totalorder %s265, %s267
      %p274 = scmp.eq.s32.totalorder %s33, 1
      %p275 = por %p273, %p274
      %p276 = scmp.ne.s32.totalorder %s267, %s268
      %p277 = scmp.eq.s32.totalorder %s33, 0
      %p278 = por %p276, %p277
      %p279 = scmp.ne.s32.totalorder %s267, %s268
      %p280 = scmp.eq.s32.totalorder %s34, 1
      %p281 = por %p279, %p280
      %p283 = scmp.ne.s32.totalorder %s268, %s282
      %p284 = scmp.eq.s32.totalorder %s34, 0
      %p285 = por %p283, %p284
      %s287 = sadd.s32 %s286, 1
      %p290 = scmp.eq.s32.totalorder %s28, 1
      %p291 = scmp.ne.s32.totalorder %s286, %s288
      %p292 = scmp.eq.s32.totalorder %s28, 0
      %p293 = por %p291, %p292
      %p294 = scmp.ne.s32.totalorder %s286, %s288
      %p295 = scmp.eq.s32.totalorder %s33, 1
      %p296 = por %p294, %p295
      %p297 = scmp.ne.s32.totalorder %s288, %s289
      %p298 = scmp.eq.s32.totalorder %s33, 0
      %p299 = por %p297, %p298
      %p300 = scmp.ne.s32.totalorder %s288, %s289
      %p301 = scmp.eq.s32.totalorder %s34, 1
      %p302 = por %p300, %p301
      %p304 = scmp.ne.s32.totalorder %s289, %s303
      %p305 = scmp.eq.s32.totalorder %s34, 0
      %p306 = por %p304, %p305
      %s308 = sadd.s32 %s307, 1
      %p311 = scmp.eq.s32.totalorder %s28, 1
      %p312 = scmp.ne.s32.totalorder %s307, %s309
      %p313 = scmp.eq.s32.totalorder %s28, 0
      %p314 = por %p312, %p313
      %p315 = scmp.ne.s32.totalorder %s307, %s309
      %p316 = scmp.eq.s32.totalorder %s33, 1
      %p317 = por %p315, %p316
      %p318 = scmp.ne.s32.totalorder %s309, %s310
      %p319 = scmp.eq.s32.totalorder %s33, 0
      %p320 = por %p318, %p319
      %p321 = scmp.ne.s32.totalorder %s309, %s310
      %p322 = scmp.eq.s32.totalorder %s34, 1
      %p323 = por %p321, %p322
      %p325 = scmp.ne.s32.totalorder %s310, %s324
      %p326 = scmp.eq.s32.totalorder %s34, 0
      %p327 = por %p325, %p326
      %s329 = sadd.s32 %s328, 1
      %p332 = scmp.eq.s32.totalorder %s28, 1
      %p333 = scmp.ne.s32.totalorder %s328, %s330
      %p334 = scmp.eq.s32.totalorder %s28, 0
      %p335 = por %p333, %p334
      %p336 = scmp.ne.s32.totalorder %s328, %s330
      %p337 = scmp.eq.s32.totalorder %s33, 1
      %p338 = por %p336, %p337
      %p339 = scmp.ne.s32.totalorder %s330, %s331
      %p340 = scmp.eq.s32.totalorder %s33, 0
      %p341 = por %p339, %p340
      %p342 = scmp.ne.s32.totalorder %s330, %s331
      %p343 = scmp.eq.s32.totalorder %s34, 1
      %p344 = por %p342, %p343
      %p346 = scmp.ne.s32.totalorder %s331, %s345
      %p347 = scmp.eq.s32.totalorder %s34, 0
      %p348 = por %p346, %p347
      %s350 = sadd.s32 %s349, 1
      %p353 = scmp.eq.s32.totalorder %s28, 1
      %p354 = scmp.ne.s32.totalorder %s349, %s351
      %p355 = scmp.eq.s32.totalorder %s28, 0
      %p356 = por %p354, %p355
      %p357 = scmp.ne.s32.totalorder %s349, %s351
      %p358 = scmp.eq.s32.totalorder %s33, 1
      %p359 = por %p357, %p358
      %p360 = scmp.ne.s32.totalorder %s351, %s352
      %p361 = scmp.eq.s32.totalorder %s33, 0
      %p362 = por %p360, %p361
      %p363 = scmp.ne.s32.totalorder %s351, %s352
      %p364 = scmp.eq.s32.totalorder %s34, 1
      %p365 = por %p363, %p364
      %p367 = scmp.ne.s32.totalorder %s352, %s366
      %p368 = scmp.eq.s32.totalorder %s34, 0
      %p369 = por %p367, %p368
      %s370 = ssub.s32 %s35, %s47
      %p371 = scmp.eq.s32.totalorder %s370, 0
      %s373 = sadd.s32 %s372, 1
      %s374 = scalar_select %p371, %s372, %s373
      %p377 = pneg %p371
      %p378 = scmp.eq.s32.totalorder %s28, 1
      %p379 = por %p377, %p378
      %p380 = scmp.ne.s32.totalorder %s372, %s375
      %p381 = scmp.eq.s32.totalorder %s28, 0
      %p382 = por %p380, %p381
      %p383 = scmp.ne.s32.totalorder %s372, %s375
      %p384 = scmp.eq.s32.totalorder %s33, 1
      %p385 = por %p383, %p384
      %p386 = scmp.ne.s32.totalorder %s375, %s376
      %p387 = scmp.eq.s32.totalorder %s33, 0
      %p388 = por %p386, %p387
      %p389 = scmp.ne.s32.totalorder %s375, %s376
      %p390 = scmp.eq.s32.totalorder %s34, 1
      %p391 = por %p389, %p390
      %p393 = scmp.ne.s32.totalorder %s376, %s392
      %p394 = scmp.eq.s32.totalorder %s34, 0
      %p395 = por %p393, %p394
      %p396 = scmp.le.s32.totalorder 1, %s28
      %p397 = scmp.lt.s32.totalorder %s28, 3
      %p398 = pnand %p396, %p397
      %p399 = pneg %p398
      // Predicated region
      $region9: #{tpu_custom_call.1} parent=5 // pred_check
        _
      $region10: #{tpu_custom_call.1} parent=5 // pred_check_branch
        %401 = sbr.rel (%p398) target = $region12
      $region11: #{tpu_custom_call.1} parent=5 // pred_region
        %s402 = ssub.s32 %s28, 1
        // Predicated region
        $region13: #{tpu_custom_call.1} parent=11 // pred_check
          %p403 = pneg %p89
        $region14: #{tpu_custom_call.1} parent=11 // pred_check_branch
          %405 = sbr.rel (%p403) target = $region16
        $region15: #{tpu_custom_call.1} parent=11 // pred_region
          _
        $region16: #{tpu_custom_call.1} parent=11 // pred_fallthru
          _
        // Predicated region
        $region17: #{tpu_custom_call.1} parent=11 // pred_check
          %p406 = pneg %p110
        $region18: #{tpu_custom_call.1} parent=11 // pred_check_branch
          %408 = sbr.rel (%p406) target = $region20
        $region19: #{tpu_custom_call.1} parent=11 // pred_region
          %s410 = ssub.s32 16, 16
          %411 = vsyncadd [#allocation4], %s410
          %s413 = sshll.u32 [#allocation3], 4
          %s414 = int_to_ptr.vmem [resolvable:$true] %s413
          %416 = dma.hbm_to_vmem [thread:$0]  %s2, 16, %s414, [#allocation4]
        $region20: #{tpu_custom_call.1} parent=11 // pred_fallthru
          _
        // Predicated region
        $region21: #{tpu_custom_call.1} parent=11 // pred_check
          %p417 = pneg %p131
        $region22: #{tpu_custom_call.1} parent=11 // pred_check_branch
          %419 = sbr.rel (%p417) target = $region24
        $region23: #{tpu_custom_call.1} parent=11 // pred_region
          _
        $region24: #{tpu_custom_call.1} parent=11 // pred_fallthru
          _
        // Predicated region
        $region25: #{tpu_custom_call.1} parent=11 // pred_check
          %p420 = pneg %p152
        $region26: #{tpu_custom_call.1} parent=11 // pred_check_branch
          %422 = sbr.rel (%p420) target = $region28
        $region27: #{tpu_custom_call.1} parent=11 // pred_region
          _
        $region28: #{tpu_custom_call.1} parent=11 // pred_fallthru
          _
        // Predicated region
        $region29: #{tpu_custom_call.1} parent=11 // pred_check
          %p423 = pneg %p173
        $region30: #{tpu_custom_call.1} parent=11 // pred_check_branch
          %425 = sbr.rel (%p423) target = $region32
        $region31: #{tpu_custom_call.1} parent=11 // pred_region
          %s427 = ssub.s32 2048, 2048
          %428 = vsyncadd [#allocation7], %s427
          %s429 = sshll.u32 [#allocation6], 4
          %s430 = int_to_ptr.vmem [resolvable:$true] %s429
          %435 = dma.hbm_to_vmem [thread:$0]  %s5, 2048, %s430, [#allocation7], 128, 128, 8
        $region32: #{tpu_custom_call.1} parent=11 // pred_fallthru
          _
        // Predicated region
        $region33: #{tpu_custom_call.1} parent=11 // pred_check
          %p436 = pneg %p194
        $region34: #{tpu_custom_call.1} parent=11 // pred_check_branch
          %438 = sbr.rel (%p436) target = $region36
        $region35: #{tpu_custom_call.1} parent=11 // pred_region
          _
        $region36: #{tpu_custom_call.1} parent=11 // pred_fallthru
          _
        // Predicated region
        $region37: #{tpu_custom_call.1} parent=11 // pred_check
          %p439 = pneg %p215
        $region38: #{tpu_custom_call.1} parent=11 // pred_check_branch
          %441 = sbr.rel (%p439) target = $region40
        $region39: #{tpu_custom_call.1} parent=11 // pred_region
          %s443 = ssub.s32 8192, 8192
          %444 = vsyncadd [#allocation7], %s443
          %s445 = sshll.u32 [#allocation8], 4
          %s446 = int_to_ptr.vmem [resolvable:$true] %s445
          %451 = dma.hbm_to_vmem [thread:$0]  %s7, 8192, %s446, [#allocation7], 256, 256, 16
        $region40: #{tpu_custom_call.1} parent=11 // pred_fallthru
          _
        // Predicated region
        $region41: #{tpu_custom_call.1} parent=11 // pred_check
          %p452 = pneg %p236
        $region42: #{tpu_custom_call.1} parent=11 // pred_check_branch
          %454 = sbr.rel (%p452) target = $region44
        $region43: #{tpu_custom_call.1} parent=11 // pred_region
          _
        $region44: #{tpu_custom_call.1} parent=11 // pred_fallthru
          _
        // Predicated region
        $region45: #{tpu_custom_call.1} parent=11 // pred_check
          %p455 = pneg %p257
        $region46: #{tpu_custom_call.1} parent=11 // pred_check_branch
          %457 = sbr.rel (%p455) target = $region48
        $region47: #{tpu_custom_call.1} parent=11 // pred_region
          %s459 = ssub.s32 16384, 16384
          %460 = vsyncadd [#allocation10], %s459
          %s461 = sshll.u32 [#allocation9], 4
          %s462 = int_to_ptr.vmem [resolvable:$true] %s461
          %467 = dma.hbm_to_vmem [thread:$0]  %s9, 16384, %s462, [#allocation10], 256, 256, 16
        $region48: #{tpu_custom_call.1} parent=11 // pred_fallthru
          _
        // Predicated region
        $region49: #{tpu_custom_call.1} parent=11 // pred_check
          %p468 = pneg %p278
        $region50: #{tpu_custom_call.1} parent=11 // pred_check_branch
          %470 = sbr.rel (%p468) target = $region52
        $region51: #{tpu_custom_call.1} parent=11 // pred_region
          _
        $region52: #{tpu_custom_call.1} parent=11 // pred_fallthru
          _
        // Predicated region
        $region53: #{tpu_custom_call.1} parent=11 // pred_check
          %p471 = pneg %p299
        $region54: #{tpu_custom_call.1} parent=11 // pred_check_branch
          %473 = sbr.rel (%p471) target = $region56
        $region55: #{tpu_custom_call.1} parent=11 // pred_region
          %s475 = ssub.s32 8192, 8192
          %476 = vsyncadd [#allocation10], %s475
          %s477 = sshll.u32 [#allocation11], 4
          %s478 = int_to_ptr.vmem [resolvable:$true] %s477
          %483 = dma.hbm_to_vmem [thread:$0]  %s11, 8192, %s478, [#allocation10], 128, 128, 8
        $region56: #{tpu_custom_call.1} parent=11 // pred_fallthru
          _
        // Predicated region
        $region57: #{tpu_custom_call.1} parent=11 // pred_check
          %p484 = pneg %p320
        $region58: #{tpu_custom_call.1} parent=11 // pred_check_branch
          %486 = sbr.rel (%p484) target = $region60
        $region59: #{tpu_custom_call.1} parent=11 // pred_region
          _
        $region60: #{tpu_custom_call.1} parent=11 // pred_fallthru
          _
        // Predicated region
        $region61: #{tpu_custom_call.1} parent=11 // pred_check
          %p487 = pneg %p341
        $region62: #{tpu_custom_call.1} parent=11 // pred_check_branch
          %489 = sbr.rel (%p487) target = $region64
        $region63: #{tpu_custom_call.1} parent=11 // pred_region
          %s491 = ssub.s32 2048, 2048
          %492 = vsyncadd [#allocation13], %s491
          %s493 = sshll.u32 [#allocation12], 4
          %s494 = int_to_ptr.vmem [resolvable:$true] %s493
          %499 = dma.hbm_to_vmem [thread:$0]  %s13, 2048, %s494, [#allocation13], 64, 64, 4
        $region64: #{tpu_custom_call.1} parent=11 // pred_fallthru
          _
        // Predicated region
        $region65: #{tpu_custom_call.1} parent=11 // pred_check
          %p500 = pneg %p362
        $region66: #{tpu_custom_call.1} parent=11 // pred_check_branch
          %502 = sbr.rel (%p500) target = $region68
        $region67: #{tpu_custom_call.1} parent=11 // pred_region
          _
        $region68: #{tpu_custom_call.1} parent=11 // pred_fallthru
          _
      $region12: #{tpu_custom_call.1} parent=5 // pred_fallthru
        _
      %p503 = scmp.lt.s32.totalorder %s28, 2
      // Predicated region
      $region69: #{tpu_custom_call.1} parent=5 // pred_check
        %p504 = pneg %p503
      $region70: #{tpu_custom_call.1} parent=5 // pred_check_branch
        %506 = sbr.rel (%p504) target = $region72
      $region71: #{tpu_custom_call.1} parent=5 // pred_region
        // Predicated region
        $region73: #{tpu_custom_call.1} parent=71 // pred_check
          %p507 = pneg %p62
        $region74: #{tpu_custom_call.1} parent=71 // pred_check_branch
          %509 = sbr.rel (%p507) target = $region76
        $region75: #{tpu_custom_call.1} parent=71 // pred_region
          %s510 = smul.u32 8, %s36
          %p511 = scmp.lt.s32.totalorder %s35, 1
          %s512 = scalar_select %p511, %s35, 1
          %p513 = scmp.lt.s32.totalorder %s510, 7
          %s514 = scalar_select %p513, %s510, 7
          %s515 = smul.addr %s512, 8
          %s516 = sadd.s32 %s514, %s515
          %s517 = smul.addr %s516, 4
          %s518 = scalar_lea.vmem %s0, %s517
          %s519 = smul.u32 8, %s36
        $region76: #{tpu_custom_call.1} parent=71 // pred_fallthru
          _
      $region72: #{tpu_custom_call.1} parent=5 // pred_fallthru
        _
      %p520 = scmp.le.s32.totalorder 1, %s28
      %p521 = scmp.lt.s32.totalorder %s28, 3
      %p522 = pnand %p520, %p521
      %p523 = pneg %p522
      // Predicated region
      $region77: #{tpu_custom_call.1} parent=5 // pred_check
        _
      $region78: #{tpu_custom_call.1} parent=5 // pred_check_branch
        %525 = sbr.rel (%p522) target = $region80
      $region79: #{tpu_custom_call.1} parent=5 // pred_region
        %s526 = ssub.s32 %s28, 1
        // Predicated region
        $region81: #{tpu_custom_call.1} parent=79 // pred_check
          %p527 = pneg %p110
        $region82: #{tpu_custom_call.1} parent=79 // pred_check_branch
          %529 = sbr.rel (%p527) target = $region84
        $region83: #{tpu_custom_call.1} parent=79 // pred_region
          %530 = dma.done [#allocation4], 16
        $region84: #{tpu_custom_call.1} parent=79 // pred_fallthru
          _
        // Predicated region
        $region85: #{tpu_custom_call.1} parent=79 // pred_check
          %p531 = pneg %p173
        $region86: #{tpu_custom_call.1} parent=79 // pred_check_branch
          %533 = sbr.rel (%p531) target = $region88
        $region87: #{tpu_custom_call.1} parent=79 // pred_region
          %534 = dma.done [#allocation7], 2048
        $region88: #{tpu_custom_call.1} parent=79 // pred_fallthru
          _
        // Predicated region
        $region89: #{tpu_custom_call.1} parent=79 // pred_check
          %p535 = pneg %p215
        $region90: #{tpu_custom_call.1} parent=79 // pred_check_branch
          %537 = sbr.rel (%p535) target = $region92
        $region91: #{tpu_custom_call.1} parent=79 // pred_region
          %538 = dma.done [#allocation7], 8192
        $region92: #{tpu_custom_call.1} parent=79 // pred_fallthru
          _
        // Predicated region
        $region93: #{tpu_custom_call.1} parent=79 // pred_check
          %p539 = pneg %p257
        $region94: #{tpu_custom_call.1} parent=79 // pred_check_branch
          %541 = sbr.rel (%p539) target = $region96
        $region95: #{tpu_custom_call.1} parent=79 // pred_region
          %542 = dma.done [#allocation10], 16384
        $region96: #{tpu_custom_call.1} parent=79 // pred_fallthru
          _
        // Predicated region
        $region97: #{tpu_custom_call.1} parent=79 // pred_check
          %p543 = pneg %p299
        $region98: #{tpu_custom_call.1} parent=79 // pred_check_branch
          %545 = sbr.rel (%p543) target = $region100
        $region99: #{tpu_custom_call.1} parent=79 // pred_region
          %546 = dma.done [#allocation10], 8192
        $region100: #{tpu_custom_call.1} parent=79 // pred_fallthru
          _
        // Predicated region
        $region101: #{tpu_custom_call.1} parent=79 // pred_check
          %p547 = pneg %p341
        $region102: #{tpu_custom_call.1} parent=79 // pred_check_branch
          %549 = sbr.rel (%p547) target = $region104
        $region103: #{tpu_custom_call.1} parent=79 // pred_region
          %550 = dma.done [#allocation13], 2048
        $region104: #{tpu_custom_call.1} parent=79 // pred_fallthru
          _
        %s551 = smul.u32 8, %s38
        %p552 = scmp.lt.s32.totalorder %s37, 1
        %s553 = scalar_select %p552, %s37, 1
        %p554 = scmp.lt.s32.totalorder %s551, 7
        %s555 = scalar_select %p554, %s551, 7
        %s556 = smul.addr %s553, 8
        %s557 = sadd.s32 %s555, %s556
        %s558 = smul.addr %s557, 4
        %s559 = scalar_lea.vmem %s0, %s558
        %p560 = pneg %p68
        %p561 = pneg %p65
        %p562 = pneg %p89
        %p563 = pneg %p86
        %p564 = pneg %p110
        %p565 = pneg %p107
        %p566 = pneg %p131
        %p567 = pneg %p128
        %p568 = pneg %p152
        %p569 = pneg %p149
        %p570 = pneg %p173
        %p571 = pneg %p170
        %p572 = pneg %p194
        %p573 = pneg %p191
        %p574 = pneg %p215
        %p575 = pneg %p212
        %p576 = pneg %p236
        %p577 = pneg %p233
        %p578 = pneg %p257
        %p579 = pneg %p254
        %p580 = pneg %p278
        %p581 = pneg %p275
        %p582 = pneg %p299
        %p583 = pneg %p296
        %p584 = pneg %p320
        %p585 = pneg %p317
        %p586 = pneg %p341
        %p587 = pneg %p338
        %p588 = pneg %p362
        %p589 = pneg %p359
        %p590 = pneg %p388
        %p591 = pneg %p385
        %s592 = sand.u32 %s375, 1
        %s593 = scalar_lea.sflag [#allocation5], %s592
        %s594 = sand.u32 %s375, 1
        %s595 = smul.addr %s594, 8
        %s596 = scalar_lea.vmem [#allocation14], %s595
        %s597 = smul.u32 8, %s38
        %p598 = scmp.lt.s32.totalorder %s37, 1
        %s599 = scalar_select %p598, %s37, 1
        %p600 = scmp.lt.s32.totalorder %s597, 7
        %s601 = scalar_select %p600, %s597, 7
        %s602 = smul.addr %s599, 8
        %s603 = sadd.s32 %s601, %s602
        %s604 = smul.addr %s603, 4
        %s605 = scalar_lea.vmem %s0, %s604
        %s606 = smul.u32 8, %s38
        %v608 = vld [vmem:[%s605] sm:$0xf]
        %v609 = vld [vmem:[%s605 + $0x4] sm:$0xf]
        %v610 = vld [vmem:[%s605 + $0x8] sm:$0xf]
        %v611 = vld [vmem:[%s605 + $0xc] sm:$0xf]
        %v612 = vld [vmem:[%s605 + $0x10] sm:$0xf]
        %v613 = vld [vmem:[%s605 + $0x14] sm:$0xf]
        %v614 = vld [vmem:[%s605 + $0x18] sm:$0xf]
        %v615 = vld [vmem:[%s605 + $0x1c] sm:$0xf]
        %v616 = vunpack.c.l.bf16 %v608
        %v617 = vunpack.c.l.bf16 %v609
        %v618 = vunpack.c.l.bf16 %v610
        %v619 = vunpack.c.l.bf16 %v611
        %v620 = vunpack.c.l.bf16 %v612
        %v621 = vunpack.c.l.bf16 %v613
        %v622 = vunpack.c.l.bf16 %v614
        %v623 = vunpack.c.l.bf16 %v615
        %v624 = vld [vmem:[#allocation3] sm:$0x1]
        %v625 = vld [vmem:[%s1] sm:$0x1]
        %627 = vset.pattern.permute.xlu0 0
        %628 = vperm.xlu0 %627, %v616
        %v629 = vpop.permute.xlu0 %628
        %632 = vset.pattern.permute.xlu0 0
        %633 = vperm.xlu0 %632, %v617
        %v634 = vpop.permute.xlu0 %633
        %637 = vset.pattern.permute.xlu0 0
        %638 = vperm.xlu0 %637, %v618
        %v639 = vpop.permute.xlu0 %638
        %642 = vset.pattern.permute.xlu0 0
        %643 = vperm.xlu0 %642, %v619
        %v644 = vpop.permute.xlu0 %643
        %647 = vset.pattern.permute.xlu0 0
        %648 = vperm.xlu0 %647, %v620
        %v649 = vpop.permute.xlu0 %648
        %652 = vset.pattern.permute.xlu0 0
        %653 = vperm.xlu0 %652, %v621
        %v654 = vpop.permute.xlu0 %653
        %657 = vset.pattern.permute.xlu0 0
        %658 = vperm.xlu0 %657, %v622
        %v659 = vpop.permute.xlu0 %658
        %662 = vset.pattern.permute.xlu0 0
        %663 = vperm.xlu0 %662, %v623
        %v664 = vpop.permute.xlu0 %663
        %v666 = vlaneseq
        %v667 = vshrl.u32 %v666, 7
        %v668 = vsub.s32 0, %v667
        %v669 = vrot.slane %v625, %v668
        %v670 = vmul.f32 %v629, %v669
        %v671 = vmul.f32 %v634, %v669
        %v672 = vmul.f32 %v639, %v669
        %v673 = vmul.f32 %v644, %v669
        %v674 = vmul.f32 %v649, %v669
        %v675 = vmul.f32 %v654, %v669
        %v676 = vmul.f32 %v659, %v669
        %v677 = vmul.f32 %v664, %v669
        %v679 = vlaneseq
        %v680 = vshrl.u32 %v679, 7
        %v681 = vsub.s32 0, %v680
        %v682 = vrot.slane %v624, %v681
        %v684 = vadd.f32 %v682, %v670
        %v685 = vadd.f32 %v682, %v671
        %v686 = vadd.f32 %v682, %v672
        %v687 = vadd.f32 %v682, %v673
        %v688 = vadd.f32 %v682, %v674
        %v689 = vadd.f32 %v682, %v675
        %v690 = vadd.f32 %v682, %v676
        %v691 = vadd.f32 %v682, %v677
        %v692 = vld [vmem:[%s1 + $0x1] sm:$0x1]
        %693 = vset.pattern.permute.xlu0 1
        %694 = vperm.xlu0 %693, %v616
        %v695 = vpop.permute.xlu0 %694
        %697 = vset.pattern.permute.xlu0 1
        %698 = vperm.xlu0 %697, %v617
        %v699 = vpop.permute.xlu0 %698
        %701 = vset.pattern.permute.xlu0 1
        %702 = vperm.xlu0 %701, %v618
        %v703 = vpop.permute.xlu0 %702
        %705 = vset.pattern.permute.xlu0 1
        %706 = vperm.xlu0 %705, %v619
        %v707 = vpop.permute.xlu0 %706
        %709 = vset.pattern.permute.xlu0 1
        %710 = vperm.xlu0 %709, %v620
        %v711 = vpop.permute.xlu0 %710
        %713 = vset.pattern.permute.xlu0 1
        %714 = vperm.xlu0 %713, %v621
        %v715 = vpop.permute.xlu0 %714
        %717 = vset.pattern.permute.xlu0 1
        %718 = vperm.xlu0 %717, %v622
        %v719 = vpop.permute.xlu0 %718
        %721 = vset.pattern.permute.xlu0 1
        %722 = vperm.xlu0 %721, %v623
        %v723 = vpop.permute.xlu0 %722
        %v725 = vlaneseq
        %v726 = vshrl.u32 %v725, 7
        %v727 = vsub.s32 0, %v726
        %v728 = vrot.slane %v692, %v727
        %v729 = vmul.f32 %v695, %v728
        %v730 = vmul.f32 %v699, %v728
        %v731 = vmul.f32 %v703, %v728
        %v732 = vmul.f32 %v707, %v728
        %v733 = vmul.f32 %v711, %v728
        %v734 = vmul.f32 %v715, %v728
        %v735 = vmul.f32 %v719, %v728
        %v736 = vmul.f32 %v723, %v728
        %v737 = vadd.f32 %v684, %v729
        %v738 = vadd.f32 %v685, %v730
        %v739 = vadd.f32 %v686, %v731
        %v740 = vadd.f32 %v687, %v732
        %v741 = vadd.f32 %v688, %v733
        %v742 = vadd.f32 %v689, %v734
        %v743 = vadd.f32 %v690, %v735
        %v744 = vadd.f32 %v691, %v736
        %v745 = vld [vmem:[%s1 + $0x2] sm:$0x1]
        %746 = vset.pattern.permute.xlu0 2
        %747 = vperm.xlu0 %746, %v616
        %v748 = vpop.permute.xlu0 %747
        %750 = vset.pattern.permute.xlu0 2
        %751 = vperm.xlu0 %750, %v617
        %v752 = vpop.permute.xlu0 %751
        %754 = vset.pattern.permute.xlu0 2
        %755 = vperm.xlu0 %754, %v618
        %v756 = vpop.permute.xlu0 %755
        %758 = vset.pattern.permute.xlu0 2
        %759 = vperm.xlu0 %758, %v619
        %v760 = vpop.permute.xlu0 %759
        %762 = vset.pattern.permute.xlu0 2
        %763 = vperm.xlu0 %762, %v620
        %v764 = vpop.permute.xlu0 %763
        %766 = vset.pattern.permute.xlu0 2
        %767 = vperm.xlu0 %766, %v621
        %v768 = vpop.permute.xlu0 %767
        %770 = vset.pattern.permute.xlu0 2
        %771 = vperm.xlu0 %770, %v622
        %v772 = vpop.permute.xlu0 %771
        %774 = vset.pattern.permute.xlu0 2
        %775 = vperm.xlu0 %774, %v623
        %v776 = vpop.permute.xlu0 %775
        %v778 = vlaneseq
        %v779 = vshrl.u32 %v778, 7
        %v780 = vsub.s32 0, %v779
        %v781 = vrot.slane %v745, %v780
        %v782 = vmul.f32 %v748, %v781
        %v783 = vmul.f32 %v752, %v781
        %v784 = vmul.f32 %v756, %v781
        %v785 = vmul.f32 %v760, %v781
        %v786 = vmul.f32 %v764, %v781
        %v787 = vmul.f32 %v768, %v781
        %v788 = vmul.f32 %v772, %v781
        %v789 = vmul.f32 %v776, %v781
        %v790 = vadd.f32 %v737, %v782
        %v791 = vadd.f32 %v738, %v783
        %v792 = vadd.f32 %v739, %v784
        %v793 = vadd.f32 %v740, %v785
        %v794 = vadd.f32 %v741, %v786
        %v795 = vadd.f32 %v742, %v787
        %v796 = vadd.f32 %v743, %v788
        %v797 = vadd.f32 %v744, %v789
        %v798 = vmax.f32 %v790, 0.0
        %v799 = vmax.f32 %v791, 0.0
        %v800 = vmax.f32 %v792, 0.0
        %v801 = vmax.f32 %v793, 0.0
        %v802 = vmax.f32 %v794, 0.0
        %v803 = vmax.f32 %v795, 0.0
        %v804 = vmax.f32 %v796, 0.0
        %v805 = vmax.f32 %v797, 0.0
        %v806 = vpack.c.bf16 %v799, %v798
        %v807 = vpack.c.bf16 %v801, %v800
        %v808 = vpack.c.bf16 %v803, %v802
        %v809 = vpack.c.bf16 %v805, %v804
        %v810 = vld [vmem:[%s3] sm:$0xf]
        %v811 = vld [vmem:[%s3 + $0x4] sm:$0xf]
        %v812 = vld [vmem:[%s3 + $0x8] sm:$0xf]
        %v813 = vld [vmem:[%s3 + $0xc] sm:$0xf]
        %v814 = vld [vmem:[%s3 + $0x10] sm:$0xf]
        %v815 = vld [vmem:[%s3 + $0x14] sm:$0xf]
        %v816 = vld [vmem:[%s3 + $0x18] sm:$0xf]
        %v817 = vld [vmem:[%s3 + $0x1c] sm:$0xf]
        %v818 = vld [vmem:[%s3 + $0x20] sm:$0xf]
        %v819 = vld [vmem:[%s3 + $0x24] sm:$0xf]
        %v820 = vld [vmem:[%s3 + $0x28] sm:$0xf]
        %v821 = vld [vmem:[%s3 + $0x2c] sm:$0xf]
        %v822 = vld [vmem:[%s3 + $0x30] sm:$0xf]
        %v823 = vld [vmem:[%s3 + $0x34] sm:$0xf]
        %v824 = vld [vmem:[%s3 + $0x38] sm:$0xf]
        %v825 = vld [vmem:[%s3 + $0x3c] sm:$0xf]
        %v826 = vld [vmem:[%s4] sm:$0x1]
        %v828 = vlaneseq
        %v829 = vshrl.u32 %v828, 7
        %v830 = vsub.s32 0, %v829
        %v831 = vrot.slane %v826, %v830
        %v849 = vunpack.c.l.b16 %v810
        %v850 = vunpack.c.l.b16 %v811
        %v851 = vunpack.c.l.b16 %v812
        %v852 = vunpack.c.l.b16 %v813
        %v853 = vunpack.c.l.b16 %v814
        %v854 = vunpack.c.l.b16 %v815
        %v855 = vunpack.c.l.b16 %v816
        %v856 = vunpack.c.l.b16 %v817
        %v857 = vunpack.c.l.b16 %v818
        %v858 = vunpack.c.l.b16 %v819
        %v859 = vunpack.c.l.b16 %v820
        %v860 = vunpack.c.l.b16 %v821
        %v861 = vunpack.c.l.b16 %v822
        %v862 = vunpack.c.l.b16 %v823
        %v863 = vunpack.c.l.b16 %v824
        %v864 = vunpack.c.l.b16 %v825
        %v865 = vpack.c.b16 %v850, %v849
        %v866 = vpack.c.b16 %v852, %v851
        %v867 = vpack.c.b16 %v854, %v853
        %v868 = vpack.c.b16 %v856, %v855
        %v869 = vpack.c.b16 %v858, %v857
        %v870 = vpack.c.b16 %v860, %v859
        %v871 = vpack.c.b16 %v862, %v861
        %v872 = vpack.c.b16 %v864, %v863
        %881 = vmatprep.subr.bf16.mxu0 0
        %882 = vmatpush1.bf16.msra.mxu0 %v865
        %883 = vmatprep.subr.bf16.mxu0 0
        %884 = vmatpush1.bf16.msra.mxu0 %v866
        %885 = vmatprep.subr.bf16.mxu0 0
        %886 = vmatpush1.bf16.msra.mxu0 %v867
        %887 = vmatprep.subr.bf16.mxu0 0
        %888 = vmatpush1.bf16.msra.mxu0 %v868
        %889 = vmatprep.subr.bf16.mxu0 0
        %890 = vmatpush1.bf16.msra.mxu0 %v869
        %891 = vmatprep.subr.bf16.mxu0 0
        %892 = vmatpush1.bf16.msra.mxu0 %v870
        %893 = vmatprep.subr.bf16.mxu0 0
        %894 = vmatpush1.bf16.msra.mxu0 %v871
        %895 = vmatprep.subr.bf16.mxu0 0
        %896 = vmatpush1.bf16.msra.mxu0 %v872
        %897 = vmatprep.subr.bf16.mxu0 0
        %898 = vmatpush1.bf16.msra.mxu0 0
        %899 = vmatprep.subr.bf16.mxu0 0
        %900 = vmatpush1.bf16.msra.mxu0 0
        %901 = vmatprep.subr.bf16.mxu0 0
        %902 = vmatpush1.bf16.msra.mxu0 0
        %903 = vmatprep.subr.bf16.mxu0 0
        %904 = vmatpush1.bf16.msra.mxu0 0
        %905 = vmatprep.subr.bf16.mxu0 0
        %906 = vmatpush1.bf16.msra.mxu0 0
        %907 = vmatprep.subr.bf16.mxu0 0
        %908 = vmatpush1.bf16.msra.mxu0 0
        %909 = vmatprep.subr.bf16.mxu0 0
        %910 = vmatpush1.bf16.msra.mxu0 0
        %911 = vmatprep.subr.bf16.mxu0 0
        %912 = vmatpush1.bf16.msra.mxu0 0
        %913 = vmatprep.mubr.bf16.mxu0 0
        %914 = vmatmul.mubr.bf16.gmra.mrb[0].mxu0 %v806
        %v915 = vpop.f32.mrb[0].mxu0
        %v916 = vadd.f32 %v831, %v915
        %v917 = vpop.f32.mrb[0].mxu0
        %v918 = vpop.f32.mrb[0].mxu0
        %v919 = vadd.f32 %v831, %v918
        %v920 = vpop.f32.mrb[0].mxu0
        %921 = vmatprep.mubr.bf16.mxu0 0
        %922 = vmatmul.mubr.bf16.gmra.mrb[0].mxu0 %v807
        %v923 = vpop.f32.mrb[0].mxu0
        %v924 = vadd.f32 %v831, %v923
        %v925 = vpop.f32.mrb[0].mxu0
        %v926 = vpop.f32.mrb[0].mxu0
        %v927 = vadd.f32 %v831, %v926
        %v928 = vpop.f32.mrb[0].mxu0
        %929 = vmatprep.mubr.bf16.mxu0 0
        %930 = vmatmul.mubr.bf16.gmra.mrb[0].mxu0 %v808
        %v931 = vpop.f32.mrb[0].mxu0
        %v932 = vadd.f32 %v831, %v931
        %v933 = vpop.f32.mrb[0].mxu0
        %v934 = vpop.f32.mrb[0].mxu0
        %v935 = vadd.f32 %v831, %v934
        %v936 = vpop.f32.mrb[0].mxu0
        %937 = vmatprep.mubr.bf16.mxu0 0
        %938 = vmatmul.mubr.bf16.gmra.mrb[0].mxu0 %v809
        %v939 = vpop.f32.mrb[0].mxu0
        %v940 = vadd.f32 %v831, %v939
        %v941 = vpop.f32.mrb[0].mxu0
        %v942 = vpop.f32.mrb[0].mxu0
        %v943 = vadd.f32 %v831, %v942
        %v944 = vpop.f32.mrb[0].mxu0
        %945 = vdwg.mxu0
        %v946 = vmax.f32 %v916, 0.0
        %v947 = vmax.f32 %v919, 0.0
        %v948 = vmax.f32 %v924, 0.0
        %v949 = vmax.f32 %v927, 0.0
        %v950 = vmax.f32 %v932, 0.0
        %v951 = vmax.f32 %v935, 0.0
        %v952 = vmax.f32 %v940, 0.0
        %v953 = vmax.f32 %v943, 0.0
        %v954 = vpack.c.bf16 %v947, %v946
        %v955 = vpack.c.bf16 %v949, %v948
        %v956 = vpack.c.bf16 %v951, %v950
        %v957 = vpack.c.bf16 %v953, %v952
        %v958 = vld [vmem:[#allocation6] sm:$0xff]
        %v959 = vld [vmem:[#allocation6 + $0x8] sm:$0xff]
        %v960 = vld [vmem:[#allocation6 + $0x10] sm:$0xff]
        %v961 = vld [vmem:[#allocation6 + $0x18] sm:$0xff]
        %v962 = vld [vmem:[#allocation6 + $0x20] sm:$0xff]
        %v963 = vld [vmem:[#allocation6 + $0x28] sm:$0xff]
        %v964 = vld [vmem:[#allocation6 + $0x30] sm:$0xff]
        %v965 = vld [vmem:[#allocation6 + $0x38] sm:$0xff]
        %v966 = vld [vmem:[#allocation6 + $0x40] sm:$0xff]
        %v967 = vld [vmem:[#allocation6 + $0x48] sm:$0xff]
        %v968 = vld [vmem:[#allocation6 + $0x50] sm:$0xff]
        %v969 = vld [vmem:[#allocation6 + $0x58] sm:$0xff]
        %v970 = vld [vmem:[#allocation6 + $0x60] sm:$0xff]
        %v971 = vld [vmem:[#allocation6 + $0x68] sm:$0xff]
        %v972 = vld [vmem:[#allocation6 + $0x70] sm:$0xff]
        %v973 = vld [vmem:[#allocation6 + $0x78] sm:$0xff]
        %v974 = vld [vmem:[%s6] sm:$0x3]
        %v976 = vlaneseq
        %v977 = vshrl.u32 %v976, 7
        %v978 = vsub.s32 0, %v977
        %v979 = vrot.slane %v974, %v978
        %v980 = vlaneseq
        %v981 = vshrl.u32 %v980, 7
        %v982 = vsub.s32 1, %v981
        %v983 = vrot.slane %v974, %v982
        %v1002 = vunpack.c.l.b16 %v958
        %v1003 = vunpack.c.h.b16 %v958
        %v1004 = vunpack.c.l.b16 %v959
        %v1005 = vunpack.c.h.b16 %v959
        %v1006 = vunpack.c.l.b16 %v960
        %v1007 = vunpack.c.h.b16 %v960
        %v1008 = vunpack.c.l.b16 %v961
        %v1009 = vunpack.c.h.b16 %v961
        %v1010 = vunpack.c.l.b16 %v962
        %v1011 = vunpack.c.h.b16 %v962
        %v1012 = vunpack.c.l.b16 %v963
        %v1013 = vunpack.c.h.b16 %v963
        %v1014 = vunpack.c.l.b16 %v964
        %v1015 = vunpack.c.h.b16 %v964
        %v1016 = vunpack.c.l.b16 %v965
        %v1017 = vunpack.c.h.b16 %v965
        %v1018 = vunpack.c.l.b16 %v966
        %v1019 = vunpack.c.h.b16 %v966
        %v1020 = vunpack.c.l.b16 %v967
        %v1021 = vunpack.c.h.b16 %v967
        %v1022 = vunpack.c.l.b16 %v968
        %v1023 = vunpack.c.h.b16 %v968
        %v1024 = vunpack.c.l.b16 %v969
        %v1025 = vunpack.c.h.b16 %v969
        %v1026 = vunpack.c.l.b16 %v970
        %v1027 = vunpack.c.h.b16 %v970
        %v1028 = vunpack.c.l.b16 %v971
        %v1029 = vunpack.c.h.b16 %v971
        %v1030 = vunpack.c.l.b16 %v972
        %v1031 = vunpack.c.h.b16 %v972
        %v1032 = vunpack.c.l.b16 %v973
        %v1033 = vunpack.c.h.b16 %v973
        %v1034 = vpack.c.b16 %v1004, %v1002
        %v1035 = vpack.c.b16 %v1005, %v1003
        %v1036 = vpack.c.b16 %v1008, %v1006
        %v1037 = vpack.c.b16 %v1009, %v1007
        %v1038 = vpack.c.b16 %v1012, %v1010
        %v1039 = vpack.c.b16 %v1013, %v1011
        %v1040 = vpack.c.b16 %v1016, %v1014
        %v1041 = vpack.c.b16 %v1017, %v1015
        %v1042 = vpack.c.b16 %v1020, %v1018
        %v1043 = vpack.c.b16 %v1021, %v1019
        %v1044 = vpack.c.b16 %v1024, %v1022
        %v1045 = vpack.c.b16 %v1025, %v1023
        %v1046 = vpack.c.b16 %v1028, %v1026
        %v1047 = vpack.c.b16 %v1029, %v1027
        %v1048 = vpack.c.b16 %v1032, %v1030
        %v1049 = vpack.c.b16 %v1033, %v1031
        %1066 = vmatprep.subr.bf16.mxu0 %v1035
        %1067 = vmatpush1.bf16.msra.mxu0 %v1034
        %1068 = vmatprep.subr.bf16.mxu0 %v1037
        %1069 = vmatpush1.bf16.msra.mxu0 %v1036
        %1070 = vmatprep.subr.bf16.mxu0 %v1039
        %1071 = vmatpush1.bf16.msra.mxu0 %v1038
        %1072 = vmatprep.subr.bf16.mxu0 %v1041
        %1073 = vmatpush1.bf16.msra.mxu0 %v1040
        %1074 = vmatprep.subr.bf16.mxu0 %v1043
        %1075 = vmatpush1.bf16.msra.mxu0 %v1042
        %1076 = vmatprep.subr.bf16.mxu0 %v1045
        %1077 = vmatpush1.bf16.msra.mxu0 %v1044
        %1078 = vmatprep.subr.bf16.mxu0 %v1047
        %1079 = vmatpush1.bf16.msra.mxu0 %v1046
        %1080 = vmatprep.subr.bf16.mxu0 %v1049
        %1081 = vmatpush1.bf16.msra.mxu0 %v1048
        %1082 = vmatprep.subr.bf16.mxu0 0
        %1083 = vmatpush1.bf16.msra.mxu0 0
        %1084 = vmatprep.subr.bf16.mxu0 0
        %1085 = vmatpush1.bf16.msra.mxu0 0
        %1086 = vmatprep.subr.bf16.mxu0 0
        %1087 = vmatpush1.bf16.msra.mxu0 0
        %1088 = vmatprep.subr.bf16.mxu0 0
        %1089 = vmatpush1.bf16.msra.mxu0 0
        %1090 = vmatprep.subr.bf16.mxu0 0
        %1091 = vmatpush1.bf16.msra.mxu0 0
        %1092 = vmatprep.subr.bf16.mxu0 0
        %1093 = vmatpush1.bf16.msra.mxu0 0
        %1094 = vmatprep.subr.bf16.mxu0 0
        %1095 = vmatpush1.bf16.msra.mxu0 0
        %1096 = vmatprep.subr.bf16.mxu0 0
        %1097 = vmatpush1.bf16.msra.mxu0 0
        %1098 = vmatprep.mubr.bf16.mxu0 0
        %1099 = vmatmul.mubr.bf16.gmra.mrb[0].mxu0 %v954
        %v1100 = vpop.f32.mrb[0].mxu0
        %v1101 = vadd.f32 %v979, %v1100
        %v1102 = vpop.f32.mrb[0].mxu0
        %v1103 = vadd.f32 %v983, %v1102
        %v1104 = vpop.f32.mrb[0].mxu0
        %v1105 = vadd.f32 %v979, %v1104
        %v1106 = vpop.f32.mrb[0].mxu0
        %v1107 = vadd.f32 %v983, %v1106
        %1108 = vmatprep.mubr.bf16.mxu0 0
        %1109 = vmatmul.mubr.bf16.gmra.mrb[0].mxu0 %v955
        %v1110 = vpop.f32.mrb[0].mxu0
        %v1111 = vadd.f32 %v979, %v1110
        %v1112 = vpop.f32.mrb[0].mxu0
        %v1113 = vadd.f32 %v983, %v1112
        %v1114 = vpop.f32.mrb[0].mxu0
        %v1115 = vadd.f32 %v979, %v1114
        %v1116 = vpop.f32.mrb[0].mxu0
        %v1117 = vadd.f32 %v983, %v1116
        %1118 = vmatprep.mubr.bf16.mxu0 0
        %1119 = vmatmul.mubr.bf16.gmra.mrb[0].mxu0 %v956
        %v1120 = vpop.f32.mrb[0].mxu0
        %v1121 = vadd.f32 %v979, %v1120
        %v1122 = vpop.f32.mrb[0].mxu0
        %v1123 = vadd.f32 %v983, %v1122
        %v1124 = vpop.f32.mrb[0].mxu0
        %v1125 = vadd.f32 %v979, %v1124
        %v1126 = vpop.f32.mrb[0].mxu0
        %v1127 = vadd.f32 %v983, %v1126
        %1128 = vmatprep.mubr.bf16.mxu0 0
        %1129 = vmatmul.mubr.bf16.gmra.mrb[0].mxu0 %v957
        %v1130 = vpop.f32.mrb[0].mxu0
        %v1131 = vadd.f32 %v979, %v1130
        %v1132 = vpop.f32.mrb[0].mxu0
        %v1133 = vadd.f32 %v983, %v1132
        %v1134 = vpop.f32.mrb[0].mxu0
        %v1135 = vadd.f32 %v979, %v1134
        %v1136 = vpop.f32.mrb[0].mxu0
        %v1137 = vadd.f32 %v983, %v1136
        %1138 = vdwg.mxu0
        %v1139 = vmax.f32 %v1101, 0.0
        %v1140 = vmax.f32 %v1103, 0.0
        %v1141 = vmax.f32 %v1105, 0.0
        %v1142 = vmax.f32 %v1107, 0.0
        %v1143 = vmax.f32 %v1111, 0.0
        %v1144 = vmax.f32 %v1113, 0.0
        %v1145 = vmax.f32 %v1115, 0.0
        %v1146 = vmax.f32 %v1117, 0.0
        %v1147 = vmax.f32 %v1121, 0.0
        %v1148 = vmax.f32 %v1123, 0.0
        %v1149 = vmax.f32 %v1125, 0.0
        %v1150 = vmax.f32 %v1127, 0.0
        %v1151 = vmax.f32 %v1131, 0.0
        %v1152 = vmax.f32 %v1133, 0.0
        %v1153 = vmax.f32 %v1135, 0.0
        %v1154 = vmax.f32 %v1137, 0.0
        %v1155 = vpack.c.bf16 %v1141, %v1139
        %v1156 = vpack.c.bf16 %v1142, %v1140
        %v1157 = vpack.c.bf16 %v1145, %v1143
        %v1158 = vpack.c.bf16 %v1146, %v1144
        %v1159 = vpack.c.bf16 %v1149, %v1147
        %v1160 = vpack.c.bf16 %v1150, %v1148
        %v1161 = vpack.c.bf16 %v1153, %v1151
        %v1162 = vpack.c.bf16 %v1154, %v1152
        %v1163 = vld [vmem:[#allocation8] sm:$0xff]
        %v1164 = vld [vmem:[#allocation8 + $0x8] sm:$0xff]
        %v1165 = vld [vmem:[#allocation8 + $0x10] sm:$0xff]
        %v1166 = vld [vmem:[#allocation8 + $0x18] sm:$0xff]
        %v1167 = vld [vmem:[#allocation8 + $0x20] sm:$0xff]
        %v1168 = vld [vmem:[#allocation8 + $0x28] sm:$0xff]
        %v1169 = vld [vmem:[#allocation8 + $0x30] sm:$0xff]
        %v1170 = vld [vmem:[#allocation8 + $0x38] sm:$0xff]
        %v1171 = vld [vmem:[#allocation8 + $0x40] sm:$0xff]
        %v1172 = vld [vmem:[#allocation8 + $0x48] sm:$0xff]
        %v1173 = vld [vmem:[#allocation8 + $0x50] sm:$0xff]
        %v1174 = vld [vmem:[#allocation8 + $0x58] sm:$0xff]
        %v1175 = vld [vmem:[#allocation8 + $0x60] sm:$0xff]
        %v1176 = vld [vmem:[#allocation8 + $0x68] sm:$0xff]
        %v1177 = vld [vmem:[#allocation8 + $0x70] sm:$0xff]
        %v1178 = vld [vmem:[#allocation8 + $0x78] sm:$0xff]
        %v1179 = vld [vmem:[#allocation8 + $0x80] sm:$0xff]
        %v1180 = vld [vmem:[#allocation8 + $0x88] sm:$0xff]
        %v1181 = vld [vmem:[#allocation8 + $0x90] sm:$0xff]
        %v1182 = vld [vmem:[#allocation8 + $0x98] sm:$0xff]
        %v1183 = vld [vmem:[#allocation8 + $0xa0] sm:$0xff]
        %v1184 = vld [vmem:[#allocation8 + $0xa8] sm:$0xff]
        %v1185 = vld [vmem:[#allocation8 + $0xb0] sm:$0xff]
        %v1186 = vld [vmem:[#allocation8 + $0xb8] sm:$0xff]
        %v1187 = vld [vmem:[#allocation8 + $0xc0] sm:$0xff]
        %v1188 = vld [vmem:[#allocation8 + $0xc8] sm:$0xff]
        %v1189 = vld [vmem:[#allocation8 + $0xd0] sm:$0xff]
        %v1190 = vld [vmem:[#allocation8 + $0xd8] sm:$0xff]
        %v1191 = vld [vmem:[#allocation8 + $0xe0] sm:$0xff]
        %v1192 = vld [vmem:[#allocation8 + $0xe8] sm:$0xff]
        %v1193 = vld [vmem:[#allocation8 + $0xf0] sm:$0xff]
        %v1194 = vld [vmem:[#allocation8 + $0xf8] sm:$0xff]
        %v1195 = vld [vmem:[#allocation8 + $0x100] sm:$0xff]
        %v1196 = vld [vmem:[#allocation8 + $0x108] sm:$0xff]
        %v1197 = vld [vmem:[#allocation8 + $0x110] sm:$0xff]
        %v1198 = vld [vmem:[#allocation8 + $0x118] sm:$0xff]
        %v1199 = vld [vmem:[#allocation8 + $0x120] sm:$0xff]
        %v1200 = vld [vmem:[#allocation8 + $0x128] sm:$0xff]
        %v1201 = vld [vmem:[#allocation8 + $0x130] sm:$0xff]
        %v1202 = vld [vmem:[#allocation8 + $0x138] sm:$0xff]
        %v1203 = vld [vmem:[#allocation8 + $0x140] sm:$0xff]
        %v1204 = vld [vmem:[#allocation8 + $0x148] sm:$0xff]
        %v1205 = vld [vmem:[#allocation8 + $0x150] sm:$0xff]
        %v1206 = vld [vmem:[#allocation8 + $0x158] sm:$0xff]
        %v1207 = vld [vmem:[#allocation8 + $0x160] sm:$0xff]
        %v1208 = vld [vmem:[#allocation8 + $0x168] sm:$0xff]
        %v1209 = vld [vmem:[#allocation8 + $0x170] sm:$0xff]
        %v1210 = vld [vmem:[#allocation8 + $0x178] sm:$0xff]
        %v1211 = vld [vmem:[#allocation8 + $0x180] sm:$0xff]
        %v1212 = vld [vmem:[#allocation8 + $0x188] sm:$0xff]
        %v1213 = vld [vmem:[#allocation8 + $0x190] sm:$0xff]
        %v1214 = vld [vmem:[#allocation8 + $0x198] sm:$0xff]
        %v1215 = vld [vmem:[#allocation8 + $0x1a0] sm:$0xff]
        %v1216 = vld [vmem:[#allocation8 + $0x1a8] sm:$0xff]
        %v1217 = vld [vmem:[#allocation8 + $0x1b0] sm:$0xff]
        %v1218 = vld [vmem:[#allocation8 + $0x1b8] sm:$0xff]
        %v1219 = vld [vmem:[#allocation8 + $0x1c0] sm:$0xff]
        %v1220 = vld [vmem:[#allocation8 + $0x1c8] sm:$0xff]
        %v1221 = vld [vmem:[#allocation8 + $0x1d0] sm:$0xff]
        %v1222 = vld [vmem:[#allocation8 + $0x1d8] sm:$0xff]
        %v1223 = vld [vmem:[#allocation8 + $0x1e0] sm:$0xff]
        %v1224 = vld [vmem:[#allocation8 + $0x1e8] sm:$0xff]
        %v1225 = vld [vmem:[#allocation8 + $0x1f0] sm:$0xff]
        %v1226 = vld [vmem:[#allocation8 + $0x1f8] sm:$0xff]
        %v1227 = vld [vmem:[%s8] sm:$0xf]
        %v1229 = vlaneseq
        %v1230 = vshrl.u32 %v1229, 7
        %v1231 = vsub.s32 0, %v1230
        %v1232 = vrot.slane %v1227, %v1231
        %v1233 = vlaneseq
        %v1234 = vshrl.u32 %v1233, 7
        %v1235 = vsub.s32 1, %v1234
        %v1236 = vrot.slane %v1227, %v1235
        %v1237 = vlaneseq
        %v1238 = vshrl.u32 %v1237, 7
        %v1239 = vsub.s32 2, %v1238
        %v1240 = vrot.slane %v1227, %v1239
        %v1241 = vlaneseq
        %v1242 = vshrl.u32 %v1241, 7
        %v1243 = vsub.s32 3, %v1242
        %v1244 = vrot.slane %v1227, %v1243
        %v1313 = vunpack.c.l.b16 %v1163
        %v1314 = vunpack.c.h.b16 %v1163
        %v1315 = vunpack.c.l.b16 %v1164
        %v1316 = vunpack.c.h.b16 %v1164
        %v1317 = vunpack.c.l.b16 %v1165
        %v1318 = vunpack.c.h.b16 %v1165
        %v1319 = vunpack.c.l.b16 %v1166
        %v1320 = vunpack.c.h.b16 %v1166
        %v1321 = vunpack.c.l.b16 %v1167
        %v1322 = vunpack.c.h.b16 %v1167
        %v1323 = vunpack.c.l.b16 %v1168
        %v1324 = vunpack.c.h.b16 %v1168
        %v1325 = vunpack.c.l.b16 %v1169
        %v1326 = vunpack.c.h.b16 %v1169
        %v1327 = vunpack.c.l.b16 %v1170
        %v1328 = vunpack.c.h.b16 %v1170
        %v1329 = vunpack.c.l.b16 %v1171
        %v1330 = vunpack.c.h.b16 %v1171
        %v1331 = vunpack.c.l.b16 %v1172
        %v1332 = vunpack.c.h.b16 %v1172
        %v1333 = vunpack.c.l.b16 %v1173
        %v1334 = vunpack.c.h.b16 %v1173
        %v1335 = vunpack.c.l.b16 %v1174
        %v1336 = vunpack.c.h.b16 %v1174
        %v1337 = vunpack.c.l.b16 %v1175
        %v1338 = vunpack.c.h.b16 %v1175
        %v1339 = vunpack.c.l.b16 %v1176
        %v1340 = vunpack.c.h.b16 %v1176
        %v1341 = vunpack.c.l.b16 %v1177
        %v1342 = vunpack.c.h.b16 %v1177
        %v1343 = vunpack.c.l.b16 %v1178
        %v1344 = vunpack.c.h.b16 %v1178
        %v1345 = vunpack.c.l.b16 %v1179
        %v1346 = vunpack.c.h.b16 %v1179
        %v1347 = vunpack.c.l.b16 %v1180
        %v1348 = vunpack.c.h.b16 %v1180
        %v1349 = vunpack.c.l.b16 %v1181
        %v1350 = vunpack.c.h.b16 %v1181
        %v1351 = vunpack.c.l.b16 %v1182
        %v1352 = vunpack.c.h.b16 %v1182
        %v1353 = vunpack.c.l.b16 %v1183
        %v1354 = vunpack.c.h.b16 %v1183
        %v1355 = vunpack.c.l.b16 %v1184
        %v1356 = vunpack.c.h.b16 %v1184
        %v1357 = vunpack.c.l.b16 %v1185
        %v1358 = vunpack.c.h.b16 %v1185
        %v1359 = vunpack.c.l.b16 %v1186
        %v1360 = vunpack.c.h.b16 %v1186
        %v1361 = vunpack.c.l.b16 %v1187
        %v1362 = vunpack.c.h.b16 %v1187
        %v1363 = vunpack.c.l.b16 %v1188
        %v1364 = vunpack.c.h.b16 %v1188
        %v1365 = vunpack.c.l.b16 %v1189
        %v1366 = vunpack.c.h.b16 %v1189
        %v1367 = vunpack.c.l.b16 %v1190
        %v1368 = vunpack.c.h.b16 %v1190
        %v1369 = vunpack.c.l.b16 %v1191
        %v1370 = vunpack.c.h.b16 %v1191
        %v1371 = vunpack.c.l.b16 %v1192
        %v1372 = vunpack.c.h.b16 %v1192
        %v1373 = vunpack.c.l.b16 %v1193
        %v1374 = vunpack.c.h.b16 %v1193
        %v1375 = vunpack.c.l.b16 %v1194
        %v1376 = vunpack.c.h.b16 %v1194
        %v1377 = vunpack.c.l.b16 %v1195
        %v1378 = vunpack.c.h.b16 %v1195
        %v1379 = vunpack.c.l.b16 %v1196
        %v1380 = vunpack.c.h.b16 %v1196
        %v1381 = vunpack.c.l.b16 %v1197
        %v1382 = vunpack.c.h.b16 %v1197
        %v1383 = vunpack.c.l.b16 %v1198
        %v1384 = vunpack.c.h.b16 %v1198
        %v1385 = vunpack.c.l.b16 %v1199
        %v1386 = vunpack.c.h.b16 %v1199
        %v1387 = vunpack.c.l.b16 %v1200
        %v1388 = vunpack.c.h.b16 %v1200
        %v1389 = vunpack.c.l.b16 %v1201
        %v1390 = vunpack.c.h.b16 %v1201
        %v1391 = vunpack.c.l.b16 %v1202
        %v1392 = vunpack.c.h.b16 %v1202
        %v1393 = vunpack.c.l.b16 %v1203
        %v1394 = vunpack.c.h.b16 %v1203
        %v1395 = vunpack.c.l.b16 %v1204
        %v1396 = vunpack.c.h.b16 %v1204
        %v1397 = vunpack.c.l.b16 %v1205
        %v1398 = vunpack.c.h.b16 %v1205
        %v1399 = vunpack.c.l.b16 %v1206
        %v1400 = vunpack.c.h.b16 %v1206
        %v1401 = vunpack.c.l.b16 %v1207
        %v1402 = vunpack.c.h.b16 %v1207
        %v1403 = vunpack.c.l.b16 %v1208
        %v1404 = vunpack.c.h.b16 %v1208
        %v1405 = vunpack.c.l.b16 %v1209
        %v1406 = vunpack.c.h.b16 %v1209
        %v1407 = vunpack.c.l.b16 %v1210
        %v1408 = vunpack.c.h.b16 %v1210
        %v1409 = vunpack.c.l.b16 %v1211
        %v1410 = vunpack.c.h.b16 %v1211
        %v1411 = vunpack.c.l.b16 %v1212
        %v1412 = vunpack.c.h.b16 %v1212
        %v1413 = vunpack.c.l.b16 %v1213
        %v1414 = vunpack.c.h.b16 %v1213
        %v1415 = vunpack.c.l.b16 %v1214
        %v1416 = vunpack.c.h.b16 %v1214
        %v1417 = vunpack.c.l.b16 %v1215
        %v1418 = vunpack.c.h.b16 %v1215
        %v1419 = vunpack.c.l.b16 %v1216
        %v1420 = vunpack.c.h.b16 %v1216
        %v1421 = vunpack.c.l.b16 %v1217
        %v1422 = vunpack.c.h.b16 %v1217
        %v1423 = vunpack.c.l.b16 %v1218
        %v1424 = vunpack.c.h.b16 %v1218
        %v1425 = vunpack.c.l.b16 %v1219
        %v1426 = vunpack.c.h.b16 %v1219
        %v1427 = vunpack.c.l.b16 %v1220
        %v1428 = vunpack.c.h.b16 %v1220
        %v1429 = vunpack.c.l.b16 %v1221
        %v1430 = vunpack.c.h.b16 %v1221
        %v1431 = vunpack.c.l.b16 %v1222
        %v1432 = vunpack.c.h.b16 %v1222
        %v1433 = vunpack.c.l.b16 %v1223
        %v1434 = vunpack.c.h.b16 %v1223
        %v1435 = vunpack.c.l.b16 %v1224
        %v1436 = vunpack.c.h.b16 %v1224
        %v1437 = vunpack.c.l.b16 %v1225
        %v1438 = vunpack.c.h.b16 %v1225
        %v1439 = vunpack.c.l.b16 %v1226
        %v1440 = vunpack.c.h.b16 %v1226
        %v1441 = vpack.c.b16 %v1317, %v1313
        %v1442 = vpack.c.b16 %v1318, %v1314
        %v1443 = vpack.c.b16 %v1319, %v1315
        %v1444 = vpack.c.b16 %v1320, %v1316
        %v1445 = vpack.c.b16 %v1325, %v1321
        %v1446 = vpack.c.b16 %v1326, %v1322
        %v1447 = vpack.c.b16 %v1327, %v1323
        %v1448 = vpack.c.b16 %v1328, %v1324
        %v1449 = vpack.c.b16 %v1333, %v1329
        %v1450 = vpack.c.b16 %v1334, %v1330
        %v1451 = vpack.c.b16 %v1335, %v1331
        %v1452 = vpack.c.b16 %v1336, %v1332
        %v1453 = vpack.c.b16 %v1341, %v1337
        %v1454 = vpack.c.b16 %v1342, %v1338
        %v1455 = vpack.c.b16 %v1343, %v1339
        %v1456 = vpack.c.b16 %v1344, %v1340
        %v1457 = vpack.c.b16 %v1349, %v1345
        %v1458 = vpack.c.b16 %v1350, %v1346
        %v1459 = vpack.c.b16 %v1351, %v1347
        %v1460 = vpack.c.b16 %v1352, %v1348
        %v1461 = vpack.c.b16 %v1357, %v1353
        %v1462 = vpack.c.b16 %v1358, %v1354
        %v1463 = vpack.c.b16 %v1359, %v1355
        %v1464 = vpack.c.b16 %v1360, %v1356
        %v1465 = vpack.c.b16 %v1365, %v1361
        %v1466 = vpack.c.b16 %v1366, %v1362
        %v1467 = vpack.c.b16 %v1367, %v1363
        %v1468 = vpack.c.b16 %v1368, %v1364
        %v1469 = vpack.c.b16 %v1373, %v1369
        %v1470 = vpack.c.b16 %v1374, %v1370
        %v1471 = vpack.c.b16 %v1375, %v1371
        %v1472 = vpack.c.b16 %v1376, %v1372
        %v1473 = vpack.c.b16 %v1381, %v1377
        %v1474 = vpack.c.b16 %v1382, %v1378
        %v1475 = vpack.c.b16 %v1383, %v1379
        %v1476 = vpack.c.b16 %v1384, %v1380
        %v1477 = vpack.c.b16 %v1389, %v1385
        %v1478 = vpack.c.b16 %v1390, %v1386
        %v1479 = vpack.c.b16 %v1391, %v1387
        %v1480 = vpack.c.b16 %v1392, %v1388
        %v1481 = vpack.c.b16 %v1397, %v1393
        %v1482 = vpack.c.b16 %v1398, %v1394
        %v1483 = vpack.c.b16 %v1399, %v1395
        %v1484 = vpack.c.b16 %v1400, %v1396
        %v1485 = vpack.c.b16 %v1405, %v1401
        %v1486 = vpack.c.b16 %v1406, %v1402
        %v1487 = vpack.c.b16 %v1407, %v1403
        %v1488 = vpack.c.b16 %v1408, %v1404
        %v1489 = vpack.c.b16 %v1413, %v1409
        %v1490 = vpack.c.b16 %v1414, %v1410
        %v1491 = vpack.c.b16 %v1415, %v1411
        %v1492 = vpack.c.b16 %v1416, %v1412
        %v1493 = vpack.c.b16 %v1421, %v1417
        %v1494 = vpack.c.b16 %v1422, %v1418
        %v1495 = vpack.c.b16 %v1423, %v1419
        %v1496 = vpack.c.b16 %v1424, %v1420
        %v1497 = vpack.c.b16 %v1429, %v1425
        %v1498 = vpack.c.b16 %v1430, %v1426
        %v1499 = vpack.c.b16 %v1431, %v1427
        %v1500 = vpack.c.b16 %v1432, %v1428
        %v1501 = vpack.c.b16 %v1437, %v1433
        %v1502 = vpack.c.b16 %v1438, %v1434
        %v1503 = vpack.c.b16 %v1439, %v1435
        %v1504 = vpack.c.b16 %v1440, %v1436
        %1569 = vmatprep.subr.bf16.mxu0 %v1442
        %1570 = vmatpush1.bf16.msra.mxu0 %v1441
        %1571 = vmatprep.subr.bf16.mxu0 %v1446
        %1572 = vmatpush1.bf16.msra.mxu0 %v1445
        %1573 = vmatprep.subr.bf16.mxu0 %v1450
        %1574 = vmatpush1.bf16.msra.mxu0 %v1449
        %1575 = vmatprep.subr.bf16.mxu0 %v1454
        %1576 = vmatpush1.bf16.msra.mxu0 %v1453
        %1577 = vmatprep.subr.bf16.mxu0 %v1458
        %1578 = vmatpush1.bf16.msra.mxu0 %v1457
        %1579 = vmatprep.subr.bf16.mxu0 %v1462
        %1580 = vmatpush1.bf16.msra.mxu0 %v1461
        %1581 = vmatprep.subr.bf16.mxu0 %v1466
        %1582 = vmatpush1.bf16.msra.mxu0 %v1465
        %1583 = vmatprep.subr.bf16.mxu0 %v1470
        %1584 = vmatpush1.bf16.msra.mxu0 %v1469
        %1585 = vmatprep.subr.bf16.mxu0 %v1474
        %1586 = vmatpush1.bf16.msra.mxu0 %v1473
        %1587 = vmatprep.subr.bf16.mxu0 %v1478
        %1588 = vmatpush1.bf16.msra.mxu0 %v1477
        %1589 = vmatprep.subr.bf16.mxu0 %v1482
        %1590 = vmatpush1.bf16.msra.mxu0 %v1481
        %1591 = vmatprep.subr.bf16.mxu0 %v1486
        %1592 = vmatpush1.bf16.msra.mxu0 %v1485
        %1593 = vmatprep.subr.bf16.mxu0 %v1490
        %1594 = vmatpush1.bf16.msra.mxu0 %v1489
        %1595 = vmatprep.subr.bf16.mxu0 %v1494
        %1596 = vmatpush1.bf16.msra.mxu0 %v1493
        %1597 = vmatprep.subr.bf16.mxu0 %v1498
        %1598 = vmatpush1.bf16.msra.mxu0 %v1497
        %1599 = vmatprep.subr.bf16.mxu0 %v1502
        %1600 = vmatpush1.bf16.msra.mxu0 %v1501
        %1601 = vmatprep.mubr.bf16.mxu0 %v1156
        %1602 = vmatmul.mubr.bf16.gmra.mrb[0].mxu0 %v1155
        %v1603 = vpop.f32.mrb[0].mxu0
        %v1604 = vadd.f32 %v1232, %v1603
        %v1605 = vpop.f32.mrb[0].mxu0
        %v1606 = vadd.f32 %v1236, %v1605
        %v1607 = vpop.f32.mrb[0].mxu0
        %v1608 = vadd.f32 %v1232, %v1607
        %v1609 = vpop.f32.mrb[0].mxu0
        %v1610 = vadd.f32 %v1236, %v1609
        %1611 = vmatprep.mubr.bf16.mxu0 %v1158
        %1612 = vmatmul.mubr.bf16.gmra.mrb[0].mxu0 %v1157
        %v1613 = vpop.f32.mrb[0].mxu0
        %v1614 = vadd.f32 %v1232, %v1613
        %v1615 = vpop.f32.mrb[0].mxu0
        %v1616 = vadd.f32 %v1236, %v1615
        %v1617 = vpop.f32.mrb[0].mxu0
        %v1618 = vadd.f32 %v1232, %v1617
        %v1619 = vpop.f32.mrb[0].mxu0
        %v1620 = vadd.f32 %v1236, %v1619
        %1621 = vmatprep.mubr.bf16.mxu0 %v1160
        %1622 = vmatmul.mubr.bf16.gmra.mrb[0].mxu0 %v1159
        %v1623 = vpop.f32.mrb[0].mxu0
        %v1624 = vadd.f32 %v1232, %v1623
        %v1625 = vpop.f32.mrb[0].mxu0
        %v1626 = vadd.f32 %v1236, %v1625
        %v1627 = vpop.f32.mrb[0].mxu0
        %v1628 = vadd.f32 %v1232, %v1627
        %v1629 = vpop.f32.mrb[0].mxu0
        %v1630 = vadd.f32 %v1236, %v1629
        %1631 = vmatprep.mubr.bf16.mxu0 %v1162
        %1632 = vmatmul.mubr.bf16.gmra.mrb[0].mxu0 %v1161
        %v1633 = vpop.f32.mrb[0].mxu0
        %v1634 = vadd.f32 %v1232, %v1633
        %v1635 = vpop.f32.mrb[0].mxu0
        %v1636 = vadd.f32 %v1236, %v1635
        %v1637 = vpop.f32.mrb[0].mxu0
        %v1638 = vadd.f32 %v1232, %v1637
        %v1639 = vpop.f32.mrb[0].mxu0
        %v1640 = vadd.f32 %v1236, %v1639
        %1641 = vdwg.mxu0
        %1642 = vmatprep.subr.bf16.mxu0 %v1444
        %1643 = vmatpush1.bf16.msra.mxu0 %v1443
        %1644 = vmatprep.subr.bf16.mxu0 %v1448
        %1645 = vmatpush1.bf16.msra.mxu0 %v1447
        %1646 = vmatprep.subr.bf16.mxu0 %v1452
        %1647 = vmatpush1.bf16.msra.mxu0 %v1451
        %1648 = vmatprep.subr.bf16.mxu0 %v1456
        %1649 = vmatpush1.bf16.msra.mxu0 %v1455
        %1650 = vmatprep.subr.bf16.mxu0 %v1460
        %1651 = vmatpush1.bf16.msra.mxu0 %v1459
        %1652 = vmatprep.subr.bf16.mxu0 %v1464
        %1653 = vmatpush1.bf16.msra.mxu0 %v1463
        %1654 = vmatprep.subr.bf16.mxu0 %v1468
        %1655 = vmatpush1.bf16.msra.mxu0 %v1467
        %1656 = vmatprep.subr.bf16.mxu0 %v1472
        %1657 = vmatpush1.bf16.msra.mxu0 %v1471
        %1658 = vmatprep.subr.bf16.mxu0 %v1476
        %1659 = vmatpush1.bf16.msra.mxu0 %v1475
        %1660 = vmatprep.subr.bf16.mxu0 %v1480
        %1661 = vmatpush1.bf16.msra.mxu0 %v1479
        %1662 = vmatprep.subr.bf16.mxu0 %v1484
        %1663 = vmatpush1.bf16.msra.mxu0 %v1483
        %1664 = vmatprep.subr.bf16.mxu0 %v1488
        %1665 = vmatpush1.bf16.msra.mxu0 %v1487
        %1666 = vmatprep.subr.bf16.mxu0 %v1492
        %1667 = vmatpush1.bf16.msra.mxu0 %v1491
        %1668 = vmatprep.subr.bf16.mxu0 %v1496
        %1669 = vmatpush1.bf16.msra.mxu0 %v1495
        %1670 = vmatprep.subr.bf16.mxu0 %v1500
        %1671 = vmatpush1.bf16.msra.mxu0 %v1499
        %1672 = vmatprep.subr.bf16.mxu0 %v1504
        %1673 = vmatpush1.bf16.msra.mxu0 %v1503
        %1674 = vmatprep.mubr.bf16.mxu0 %v1156
        %1675 = vmatmul.mubr.bf16.gmra.mrb[0].mxu0 %v1155
        %v1676 = vpop.f32.mrb[0].mxu0
        %v1677 = vadd.f32 %v1240, %v1676
        %v1678 = vpop.f32.mrb[0].mxu0
        %v1679 = vadd.f32 %v1244, %v1678
        %v1680 = vpop.f32.mrb[0].mxu0
        %v1681 = vadd.f32 %v1240, %v1680
        %v1682 = vpop.f32.mrb[0].mxu0
        %v1683 = vadd.f32 %v1244, %v1682
        %1684 = vmatprep.mubr.bf16.mxu0 %v1158
        %1685 = vmatmul.mubr.bf16.gmra.mrb[0].mxu0 %v1157
        %v1686 = vpop.f32.mrb[0].mxu0
        %v1687 = vadd.f32 %v1240, %v1686
        %v1688 = vpop.f32.mrb[0].mxu0
        %v1689 = vadd.f32 %v1244, %v1688
        %v1690 = vpop.f32.mrb[0].mxu0
        %v1691 = vadd.f32 %v1240, %v1690
        %v1692 = vpop.f32.mrb[0].mxu0
        %v1693 = vadd.f32 %v1244, %v1692
        %1694 = vmatprep.mubr.bf16.mxu0 %v1160
        %1695 = vmatmul.mubr.bf16.gmra.mrb[0].mxu0 %v1159
        %v1696 = vpop.f32.mrb[0].mxu0
        %v1697 = vadd.f32 %v1240, %v1696
        %v1698 = vpop.f32.mrb[0].mxu0
        %v1699 = vadd.f32 %v1244, %v1698
        %v1700 = vpop.f32.mrb[0].mxu0
        %v1701 = vadd.f32 %v1240, %v1700
        %v1702 = vpop.f32.mrb[0].mxu0
        %v1703 = vadd.f32 %v1244, %v1702
        %1704 = vmatprep.mubr.bf16.mxu0 %v1162
        %1705 = vmatmul.mubr.bf16.gmra.mrb[0].mxu0 %v1161
        %v1706 = vpop.f32.mrb[0].mxu0
        %v1707 = vadd.f32 %v1240, %v1706
        %v1708 = vpop.f32.mrb[0].mxu0
        %v1709 = vadd.f32 %v1244, %v1708
        %v1710 = vpop.f32.mrb[0].mxu0
        %v1711 = vadd.f32 %v1240, %v1710
        %v1712 = vpop.f32.mrb[0].mxu0
        %v1713 = vadd.f32 %v1244, %v1712
        %1714 = vdwg.mxu0
        %v1715 = vmax.f32 %v1604, %v1608
        %v1716 = vmax.f32 %v1715, %v1614
        %v1717 = vmax.f32 %v1716, %v1618
        %v1718 = vmax.f32 %v1717, %v1624
        %v1719 = vmax.f32 %v1718, %v1628
        %v1720 = vmax.f32 %v1719, %v1634
        %v1721 = vmax.f32 %v1720, %v1638
        %v1722 = vrot.slane %v1721, 4
        %v1723 = vmax.f32 %v1721, %v1722
        %v1724 = vrot.slane %v1723, 2
        %v1725 = vmax.f32 %v1723, %v1724
        %v1726 = vrot.slane %v1725, 1
        %v1727 = vmax.f32 %v1725, %v1726
        %v1728 = vmax.f32 %v1606, %v1610
        %v1729 = vmax.f32 %v1728, %v1616
        %v1730 = vmax.f32 %v1729, %v1620
        %v1731 = vmax.f32 %v1730, %v1626
        %v1732 = vmax.f32 %v1731, %v1630
        %v1733 = vmax.f32 %v1732, %v1636
        %v1734 = vmax.f32 %v1733, %v1640
        %v1735 = vrot.slane %v1734, 4
        %v1736 = vmax.f32 %v1734, %v1735
        %v1737 = vrot.slane %v1736, 2
        %v1738 = vmax.f32 %v1736, %v1737
        %v1739 = vrot.slane %v1738, 1
        %v1740 = vmax.f32 %v1738, %v1739
        %v1741 = vmax.f32 %v1677, %v1681
        %v1742 = vmax.f32 %v1741, %v1687
        %v1743 = vmax.f32 %v1742, %v1691
        %v1744 = vmax.f32 %v1743, %v1697
        %v1745 = vmax.f32 %v1744, %v1701
        %v1746 = vmax.f32 %v1745, %v1707
        %v1747 = vmax.f32 %v1746, %v1711
        %v1748 = vrot.slane %v1747, 4
        %v1749 = vmax.f32 %v1747, %v1748
        %v1750 = vrot.slane %v1749, 2
        %v1751 = vmax.f32 %v1749, %v1750
        %v1752 = vrot.slane %v1751, 1
        %v1753 = vmax.f32 %v1751, %v1752
        %v1754 = vmax.f32 %v1679, %v1683
        %v1755 = vmax.f32 %v1754, %v1689
        %v1756 = vmax.f32 %v1755, %v1693
        %v1757 = vmax.f32 %v1756, %v1699
        %v1758 = vmax.f32 %v1757, %v1703
        %v1759 = vmax.f32 %v1758, %v1709
        %v1760 = vmax.f32 %v1759, %v1713
        %v1761 = vrot.slane %v1760, 4
        %v1762 = vmax.f32 %v1760, %v1761
        %v1763 = vrot.slane %v1762, 2
        %v1764 = vmax.f32 %v1762, %v1763
        %v1765 = vrot.slane %v1764, 1
        %v1766 = vmax.f32 %v1764, %v1765
        %p1767 = scmp.eq.s32.totalorder %s38, 0
        // Predicated region
        $region105: #{tpu_custom_call.1} parent=79 // pred_check
          %p1768 = pneg %p1767
        $region106: #{tpu_custom_call.1} parent=79 // pred_check_branch
          %1770 = sbr.rel (%p1768) target = $region108
        $region107: #{tpu_custom_call.1} parent=79 // pred_region
          %1771 = vst [vmem:[#allocation2] sm:$0xff] -inf
          %1772 = vst [vmem:[#allocation2 + $0x8] sm:$0xff] -inf
          %1773 = vst [vmem:[#allocation2 + $0x10] sm:$0xff] -inf
          %1774 = vst [vmem:[#allocation2 + $0x18] sm:$0xff] -inf
        $region108: #{tpu_custom_call.1} parent=79 // pred_fallthru
          _
        %v1775 = vld [vmem:[#allocation2] sm:$0xff]
        %v1776 = vld [vmem:[#allocation2 + $0x8] sm:$0xff]
        %v1777 = vld [vmem:[#allocation2 + $0x10] sm:$0xff]
        %v1778 = vld [vmem:[#allocation2 + $0x18] sm:$0xff]
        %v1779 = vmax.f32 %v1775, %v1727
        %v1780 = vmax.f32 %v1776, %v1740
        %v1781 = vmax.f32 %v1777, %v1753
        %v1782 = vmax.f32 %v1778, %v1766
        %1783 = vst [vmem:[#allocation2] sm:$0xff] %v1779
        %1784 = vst [vmem:[#allocation2 + $0x8] sm:$0xff] %v1780
        %1785 = vst [vmem:[#allocation2 + $0x10] sm:$0xff] %v1781
        %1786 = vst [vmem:[#allocation2 + $0x18] sm:$0xff] %v1782
        // Predicated region
        $region109: #{tpu_custom_call.1} parent=79 // pred_check
          %p1787 = pneg %p1767
        $region110: #{tpu_custom_call.1} parent=79 // pred_check_branch
          %1789 = sbr.rel (%p1787) target = $region112
        $region111: #{tpu_custom_call.1} parent=79 // pred_region
          %v1790 = vld [vmem:[#allocation2] sm:$0xff]
          %v1791 = vld [vmem:[#allocation2 + $0x8] sm:$0xff]
          %v1792 = vld [vmem:[#allocation2 + $0x10] sm:$0xff]
          %v1793 = vld [vmem:[#allocation2 + $0x18] sm:$0xff]
          %v1794 = vpack.c.bf16 %v1790, %v1790
          %v1795 = vpack.c.bf16 %v1791, %v1791
          %v1796 = vpack.c.bf16 %v1792, %v1792
          %v1797 = vpack.c.bf16 %v1793, %v1793
          %v1798 = vld [vmem:[#allocation9] sm:$0xff]
          %v1799 = vld [vmem:[#allocation9 + $0x8] sm:$0xff]
          %v1800 = vld [vmem:[#allocation9 + $0x10] sm:$0xff]
          %v1801 = vld [vmem:[#allocation9 + $0x18] sm:$0xff]
          %v1802 = vld [vmem:[#allocation9 + $0x20] sm:$0xff]
          %v1803 = vld [vmem:[#allocation9 + $0x28] sm:$0xff]
          %v1804 = vld [vmem:[#allocation9 + $0x30] sm:$0xff]
          %v1805 = vld [vmem:[#allocation9 + $0x38] sm:$0xff]
          %v1806 = vld [vmem:[#allocation9 + $0x40] sm:$0xff]
          %v1807 = vld [vmem:[#allocation9 + $0x48] sm:$0xff]
          %v1808 = vld [vmem:[#allocation9 + $0x50] sm:$0xff]
          %v1809 = vld [vmem:[#allocation9 + $0x58] sm:$0xff]
          %v1810 = vld [vmem:[#allocation9 + $0x60] sm:$0xff]
          %v1811 = vld [vmem:[#allocation9 + $0x68] sm:$0xff]
          %v1812 = vld [vmem:[#allocation9 + $0x70] sm:$0xff]
          %v1813 = vld [vmem:[#allocation9 + $0x78] sm:$0xff]
          %v1814 = vld [vmem:[#allocation9 + $0x80] sm:$0xff]
          %v1815 = vld [vmem:[#allocation9 + $0x88] sm:$0xff]
          %v1816 = vld [vmem:[#allocation9 + $0x90] sm:$0xff]
          %v1817 = vld [vmem:[#allocation9 + $0x98] sm:$0xff]
          %v1818 = vld [vmem:[#allocation9 + $0xa0] sm:$0xff]
          %v1819 = vld [vmem:[#allocation9 + $0xa8] sm:$0xff]
          %v1820 = vld [vmem:[#allocation9 + $0xb0] sm:$0xff]
          %v1821 = vld [vmem:[#allocation9 + $0xb8] sm:$0xff]
          %v1822 = vld [vmem:[#allocation9 + $0xc0] sm:$0xff]
          %v1823 = vld [vmem:[#allocation9 + $0xc8] sm:$0xff]
          %v1824 = vld [vmem:[#allocation9 + $0xd0] sm:$0xff]
          %v1825 = vld [vmem:[#allocation9 + $0xd8] sm:$0xff]
          %v1826 = vld [vmem:[#allocation9 + $0xe0] sm:$0xff]
          %v1827 = vld [vmem:[#allocation9 + $0xe8] sm:$0xff]
          %v1828 = vld [vmem:[#allocation9 + $0xf0] sm:$0xff]
          %v1829 = vld [vmem:[#allocation9 + $0xf8] sm:$0xff]
          %v1830 = vld [vmem:[#allocation9 + $0x100] sm:$0xff]
          %v1831 = vld [vmem:[#allocation9 + $0x108] sm:$0xff]
          %v1832 = vld [vmem:[#allocation9 + $0x110] sm:$0xff]
          %v1833 = vld [vmem:[#allocation9 + $0x118] sm:$0xff]
          %v1834 = vld [vmem:[#allocation9 + $0x120] sm:$0xff]
          %v1835 = vld [vmem:[#allocation9 + $0x128] sm:$0xff]
          %v1836 = vld [vmem:[#allocation9 + $0x130] sm:$0xff]
          %v1837 = vld [vmem:[#allocation9 + $0x138] sm:$0xff]
          %v1838 = vld [vmem:[#allocation9 + $0x140] sm:$0xff]
          %v1839 = vld [vmem:[#allocation9 + $0x148] sm:$0xff]
          %v1840 = vld [vmem:[#allocation9 + $0x150] sm:$0xff]
          %v1841 = vld [vmem:[#allocation9 + $0x158] sm:$0xff]
          %v1842 = vld [vmem:[#allocation9 + $0x160] sm:$0xff]
          %v1843 = vld [vmem:[#allocation9 + $0x168] sm:$0xff]
          %v1844 = vld [vmem:[#allocation9 + $0x170] sm:$0xff]
          %v1845 = vld [vmem:[#allocation9 + $0x178] sm:$0xff]
          %v1846 = vld [vmem:[#allocation9 + $0x180] sm:$0xff]
          %v1847 = vld [vmem:[#allocation9 + $0x188] sm:$0xff]
          %v1848 = vld [vmem:[#allocation9 + $0x190] sm:$0xff]
          %v1849 = vld [vmem:[#allocation9 + $0x198] sm:$0xff]
          %v1850 = vld [vmem:[#allocation9 + $0x1a0] sm:$0xff]
          %v1851 = vld [vmem:[#allocation9 + $0x1a8] sm:$0xff]
          %v1852 = vld [vmem:[#allocation9 + $0x1b0] sm:$0xff]
          %v1853 = vld [vmem:[#allocation9 + $0x1b8] sm:$0xff]
          %v1854 = vld [vmem:[#allocation9 + $0x1c0] sm:$0xff]
          %v1855 = vld [vmem:[#allocation9 + $0x1c8] sm:$0xff]
          %v1856 = vld [vmem:[#allocation9 + $0x1d0] sm:$0xff]
          %v1857 = vld [vmem:[#allocation9 + $0x1d8] sm:$0xff]
          %v1858 = vld [vmem:[#allocation9 + $0x1e0] sm:$0xff]
          %v1859 = vld [vmem:[#allocation9 + $0x1e8] sm:$0xff]
          %v1860 = vld [vmem:[#allocation9 + $0x1f0] sm:$0xff]
          %v1861 = vld [vmem:[#allocation9 + $0x1f8] sm:$0xff]
          %v1862 = vld [vmem:[#allocation9 + $0x200] sm:$0xff]
          %v1863 = vld [vmem:[#allocation9 + $0x208] sm:$0xff]
          %v1864 = vld [vmem:[#allocation9 + $0x210] sm:$0xff]
          %v1865 = vld [vmem:[#allocation9 + $0x218] sm:$0xff]
          %v1866 = vld [vmem:[#allocation9 + $0x220] sm:$0xff]
          %v1867 = vld [vmem:[#allocation9 + $0x228] sm:$0xff]
          %v1868 = vld [vmem:[#allocation9 + $0x230] sm:$0xff]
          %v1869 = vld [vmem:[#allocation9 + $0x238] sm:$0xff]
          %v1870 = vld [vmem:[#allocation9 + $0x240] sm:$0xff]
          %v1871 = vld [vmem:[#allocation9 + $0x248] sm:$0xff]
          %v1872 = vld [vmem:[#allocation9 + $0x250] sm:$0xff]
          %v1873 = vld [vmem:[#allocation9 + $0x258] sm:$0xff]
          %v1874 = vld [vmem:[#allocation9 + $0x260] sm:$0xff]
          %v1875 = vld [vmem:[#allocation9 + $0x268] sm:$0xff]
          %v1876 = vld [vmem:[#allocation9 + $0x270] sm:$0xff]
          %v1877 = vld [vmem:[#allocation9 + $0x278] sm:$0xff]
          %v1878 = vld [vmem:[#allocation9 + $0x280] sm:$0xff]
          %v1879 = vld [vmem:[#allocation9 + $0x288] sm:$0xff]
          %v1880 = vld [vmem:[#allocation9 + $0x290] sm:$0xff]
          %v1881 = vld [vmem:[#allocation9 + $0x298] sm:$0xff]
          %v1882 = vld [vmem:[#allocation9 + $0x2a0] sm:$0xff]
          %v1883 = vld [vmem:[#allocation9 + $0x2a8] sm:$0xff]
          %v1884 = vld [vmem:[#allocation9 + $0x2b0] sm:$0xff]
          %v1885 = vld [vmem:[#allocation9 + $0x2b8] sm:$0xff]
          %v1886 = vld [vmem:[#allocation9 + $0x2c0] sm:$0xff]
          %v1887 = vld [vmem:[#allocation9 + $0x2c8] sm:$0xff]
          %v1888 = vld [vmem:[#allocation9 + $0x2d0] sm:$0xff]
          %v1889 = vld [vmem:[#allocation9 + $0x2d8] sm:$0xff]
          %v1890 = vld [vmem:[#allocation9 + $0x2e0] sm:$0xff]
          %v1891 = vld [vmem:[#allocation9 + $0x2e8] sm:$0xff]
          %v1892 = vld [vmem:[#allocation9 + $0x2f0] sm:$0xff]
          %v1893 = vld [vmem:[#allocation9 + $0x2f8] sm:$0xff]
          %v1894 = vld [vmem:[#allocation9 + $0x300] sm:$0xff]
          %v1895 = vld [vmem:[#allocation9 + $0x308] sm:$0xff]
          %v1896 = vld [vmem:[#allocation9 + $0x310] sm:$0xff]
          %v1897 = vld [vmem:[#allocation9 + $0x318] sm:$0xff]
          %v1898 = vld [vmem:[#allocation9 + $0x320] sm:$0xff]
          %v1899 = vld [vmem:[#allocation9 + $0x328] sm:$0xff]
          %v1900 = vld [vmem:[#allocation9 + $0x330] sm:$0xff]
          %v1901 = vld [vmem:[#allocation9 + $0x338] sm:$0xff]
          %v1902 = vld [vmem:[#allocation9 + $0x340] sm:$0xff]
          %v1903 = vld [vmem:[#allocation9 + $0x348] sm:$0xff]
          %v1904 = vld [vmem:[#allocation9 + $0x350] sm:$0xff]
          %v1905 = vld [vmem:[#allocation9 + $0x358] sm:$0xff]
          %v1906 = vld [vmem:[#allocation9 + $0x360] sm:$0xff]
          %v1907 = vld [vmem:[#allocation9 + $0x368] sm:$0xff]
          %v1908 = vld [vmem:[#allocation9 + $0x370] sm:$0xff]
          %v1909 = vld [vmem:[#allocation9 + $0x378] sm:$0xff]
          %v1910 = vld [vmem:[#allocation9 + $0x380] sm:$0xff]
          %v1911 = vld [vmem:[#allocation9 + $0x388] sm:$0xff]
          %v1912 = vld [vmem:[#allocation9 + $0x390] sm:$0xff]
          %v1913 = vld [vmem:[#allocation9 + $0x398] sm:$0xff]
          %v1914 = vld [vmem:[#allocation9 + $0x3a0] sm:$0xff]
          %v1915 = vld [vmem:[#allocation9 + $0x3a8] sm:$0xff]
          %v1916 = vld [vmem:[#allocation9 + $0x3b0] sm:$0xff]
          %v1917 = vld [vmem:[#allocation9 + $0x3b8] sm:$0xff]
          %v1918 = vld [vmem:[#allocation9 + $0x3c0] sm:$0xff]
          %v1919 = vld [vmem:[#allocation9 + $0x3c8] sm:$0xff]
          %v1920 = vld [vmem:[#allocation9 + $0x3d0] sm:$0xff]
          %v1921 = vld [vmem:[#allocation9 + $0x3d8] sm:$0xff]
          %v1922 = vld [vmem:[#allocation9 + $0x3e0] sm:$0xff]
          %v1923 = vld [vmem:[#allocation9 + $0x3e8] sm:$0xff]
          %v1924 = vld [vmem:[#allocation9 + $0x3f0] sm:$0xff]
          %v1925 = vld [vmem:[#allocation9 + $0x3f8] sm:$0xff]
          %v1926 = vld [vmem:[%s10] sm:$0xf]
          %v1928 = vlaneseq
          %v1929 = vshrl.u32 %v1928, 7
          %v1930 = vsub.s32 0, %v1929
          %v1931 = vrot.slane %v1926, %v1930
          %v1932 = vlaneseq
          %v1933 = vshrl.u32 %v1932, 7
          %v1934 = vsub.s32 1, %v1933
          %v1935 = vrot.slane %v1926, %v1934
          %v1936 = vlaneseq
          %v1937 = vshrl.u32 %v1936, 7
          %v1938 = vsub.s32 2, %v1937
          %v1939 = vrot.slane %v1926, %v1938
          %v1940 = vlaneseq
          %v1941 = vshrl.u32 %v1940, 7
          %v1942 = vsub.s32 3, %v1941
          %v1943 = vrot.slane %v1926, %v1942
          %v2076 = vunpack.c.l.b16 %v1798
          %v2077 = vunpack.c.h.b16 %v1798
          %v2078 = vunpack.c.l.b16 %v1799
          %v2079 = vunpack.c.h.b16 %v1799
          %v2080 = vunpack.c.l.b16 %v1800
          %v2081 = vunpack.c.h.b16 %v1800
          %v2082 = vunpack.c.l.b16 %v1801
          %v2083 = vunpack.c.h.b16 %v1801
          %v2084 = vunpack.c.l.b16 %v1802
          %v2085 = vunpack.c.h.b16 %v1802
          %v2086 = vunpack.c.l.b16 %v1803
          %v2087 = vunpack.c.h.b16 %v1803
          %v2088 = vunpack.c.l.b16 %v1804
          %v2089 = vunpack.c.h.b16 %v1804
          %v2090 = vunpack.c.l.b16 %v1805
          %v2091 = vunpack.c.h.b16 %v1805
          %v2092 = vunpack.c.l.b16 %v1806
          %v2093 = vunpack.c.h.b16 %v1806
          %v2094 = vunpack.c.l.b16 %v1807
          %v2095 = vunpack.c.h.b16 %v1807
          %v2096 = vunpack.c.l.b16 %v1808
          %v2097 = vunpack.c.h.b16 %v1808
          %v2098 = vunpack.c.l.b16 %v1809
          %v2099 = vunpack.c.h.b16 %v1809
          %v2100 = vunpack.c.l.b16 %v1810
          %v2101 = vunpack.c.h.b16 %v1810
          %v2102 = vunpack.c.l.b16 %v1811
          %v2103 = vunpack.c.h.b16 %v1811
          %v2104 = vunpack.c.l.b16 %v1812
          %v2105 = vunpack.c.h.b16 %v1812
          %v2106 = vunpack.c.l.b16 %v1813
          %v2107 = vunpack.c.h.b16 %v1813
          %v2108 = vunpack.c.l.b16 %v1814
          %v2109 = vunpack.c.h.b16 %v1814
          %v2110 = vunpack.c.l.b16 %v1815
          %v2111 = vunpack.c.h.b16 %v1815
          %v2112 = vunpack.c.l.b16 %v1816
          %v2113 = vunpack.c.h.b16 %v1816
          %v2114 = vunpack.c.l.b16 %v1817
          %v2115 = vunpack.c.h.b16 %v1817
          %v2116 = vunpack.c.l.b16 %v1818
          %v2117 = vunpack.c.h.b16 %v1818
          %v2118 = vunpack.c.l.b16 %v1819
          %v2119 = vunpack.c.h.b16 %v1819
          %v2120 = vunpack.c.l.b16 %v1820
          %v2121 = vunpack.c.h.b16 %v1820
          %v2122 = vunpack.c.l.b16 %v1821
          %v2123 = vunpack.c.h.b16 %v1821
          %v2124 = vunpack.c.l.b16 %v1822
          %v2125 = vunpack.c.h.b16 %v1822
          %v2126 = vunpack.c.l.b16 %v1823
          %v2127 = vunpack.c.h.b16 %v1823
          %v2128 = vunpack.c.l.b16 %v1824
          %v2129 = vunpack.c.h.b16 %v1824
          %v2130 = vunpack.c.l.b16 %v1825
          %v2131 = vunpack.c.h.b16 %v1825
          %v2132 = vunpack.c.l.b16 %v1826
          %v2133 = vunpack.c.h.b16 %v1826
          %v2134 = vunpack.c.l.b16 %v1827
          %v2135 = vunpack.c.h.b16 %v1827
          %v2136 = vunpack.c.l.b16 %v1828
          %v2137 = vunpack.c.h.b16 %v1828
          %v2138 = vunpack.c.l.b16 %v1829
          %v2139 = vunpack.c.h.b16 %v1829
          %v2140 = vunpack.c.l.b16 %v1830
          %v2141 = vunpack.c.h.b16 %v1830
          %v2142 = vunpack.c.l.b16 %v1831
          %v2143 = vunpack.c.h.b16 %v1831
          %v2144 = vunpack.c.l.b16 %v1832
          %v2145 = vunpack.c.h.b16 %v1832
          %v2146 = vunpack.c.l.b16 %v1833
          %v2147 = vunpack.c.h.b16 %v1833
          %v2148 = vunpack.c.l.b16 %v1834
          %v2149 = vunpack.c.h.b16 %v1834
          %v2150 = vunpack.c.l.b16 %v1835
          %v2151 = vunpack.c.h.b16 %v1835
          %v2152 = vunpack.c.l.b16 %v1836
          %v2153 = vunpack.c.h.b16 %v1836
          %v2154 = vunpack.c.l.b16 %v1837
          %v2155 = vunpack.c.h.b16 %v1837
          %v2156 = vunpack.c.l.b16 %v1838
          %v2157 = vunpack.c.h.b16 %v1838
          %v2158 = vunpack.c.l.b16 %v1839
          %v2159 = vunpack.c.h.b16 %v1839
          %v2160 = vunpack.c.l.b16 %v1840
          %v2161 = vunpack.c.h.b16 %v1840
          %v2162 = vunpack.c.l.b16 %v1841
          %v2163 = vunpack.c.h.b16 %v1841
          %v2164 = vunpack.c.l.b16 %v1842
          %v2165 = vunpack.c.h.b16 %v1842
          %v2166 = vunpack.c.l.b16 %v1843
          %v2167 = vunpack.c.h.b16 %v1843
          %v2168 = vunpack.c.l.b16 %v1844
          %v2169 = vunpack.c.h.b16 %v1844
          %v2170 = vunpack.c.l.b16 %v1845
          %v2171 = vunpack.c.h.b16 %v1845
          %v2172 = vunpack.c.l.b16 %v1846
          %v2173 = vunpack.c.h.b16 %v1846
          %v2174 = vunpack.c.l.b16 %v1847
          %v2175 = vunpack.c.h.b16 %v1847
          %v2176 = vunpack.c.l.b16 %v1848
          %v2177 = vunpack.c.h.b16 %v1848
          %v2178 = vunpack.c.l.b16 %v1849
          %v2179 = vunpack.c.h.b16 %v1849
          %v2180 = vunpack.c.l.b16 %v1850
          %v2181 = vunpack.c.h.b16 %v1850
          %v2182 = vunpack.c.l.b16 %v1851
          %v2183 = vunpack.c.h.b16 %v1851
          %v2184 = vunpack.c.l.b16 %v1852
          %v2185 = vunpack.c.h.b16 %v1852
          %v2186 = vunpack.c.l.b16 %v1853
          %v2187 = vunpack.c.h.b16 %v1853
          %v2188 = vunpack.c.l.b16 %v1854
          %v2189 = vunpack.c.h.b16 %v1854
          %v2190 = vunpack.c.l.b16 %v1855
          %v2191 = vunpack.c.h.b16 %v1855
          %v2192 = vunpack.c.l.b16 %v1856
          %v2193 = vunpack.c.h.b16 %v1856
          %v2194 = vunpack.c.l.b16 %v1857
          %v2195 = vunpack.c.h.b16 %v1857
          %v2196 = vunpack.c.l.b16 %v1858
          %v2197 = vunpack.c.h.b16 %v1858
          %v2198 = vunpack.c.l.b16 %v1859
          %v2199 = vunpack.c.h.b16 %v1859
          %v2200 = vunpack.c.l.b16 %v1860
          %v2201 = vunpack.c.h.b16 %v1860
          %v2202 = vunpack.c.l.b16 %v1861
          %v2203 = vunpack.c.h.b16 %v1861
          %v2204 = vunpack.c.l.b16 %v1862
          %v2205 = vunpack.c.h.b16 %v1862
          %v2206 = vunpack.c.l.b16 %v1863
          %v2207 = vunpack.c.h.b16 %v1863
          %v2208 = vunpack.c.l.b16 %v1864
          %v2209 = vunpack.c.h.b16 %v1864
          %v2210 = vunpack.c.l.b16 %v1865
          %v2211 = vunpack.c.h.b16 %v1865
          %v2212 = vunpack.c.l.b16 %v1866
          %v2213 = vunpack.c.h.b16 %v1866
          %v2214 = vunpack.c.l.b16 %v1867
          %v2215 = vunpack.c.h.b16 %v1867
          %v2216 = vunpack.c.l.b16 %v1868
          %v2217 = vunpack.c.h.b16 %v1868
          %v2218 = vunpack.c.l.b16 %v1869
          %v2219 = vunpack.c.h.b16 %v1869
          %v2220 = vunpack.c.l.b16 %v1870
          %v2221 = vunpack.c.h.b16 %v1870
          %v2222 = vunpack.c.l.b16 %v1871
          %v2223 = vunpack.c.h.b16 %v1871
          %v2224 = vunpack.c.l.b16 %v1872
          %v2225 = vunpack.c.h.b16 %v1872
          %v2226 = vunpack.c.l.b16 %v1873
          %v2227 = vunpack.c.h.b16 %v1873
          %v2228 = vunpack.c.l.b16 %v1874
          %v2229 = vunpack.c.h.b16 %v1874
          %v2230 = vunpack.c.l.b16 %v1875
          %v2231 = vunpack.c.h.b16 %v1875
          %v2232 = vunpack.c.l.b16 %v1876
          %v2233 = vunpack.c.h.b16 %v1876
          %v2234 = vunpack.c.l.b16 %v1877
          %v2235 = vunpack.c.h.b16 %v1877
          %v2236 = vunpack.c.l.b16 %v1878
          %v2237 = vunpack.c.h.b16 %v1878
          %v2238 = vunpack.c.l.b16 %v1879
          %v2239 = vunpack.c.h.b16 %v1879
          %v2240 = vunpack.c.l.b16 %v1880
          %v2241 = vunpack.c.h.b16 %v1880
          %v2242 = vunpack.c.l.b16 %v1881
          %v2243 = vunpack.c.h.b16 %v1881
          %v2244 = vunpack.c.l.b16 %v1882
          %v2245 = vunpack.c.h.b16 %v1882
          %v2246 = vunpack.c.l.b16 %v1883
          %v2247 = vunpack.c.h.b16 %v1883
          %v2248 = vunpack.c.l.b16 %v1884
          %v2249 = vunpack.c.h.b16 %v1884
          %v2250 = vunpack.c.l.b16 %v1885
          %v2251 = vunpack.c.h.b16 %v1885
          %v2252 = vunpack.c.l.b16 %v1886
          %v2253 = vunpack.c.h.b16 %v1886
          %v2254 = vunpack.c.l.b16 %v1887
          %v2255 = vunpack.c.h.b16 %v1887
          %v2256 = vunpack.c.l.b16 %v1888
          %v2257 = vunpack.c.h.b16 %v1888
          %v2258 = vunpack.c.l.b16 %v1889
          %v2259 = vunpack.c.h.b16 %v1889
          %v2260 = vunpack.c.l.b16 %v1890
          %v2261 = vunpack.c.h.b16 %v1890
          %v2262 = vunpack.c.l.b16 %v1891
          %v2263 = vunpack.c.h.b16 %v1891
          %v2264 = vunpack.c.l.b16 %v1892
          %v2265 = vunpack.c.h.b16 %v1892
          %v2266 = vunpack.c.l.b16 %v1893
          %v2267 = vunpack.c.h.b16 %v1893
          %v2268 = vunpack.c.l.b16 %v1894
          %v2269 = vunpack.c.h.b16 %v1894
          %v2270 = vunpack.c.l.b16 %v1895
          %v2271 = vunpack.c.h.b16 %v1895
          %v2272 = vunpack.c.l.b16 %v1896
          %v2273 = vunpack.c.h.b16 %v1896
          %v2274 = vunpack.c.l.b16 %v1897
          %v2275 = vunpack.c.h.b16 %v1897
          %v2276 = vunpack.c.l.b16 %v1898
          %v2277 = vunpack.c.h.b16 %v1898
          %v2278 = vunpack.c.l.b16 %v1899
          %v2279 = vunpack.c.h.b16 %v1899
          %v2280 = vunpack.c.l.b16 %v1900
          %v2281 = vunpack.c.h.b16 %v1900
          %v2282 = vunpack.c.l.b16 %v1901
          %v2283 = vunpack.c.h.b16 %v1901
          %v2284 = vunpack.c.l.b16 %v1902
          %v2285 = vunpack.c.h.b16 %v1902
          %v2286 = vunpack.c.l.b16 %v1903
          %v2287 = vunpack.c.h.b16 %v1903
          %v2288 = vunpack.c.l.b16 %v1904
          %v2289 = vunpack.c.h.b16 %v1904
          %v2290 = vunpack.c.l.b16 %v1905
          %v2291 = vunpack.c.h.b16 %v1905
          %v2292 = vunpack.c.l.b16 %v1906
          %v2293 = vunpack.c.h.b16 %v1906
          %v2294 = vunpack.c.l.b16 %v1907
          %v2295 = vunpack.c.h.b16 %v1907
          %v2296 = vunpack.c.l.b16 %v1908
          %v2297 = vunpack.c.h.b16 %v1908
          %v2298 = vunpack.c.l.b16 %v1909
          %v2299 = vunpack.c.h.b16 %v1909
          %v2300 = vunpack.c.l.b16 %v1910
          %v2301 = vunpack.c.h.b16 %v1910
          %v2302 = vunpack.c.l.b16 %v1911
          %v2303 = vunpack.c.h.b16 %v1911
          %v2304 = vunpack.c.l.b16 %v1912
          %v2305 = vunpack.c.h.b16 %v1912
          %v2306 = vunpack.c.l.b16 %v1913
          %v2307 = vunpack.c.h.b16 %v1913
          %v2308 = vunpack.c.l.b16 %v1914
          %v2309 = vunpack.c.h.b16 %v1914
          %v2310 = vunpack.c.l.b16 %v1915
          %v2311 = vunpack.c.h.b16 %v1915
          %v2312 = vunpack.c.l.b16 %v1916
          %v2313 = vunpack.c.h.b16 %v1916
          %v2314 = vunpack.c.l.b16 %v1917
          %v2315 = vunpack.c.h.b16 %v1917
          %v2316 = vunpack.c.l.b16 %v1918
          %v2317 = vunpack.c.h.b16 %v1918
          %v2318 = vunpack.c.l.b16 %v1919
          %v2319 = vunpack.c.h.b16 %v1919
          %v2320 = vunpack.c.l.b16 %v1920
          %v2321 = vunpack.c.h.b16 %v1920
          %v2322 = vunpack.c.l.b16 %v1921
          %v2323 = vunpack.c.h.b16 %v1921
          %v2324 = vunpack.c.l.b16 %v1922
          %v2325 = vunpack.c.h.b16 %v1922
          %v2326 = vunpack.c.l.b16 %v1923
          %v2327 = vunpack.c.h.b16 %v1923
          %v2328 = vunpack.c.l.b16 %v1924
          %v2329 = vunpack.c.h.b16 %v1924
          %v2330 = vunpack.c.l.b16 %v1925
          %v2331 = vunpack.c.h.b16 %v1925
          %v2332 = vpack.c.b16 %v2080, %v2076
          %v2333 = vpack.c.b16 %v2081, %v2077
          %v2334 = vpack.c.b16 %v2082, %v2078
          %v2335 = vpack.c.b16 %v2083, %v2079
          %v2336 = vpack.c.b16 %v2088, %v2084
          %v2337 = vpack.c.b16 %v2089, %v2085
          %v2338 = vpack.c.b16 %v2090, %v2086
          %v2339 = vpack.c.b16 %v2091, %v2087
          %v2340 = vpack.c.b16 %v2096, %v2092
          %v2341 = vpack.c.b16 %v2097, %v2093
          %v2342 = vpack.c.b16 %v2098, %v2094
          %v2343 = vpack.c.b16 %v2099, %v2095
          %v2344 = vpack.c.b16 %v2104, %v2100
          %v2345 = vpack.c.b16 %v2105, %v2101
          %v2346 = vpack.c.b16 %v2106, %v2102
          %v2347 = vpack.c.b16 %v2107, %v2103
          %v2348 = vpack.c.b16 %v2112, %v2108
          %v2349 = vpack.c.b16 %v2113, %v2109
          %v2350 = vpack.c.b16 %v2114, %v2110
          %v2351 = vpack.c.b16 %v2115, %v2111
          %v2352 = vpack.c.b16 %v2120, %v2116
          %v2353 = vpack.c.b16 %v2121, %v2117
          %v2354 = vpack.c.b16 %v2122, %v2118
          %v2355 = vpack.c.b16 %v2123, %v2119
          %v2356 = vpack.c.b16 %v2128, %v2124
          %v2357 = vpack.c.b16 %v2129, %v2125
          %v2358 = vpack.c.b16 %v2130, %v2126
          %v2359 = vpack.c.b16 %v2131, %v2127
          %v2360 = vpack.c.b16 %v2136, %v2132
          %v2361 = vpack.c.b16 %v2137, %v2133
          %v2362 = vpack.c.b16 %v2138, %v2134
          %v2363 = vpack.c.b16 %v2139, %v2135
          %v2364 = vpack.c.b16 %v2144, %v2140
          %v2365 = vpack.c.b16 %v2145, %v2141
          %v2366 = vpack.c.b16 %v2146, %v2142
          %v2367 = vpack.c.b16 %v2147, %v2143
          %v2368 = vpack.c.b16 %v2152, %v2148
          %v2369 = vpack.c.b16 %v2153, %v2149
          %v2370 = vpack.c.b16 %v2154, %v2150
          %v2371 = vpack.c.b16 %v2155, %v2151
          %v2372 = vpack.c.b16 %v2160, %v2156
          %v2373 = vpack.c.b16 %v2161, %v2157
          %v2374 = vpack.c.b16 %v2162, %v2158
          %v2375 = vpack.c.b16 %v2163, %v2159
          %v2376 = vpack.c.b16 %v2168, %v2164
          %v2377 = vpack.c.b16 %v2169, %v2165
          %v2378 = vpack.c.b16 %v2170, %v2166
          %v2379 = vpack.c.b16 %v2171, %v2167
          %v2380 = vpack.c.b16 %v2176, %v2172
          %v2381 = vpack.c.b16 %v2177, %v2173
          %v2382 = vpack.c.b16 %v2178, %v2174
          %v2383 = vpack.c.b16 %v2179, %v2175
          %v2384 = vpack.c.b16 %v2184, %v2180
          %v2385 = vpack.c.b16 %v2185, %v2181
          %v2386 = vpack.c.b16 %v2186, %v2182
          %v2387 = vpack.c.b16 %v2187, %v2183
          %v2388 = vpack.c.b16 %v2192, %v2188
          %v2389 = vpack.c.b16 %v2193, %v2189
          %v2390 = vpack.c.b16 %v2194, %v2190
          %v2391 = vpack.c.b16 %v2195, %v2191
          %v2392 = vpack.c.b16 %v2200, %v2196
          %v2393 = vpack.c.b16 %v2201, %v2197
          %v2394 = vpack.c.b16 %v2202, %v2198
          %v2395 = vpack.c.b16 %v2203, %v2199
          %v2396 = vpack.c.b16 %v2208, %v2204
          %v2397 = vpack.c.b16 %v2209, %v2205
          %v2398 = vpack.c.b16 %v2210, %v2206
          %v2399 = vpack.c.b16 %v2211, %v2207
          %v2400 = vpack.c.b16 %v2216, %v2212
          %v2401 = vpack.c.b16 %v2217, %v2213
          %v2402 = vpack.c.b16 %v2218, %v2214
          %v2403 = vpack.c.b16 %v2219, %v2215
          %v2404 = vpack.c.b16 %v2224, %v2220
          %v2405 = vpack.c.b16 %v2225, %v2221
          %v2406 = vpack.c.b16 %v2226, %v2222
          %v2407 = vpack.c.b16 %v2227, %v2223
          %v2408 = vpack.c.b16 %v2232, %v2228
          %v2409 = vpack.c.b16 %v2233, %v2229
          %v2410 = vpack.c.b16 %v2234, %v2230
          %v2411 = vpack.c.b16 %v2235, %v2231
          %v2412 = vpack.c.b16 %v2240, %v2236
          %v2413 = vpack.c.b16 %v2241, %v2237
          %v2414 = vpack.c.b16 %v2242, %v2238
          %v2415 = vpack.c.b16 %v2243, %v2239
          %v2416 = vpack.c.b16 %v2248, %v2244
          %v2417 = vpack.c.b16 %v2249, %v2245
          %v2418 = vpack.c.b16 %v2250, %v2246
          %v2419 = vpack.c.b16 %v2251, %v2247
          %v2420 = vpack.c.b16 %v2256, %v2252
          %v2421 = vpack.c.b16 %v2257, %v2253
          %v2422 = vpack.c.b16 %v2258, %v2254
          %v2423 = vpack.c.b16 %v2259, %v2255
          %v2424 = vpack.c.b16 %v2264, %v2260
          %v2425 = vpack.c.b16 %v2265, %v2261
          %v2426 = vpack.c.b16 %v2266, %v2262
          %v2427 = vpack.c.b16 %v2267, %v2263
          %v2428 = vpack.c.b16 %v2272, %v2268
          %v2429 = vpack.c.b16 %v2273, %v2269
          %v2430 = vpack.c.b16 %v2274, %v2270
          %v2431 = vpack.c.b16 %v2275, %v2271
          %v2432 = vpack.c.b16 %v2280, %v2276
          %v2433 = vpack.c.b16 %v2281, %v2277
          %v2434 = vpack.c.b16 %v2282, %v2278
          %v2435 = vpack.c.b16 %v2283, %v2279
          %v2436 = vpack.c.b16 %v2288, %v2284
          %v2437 = vpack.c.b16 %v2289, %v2285
          %v2438 = vpack.c.b16 %v2290, %v2286
          %v2439 = vpack.c.b16 %v2291, %v2287
          %v2440 = vpack.c.b16 %v2296, %v2292
          %v2441 = vpack.c.b16 %v2297, %v2293
          %v2442 = vpack.c.b16 %v2298, %v2294
          %v2443 = vpack.c.b16 %v2299, %v2295
          %v2444 = vpack.c.b16 %v2304, %v2300
          %v2445 = vpack.c.b16 %v2305, %v2301
          %v2446 = vpack.c.b16 %v2306, %v2302
          %v2447 = vpack.c.b16 %v2307, %v2303
          %v2448 = vpack.c.b16 %v2312, %v2308
          %v2449 = vpack.c.b16 %v2313, %v2309
          %v2450 = vpack.c.b16 %v2314, %v2310
          %v2451 = vpack.c.b16 %v2315, %v2311
          %v2452 = vpack.c.b16 %v2320, %v2316
          %v2453 = vpack.c.b16 %v2321, %v2317
          %v2454 = vpack.c.b16 %v2322, %v2318
          %v2455 = vpack.c.b16 %v2323, %v2319
          %v2456 = vpack.c.b16 %v2328, %v2324
          %v2457 = vpack.c.b16 %v2329, %v2325
          %v2458 = vpack.c.b16 %v2330, %v2326
          %v2459 = vpack.c.b16 %v2331, %v2327
          %2588 = vmatprep.subr.bf16.mxu0 %v2333
          %2589 = vmatpush1.bf16.msra.mxu0 %v2332
          %2590 = vmatprep.subr.bf16.mxu0 %v2337
          %2591 = vmatpush1.bf16.msra.mxu0 %v2336
          %2592 = vmatprep.subr.bf16.mxu0 %v2341
          %2593 = vmatpush1.bf16.msra.mxu0 %v2340
          %2594 = vmatprep.subr.bf16.mxu0 %v2345
          %2595 = vmatpush1.bf16.msra.mxu0 %v2344
          %2596 = vmatprep.subr.bf16.mxu0 %v2349
          %2597 = vmatpush1.bf16.msra.mxu0 %v2348
          %2598 = vmatprep.subr.bf16.mxu0 %v2353
          %2599 = vmatpush1.bf16.msra.mxu0 %v2352
          %2600 = vmatprep.subr.bf16.mxu0 %v2357
          %2601 = vmatpush1.bf16.msra.mxu0 %v2356
          %2602 = vmatprep.subr.bf16.mxu0 %v2361
          %2603 = vmatpush1.bf16.msra.mxu0 %v2360
          %2604 = vmatprep.subr.bf16.mxu0 %v2365
          %2605 = vmatpush1.bf16.msra.mxu0 %v2364
          %2606 = vmatprep.subr.bf16.mxu0 %v2369
          %2607 = vmatpush1.bf16.msra.mxu0 %v2368
          %2608 = vmatprep.subr.bf16.mxu0 %v2373
          %2609 = vmatpush1.bf16.msra.mxu0 %v2372
          %2610 = vmatprep.subr.bf16.mxu0 %v2377
          %2611 = vmatpush1.bf16.msra.mxu0 %v2376
          %2612 = vmatprep.subr.bf16.mxu0 %v2381
          %2613 = vmatpush1.bf16.msra.mxu0 %v2380
          %2614 = vmatprep.subr.bf16.mxu0 %v2385
          %2615 = vmatpush1.bf16.msra.mxu0 %v2384
          %2616 = vmatprep.subr.bf16.mxu0 %v2389
          %2617 = vmatpush1.bf16.msra.mxu0 %v2388
          %2618 = vmatprep.subr.bf16.mxu0 %v2393
          %2619 = vmatpush1.bf16.msra.mxu0 %v2392
          %2620 = vmatprep.mubr.bf16.mxu0 %v1795
          %2621 = vmatmul.mubr.bf16.gmra.mrb[0].mxu0 %v1794
          %v2622 = vpop.f32.mrb[0].mxu0
          %v2623 = vadd.f32 %v1931, %v2622
          %v2624 = vpop.f32.mrb[0].mxu0
          %v2625 = vadd.f32 %v1935, %v2624
          %v2626 = vpop.f32.mrb[0].mxu0
          %v2627 = vpop.f32.mrb[0].mxu0
          %2628 = vdwg.mxu0
          %2629 = vmatprep.subr.bf16.mxu0 %v2397
          %2630 = vmatpush1.bf16.msra.mxu0 %v2396
          %2631 = vmatprep.subr.bf16.mxu0 %v2401
          %2632 = vmatpush1.bf16.msra.mxu0 %v2400
          %2633 = vmatprep.subr.bf16.mxu0 %v2405
          %2634 = vmatpush1.bf16.msra.mxu0 %v2404
          %2635 = vmatprep.subr.bf16.mxu0 %v2409
          %2636 = vmatpush1.bf16.msra.mxu0 %v2408
          %2637 = vmatprep.subr.bf16.mxu0 %v2413
          %2638 = vmatpush1.bf16.msra.mxu0 %v2412
          %2639 = vmatprep.subr.bf16.mxu0 %v2417
          %2640 = vmatpush1.bf16.msra.mxu0 %v2416
          %2641 = vmatprep.subr.bf16.mxu0 %v2421
          %2642 = vmatpush1.bf16.msra.mxu0 %v2420
          %2643 = vmatprep.subr.bf16.mxu0 %v2425
          %2644 = vmatpush1.bf16.msra.mxu0 %v2424
          %2645 = vmatprep.subr.bf16.mxu0 %v2429
          %2646 = vmatpush1.bf16.msra.mxu0 %v2428
          %2647 = vmatprep.subr.bf16.mxu0 %v2433
          %2648 = vmatpush1.bf16.msra.mxu0 %v2432
          %2649 = vmatprep.subr.bf16.mxu0 %v2437
          %2650 = vmatpush1.bf16.msra.mxu0 %v2436
          %2651 = vmatprep.subr.bf16.mxu0 %v2441
          %2652 = vmatpush1.bf16.msra.mxu0 %v2440
          %2653 = vmatprep.subr.bf16.mxu0 %v2445
          %2654 = vmatpush1.bf16.msra.mxu0 %v2444
          %2655 = vmatprep.subr.bf16.mxu0 %v2449
          %2656 = vmatpush1.bf16.msra.mxu0 %v2448
          %2657 = vmatprep.subr.bf16.mxu0 %v2453
          %2658 = vmatpush1.bf16.msra.mxu0 %v2452
          %2659 = vmatprep.subr.bf16.mxu0 %v2457
          %2660 = vmatpush1.bf16.msra.mxu0 %v2456
          %2661 = vmatprep.mubr.bf16.mxu0 %v1797
          %2662 = vmatmul.mubr.bf16.gmra.mrb[0].mxu0 %v1796
          %v2663 = vpop.f32.mrb[0].mxu0
          %v2664 = vadd.f32 %v2623, %v2663
          %v2665 = vpop.f32.mrb[0].mxu0
          %v2666 = vadd.f32 %v2625, %v2665
          %v2667 = vpop.f32.mrb[0].mxu0
          %v2668 = vpop.f32.mrb[0].mxu0
          %2669 = vdwg.mxu0
          %2670 = vmatprep.subr.bf16.mxu0 %v2335
          %2671 = vmatpush1.bf16.msra.mxu0 %v2334
          %2672 = vmatprep.subr.bf16.mxu0 %v2339
          %2673 = vmatpush1.bf16.msra.mxu0 %v2338
          %2674 = vmatprep.subr.bf16.mxu0 %v2343
          %2675 = vmatpush1.bf16.msra.mxu0 %v2342
          %2676 = vmatprep.subr.bf16.mxu0 %v2347
          %2677 = vmatpush1.bf16.msra.mxu0 %v2346
          %2678 = vmatprep.subr.bf16.mxu0 %v2351
          %2679 = vmatpush1.bf16.msra.mxu0 %v2350
          %2680 = vmatprep.subr.bf16.mxu0 %v2355
          %2681 = vmatpush1.bf16.msra.mxu0 %v2354
          %2682 = vmatprep.subr.bf16.mxu0 %v2359
          %2683 = vmatpush1.bf16.msra.mxu0 %v2358
          %2684 = vmatprep.subr.bf16.mxu0 %v2363
          %2685 = vmatpush1.bf16.msra.mxu0 %v2362
          %2686 = vmatprep.subr.bf16.mxu0 %v2367
          %2687 = vmatpush1.bf16.msra.mxu0 %v2366
          %2688 = vmatprep.subr.bf16.mxu0 %v2371
          %2689 = vmatpush1.bf16.msra.mxu0 %v2370
          %2690 = vmatprep.subr.bf16.mxu0 %v2375
          %2691 = vmatpush1.bf16.msra.mxu0 %v2374
          %2692 = vmatprep.subr.bf16.mxu0 %v2379
          %2693 = vmatpush1.bf16.msra.mxu0 %v2378
          %2694 = vmatprep.subr.bf16.mxu0 %v2383
          %2695 = vmatpush1.bf16.msra.mxu0 %v2382
          %2696 = vmatprep.subr.bf16.mxu0 %v2387
          %2697 = vmatpush1.bf16.msra.mxu0 %v2386
          %2698 = vmatprep.subr.bf16.mxu0 %v2391
          %2699 = vmatpush1.bf16.msra.mxu0 %v2390
          %2700 = vmatprep.subr.bf16.mxu0 %v2395
          %2701 = vmatpush1.bf16.msra.mxu0 %v2394
          %2702 = vmatprep.mubr.bf16.mxu0 %v1795
          %2703 = vmatmul.mubr.bf16.gmra.mrb[0].mxu0 %v1794
          %v2704 = vpop.f32.mrb[0].mxu0
          %v2705 = vadd.f32 %v1939, %v2704
          %v2706 = vpop.f32.mrb[0].mxu0
          %v2707 = vadd.f32 %v1943, %v2706
          %v2708 = vpop.f32.mrb[0].mxu0
          %v2709 = vpop.f32.mrb[0].mxu0
          %2710 = vdwg.mxu0
          %2711 = vmatprep.subr.bf16.mxu0 %v2399
          %2712 = vmatpush1.bf16.msra.mxu0 %v2398
          %2713 = vmatprep.subr.bf16.mxu0 %v2403
          %2714 = vmatpush1.bf16.msra.mxu0 %v2402
          %2715 = vmatprep.subr.bf16.mxu0 %v2407
          %2716 = vmatpush1.bf16.msra.mxu0 %v2406
          %2717 = vmatprep.subr.bf16.mxu0 %v2411
          %2718 = vmatpush1.bf16.msra.mxu0 %v2410
          %2719 = vmatprep.subr.bf16.mxu0 %v2415
          %2720 = vmatpush1.bf16.msra.mxu0 %v2414
          %2721 = vmatprep.subr.bf16.mxu0 %v2419
          %2722 = vmatpush1.bf16.msra.mxu0 %v2418
          %2723 = vmatprep.subr.bf16.mxu0 %v2423
          %2724 = vmatpush1.bf16.msra.mxu0 %v2422
          %2725 = vmatprep.subr.bf16.mxu0 %v2427
          %2726 = vmatpush1.bf16.msra.mxu0 %v2426
          %2727 = vmatprep.subr.bf16.mxu0 %v2431
          %2728 = vmatpush1.bf16.msra.mxu0 %v2430
          %2729 = vmatprep.subr.bf16.mxu0 %v2435
          %2730 = vmatpush1.bf16.msra.mxu0 %v2434
          %2731 = vmatprep.subr.bf16.mxu0 %v2439
          %2732 = vmatpush1.bf16.msra.mxu0 %v2438
          %2733 = vmatprep.subr.bf16.mxu0 %v2443
          %2734 = vmatpush1.bf16.msra.mxu0 %v2442
          %2735 = vmatprep.subr.bf16.mxu0 %v2447
          %2736 = vmatpush1.bf16.msra.mxu0 %v2446
          %2737 = vmatprep.subr.bf16.mxu0 %v2451
          %2738 = vmatpush1.bf16.msra.mxu0 %v2450
          %2739 = vmatprep.subr.bf16.mxu0 %v2455
          %2740 = vmatpush1.bf16.msra.mxu0 %v2454
          %2741 = vmatprep.subr.bf16.mxu0 %v2459
          %2742 = vmatpush1.bf16.msra.mxu0 %v2458
          %2743 = vmatprep.mubr.bf16.mxu0 %v1797
          %2744 = vmatmul.mubr.bf16.gmra.mrb[0].mxu0 %v1796
          %v2745 = vpop.f32.mrb[0].mxu0
          %v2746 = vadd.f32 %v2705, %v2745
          %v2747 = vpop.f32.mrb[0].mxu0
          %v2748 = vadd.f32 %v2707, %v2747
          %v2749 = vpop.f32.mrb[0].mxu0
          %v2750 = vpop.f32.mrb[0].mxu0
          %2751 = vdwg.mxu0
          %v2752 = vmax.f32 %v2664, 0.0
          %v2753 = vmax.f32 %v2666, 0.0
          %v2754 = vmax.f32 %v2746, 0.0
          %v2755 = vmax.f32 %v2748, 0.0
          %v2756 = vpack.c.bf16 %v2752, %v2752
          %v2757 = vpack.c.bf16 %v2753, %v2753
          %v2758 = vpack.c.bf16 %v2754, %v2754
          %v2759 = vpack.c.bf16 %v2755, %v2755
          %v2760 = vld [vmem:[#allocation11] sm:$0xff]
          %v2761 = vld [vmem:[#allocation11 + $0x8] sm:$0xff]
          %v2762 = vld [vmem:[#allocation11 + $0x10] sm:$0xff]
          %v2763 = vld [vmem:[#allocation11 + $0x18] sm:$0xff]
          %v2764 = vld [vmem:[#allocation11 + $0x20] sm:$0xff]
          %v2765 = vld [vmem:[#allocation11 + $0x28] sm:$0xff]
          %v2766 = vld [vmem:[#allocation11 + $0x30] sm:$0xff]
          %v2767 = vld [vmem:[#allocation11 + $0x38] sm:$0xff]
          %v2768 = vld [vmem:[#allocation11 + $0x40] sm:$0xff]
          %v2769 = vld [vmem:[#allocation11 + $0x48] sm:$0xff]
          %v2770 = vld [vmem:[#allocation11 + $0x50] sm:$0xff]
          %v2771 = vld [vmem:[#allocation11 + $0x58] sm:$0xff]
          %v2772 = vld [vmem:[#allocation11 + $0x60] sm:$0xff]
          %v2773 = vld [vmem:[#allocation11 + $0x68] sm:$0xff]
          %v2774 = vld [vmem:[#allocation11 + $0x70] sm:$0xff]
          %v2775 = vld [vmem:[#allocation11 + $0x78] sm:$0xff]
          %v2776 = vld [vmem:[#allocation11 + $0x80] sm:$0xff]
          %v2777 = vld [vmem:[#allocation11 + $0x88] sm:$0xff]
          %v2778 = vld [vmem:[#allocation11 + $0x90] sm:$0xff]
          %v2779 = vld [vmem:[#allocation11 + $0x98] sm:$0xff]
          %v2780 = vld [vmem:[#allocation11 + $0xa0] sm:$0xff]
          %v2781 = vld [vmem:[#allocation11 + $0xa8] sm:$0xff]
          %v2782 = vld [vmem:[#allocation11 + $0xb0] sm:$0xff]
          %v2783 = vld [vmem:[#allocation11 + $0xb8] sm:$0xff]
          %v2784 = vld [vmem:[#allocation11 + $0xc0] sm:$0xff]
          %v2785 = vld [vmem:[#allocation11 + $0xc8] sm:$0xff]
          %v2786 = vld [vmem:[#allocation11 + $0xd0] sm:$0xff]
          %v2787 = vld [vmem:[#allocation11 + $0xd8] sm:$0xff]
          %v2788 = vld [vmem:[#allocation11 + $0xe0] sm:$0xff]
          %v2789 = vld [vmem:[#allocation11 + $0xe8] sm:$0xff]
          %v2790 = vld [vmem:[#allocation11 + $0xf0] sm:$0xff]
          %v2791 = vld [vmem:[#allocation11 + $0xf8] sm:$0xff]
          %v2792 = vld [vmem:[#allocation11 + $0x100] sm:$0xff]
          %v2793 = vld [vmem:[#allocation11 + $0x108] sm:$0xff]
          %v2794 = vld [vmem:[#allocation11 + $0x110] sm:$0xff]
          %v2795 = vld [vmem:[#allocation11 + $0x118] sm:$0xff]
          %v2796 = vld [vmem:[#allocation11 + $0x120] sm:$0xff]
          %v2797 = vld [vmem:[#allocation11 + $0x128] sm:$0xff]
          %v2798 = vld [vmem:[#allocation11 + $0x130] sm:$0xff]
          %v2799 = vld [vmem:[#allocation11 + $0x138] sm:$0xff]
          %v2800 = vld [vmem:[#allocation11 + $0x140] sm:$0xff]
          %v2801 = vld [vmem:[#allocation11 + $0x148] sm:$0xff]
          %v2802 = vld [vmem:[#allocation11 + $0x150] sm:$0xff]
          %v2803 = vld [vmem:[#allocation11 + $0x158] sm:$0xff]
          %v2804 = vld [vmem:[#allocation11 + $0x160] sm:$0xff]
          %v2805 = vld [vmem:[#allocation11 + $0x168] sm:$0xff]
          %v2806 = vld [vmem:[#allocation11 + $0x170] sm:$0xff]
          %v2807 = vld [vmem:[#allocation11 + $0x178] sm:$0xff]
          %v2808 = vld [vmem:[#allocation11 + $0x180] sm:$0xff]
          %v2809 = vld [vmem:[#allocation11 + $0x188] sm:$0xff]
          %v2810 = vld [vmem:[#allocation11 + $0x190] sm:$0xff]
          %v2811 = vld [vmem:[#allocation11 + $0x198] sm:$0xff]
          %v2812 = vld [vmem:[#allocation11 + $0x1a0] sm:$0xff]
          %v2813 = vld [vmem:[#allocation11 + $0x1a8] sm:$0xff]
          %v2814 = vld [vmem:[#allocation11 + $0x1b0] sm:$0xff]
          %v2815 = vld [vmem:[#allocation11 + $0x1b8] sm:$0xff]
          %v2816 = vld [vmem:[#allocation11 + $0x1c0] sm:$0xff]
          %v2817 = vld [vmem:[#allocation11 + $0x1c8] sm:$0xff]
          %v2818 = vld [vmem:[#allocation11 + $0x1d0] sm:$0xff]
          %v2819 = vld [vmem:[#allocation11 + $0x1d8] sm:$0xff]
          %v2820 = vld [vmem:[#allocation11 + $0x1e0] sm:$0xff]
          %v2821 = vld [vmem:[#allocation11 + $0x1e8] sm:$0xff]
          %v2822 = vld [vmem:[#allocation11 + $0x1f0] sm:$0xff]
          %v2823 = vld [vmem:[#allocation11 + $0x1f8] sm:$0xff]
          %v2824 = vld [vmem:[%s12] sm:$0x3]
          %v2826 = vlaneseq
          %v2827 = vshrl.u32 %v2826, 7
          %v2828 = vsub.s32 0, %v2827
          %v2829 = vrot.slane %v2824, %v2828
          %v2830 = vlaneseq
          %v2831 = vshrl.u32 %v2830, 7
          %v2832 = vsub.s32 1, %v2831
          %v2833 = vrot.slane %v2824, %v2832
          %v2900 = vunpack.c.l.b16 %v2760
          %v2901 = vunpack.c.h.b16 %v2760
          %v2902 = vunpack.c.l.b16 %v2761
          %v2903 = vunpack.c.h.b16 %v2761
          %v2904 = vunpack.c.l.b16 %v2762
          %v2905 = vunpack.c.h.b16 %v2762
          %v2906 = vunpack.c.l.b16 %v2763
          %v2907 = vunpack.c.h.b16 %v2763
          %v2908 = vunpack.c.l.b16 %v2764
          %v2909 = vunpack.c.h.b16 %v2764
          %v2910 = vunpack.c.l.b16 %v2765
          %v2911 = vunpack.c.h.b16 %v2765
          %v2912 = vunpack.c.l.b16 %v2766
          %v2913 = vunpack.c.h.b16 %v2766
          %v2914 = vunpack.c.l.b16 %v2767
          %v2915 = vunpack.c.h.b16 %v2767
          %v2916 = vunpack.c.l.b16 %v2768
          %v2917 = vunpack.c.h.b16 %v2768
          %v2918 = vunpack.c.l.b16 %v2769
          %v2919 = vunpack.c.h.b16 %v2769
          %v2920 = vunpack.c.l.b16 %v2770
          %v2921 = vunpack.c.h.b16 %v2770
          %v2922 = vunpack.c.l.b16 %v2771
          %v2923 = vunpack.c.h.b16 %v2771
          %v2924 = vunpack.c.l.b16 %v2772
          %v2925 = vunpack.c.h.b16 %v2772
          %v2926 = vunpack.c.l.b16 %v2773
          %v2927 = vunpack.c.h.b16 %v2773
          %v2928 = vunpack.c.l.b16 %v2774
          %v2929 = vunpack.c.h.b16 %v2774
          %v2930 = vunpack.c.l.b16 %v2775
          %v2931 = vunpack.c.h.b16 %v2775
          %v2932 = vunpack.c.l.b16 %v2776
          %v2933 = vunpack.c.h.b16 %v2776
          %v2934 = vunpack.c.l.b16 %v2777
          %v2935 = vunpack.c.h.b16 %v2777
          %v2936 = vunpack.c.l.b16 %v2778
          %v2937 = vunpack.c.h.b16 %v2778
          %v2938 = vunpack.c.l.b16 %v2779
          %v2939 = vunpack.c.h.b16 %v2779
          %v2940 = vunpack.c.l.b16 %v2780
          %v2941 = vunpack.c.h.b16 %v2780
          %v2942 = vunpack.c.l.b16 %v2781
          %v2943 = vunpack.c.h.b16 %v2781
          %v2944 = vunpack.c.l.b16 %v2782
          %v2945 = vunpack.c.h.b16 %v2782
          %v2946 = vunpack.c.l.b16 %v2783
          %v2947 = vunpack.c.h.b16 %v2783
          %v2948 = vunpack.c.l.b16 %v2784
          %v2949 = vunpack.c.h.b16 %v2784
          %v2950 = vunpack.c.l.b16 %v2785
          %v2951 = vunpack.c.h.b16 %v2785
          %v2952 = vunpack.c.l.b16 %v2786
          %v2953 = vunpack.c.h.b16 %v2786
          %v2954 = vunpack.c.l.b16 %v2787
          %v2955 = vunpack.c.h.b16 %v2787
          %v2956 = vunpack.c.l.b16 %v2788
          %v2957 = vunpack.c.h.b16 %v2788
          %v2958 = vunpack.c.l.b16 %v2789
          %v2959 = vunpack.c.h.b16 %v2789
          %v2960 = vunpack.c.l.b16 %v2790
          %v2961 = vunpack.c.h.b16 %v2790
          %v2962 = vunpack.c.l.b16 %v2791
          %v2963 = vunpack.c.h.b16 %v2791
          %v2964 = vunpack.c.l.b16 %v2792
          %v2965 = vunpack.c.h.b16 %v2792
          %v2966 = vunpack.c.l.b16 %v2793
          %v2967 = vunpack.c.h.b16 %v2793
          %v2968 = vunpack.c.l.b16 %v2794
          %v2969 = vunpack.c.h.b16 %v2794
          %v2970 = vunpack.c.l.b16 %v2795
          %v2971 = vunpack.c.h.b16 %v2795
          %v2972 = vunpack.c.l.b16 %v2796
          %v2973 = vunpack.c.h.b16 %v2796
          %v2974 = vunpack.c.l.b16 %v2797
          %v2975 = vunpack.c.h.b16 %v2797
          %v2976 = vunpack.c.l.b16 %v2798
          %v2977 = vunpack.c.h.b16 %v2798
          %v2978 = vunpack.c.l.b16 %v2799
          %v2979 = vunpack.c.h.b16 %v2799
          %v2980 = vunpack.c.l.b16 %v2800
          %v2981 = vunpack.c.h.b16 %v2800
          %v2982 = vunpack.c.l.b16 %v2801
          %v2983 = vunpack.c.h.b16 %v2801
          %v2984 = vunpack.c.l.b16 %v2802
          %v2985 = vunpack.c.h.b16 %v2802
          %v2986 = vunpack.c.l.b16 %v2803
          %v2987 = vunpack.c.h.b16 %v2803
          %v2988 = vunpack.c.l.b16 %v2804
          %v2989 = vunpack.c.h.b16 %v2804
          %v2990 = vunpack.c.l.b16 %v2805
          %v2991 = vunpack.c.h.b16 %v2805
          %v2992 = vunpack.c.l.b16 %v2806
          %v2993 = vunpack.c.h.b16 %v2806
          %v2994 = vunpack.c.l.b16 %v2807
          %v2995 = vunpack.c.h.b16 %v2807
          %v2996 = vunpack.c.l.b16 %v2808
          %v2997 = vunpack.c.h.b16 %v2808
          %v2998 = vunpack.c.l.b16 %v2809
          %v2999 = vunpack.c.h.b16 %v2809
          %v3000 = vunpack.c.l.b16 %v2810
          %v3001 = vunpack.c.h.b16 %v2810
          %v3002 = vunpack.c.l.b16 %v2811
          %v3003 = vunpack.c.h.b16 %v2811
          %v3004 = vunpack.c.l.b16 %v2812
          %v3005 = vunpack.c.h.b16 %v2812
          %v3006 = vunpack.c.l.b16 %v2813
          %v3007 = vunpack.c.h.b16 %v2813
          %v3008 = vunpack.c.l.b16 %v2814
          %v3009 = vunpack.c.h.b16 %v2814
          %v3010 = vunpack.c.l.b16 %v2815
          %v3011 = vunpack.c.h.b16 %v2815
          %v3012 = vunpack.c.l.b16 %v2816
          %v3013 = vunpack.c.h.b16 %v2816
          %v3014 = vunpack.c.l.b16 %v2817
          %v3015 = vunpack.c.h.b16 %v2817
          %v3016 = vunpack.c.l.b16 %v2818
          %v3017 = vunpack.c.h.b16 %v2818
          %v3018 = vunpack.c.l.b16 %v2819
          %v3019 = vunpack.c.h.b16 %v2819
          %v3020 = vunpack.c.l.b16 %v2820
          %v3021 = vunpack.c.h.b16 %v2820
          %v3022 = vunpack.c.l.b16 %v2821
          %v3023 = vunpack.c.h.b16 %v2821
          %v3024 = vunpack.c.l.b16 %v2822
          %v3025 = vunpack.c.h.b16 %v2822
          %v3026 = vunpack.c.l.b16 %v2823
          %v3027 = vunpack.c.h.b16 %v2823
          %v3028 = vpack.c.b16 %v2902, %v2900
          %v3029 = vpack.c.b16 %v2903, %v2901
          %v3030 = vpack.c.b16 %v2906, %v2904
          %v3031 = vpack.c.b16 %v2907, %v2905
          %v3032 = vpack.c.b16 %v2910, %v2908
          %v3033 = vpack.c.b16 %v2911, %v2909
          %v3034 = vpack.c.b16 %v2914, %v2912
          %v3035 = vpack.c.b16 %v2915, %v2913
          %v3036 = vpack.c.b16 %v2918, %v2916
          %v3037 = vpack.c.b16 %v2919, %v2917
          %v3038 = vpack.c.b16 %v2922, %v2920
          %v3039 = vpack.c.b16 %v2923, %v2921
          %v3040 = vpack.c.b16 %v2926, %v2924
          %v3041 = vpack.c.b16 %v2927, %v2925
          %v3042 = vpack.c.b16 %v2930, %v2928
          %v3043 = vpack.c.b16 %v2931, %v2929
          %v3044 = vpack.c.b16 %v2934, %v2932
          %v3045 = vpack.c.b16 %v2935, %v2933
          %v3046 = vpack.c.b16 %v2938, %v2936
          %v3047 = vpack.c.b16 %v2939, %v2937
          %v3048 = vpack.c.b16 %v2942, %v2940
          %v3049 = vpack.c.b16 %v2943, %v2941
          %v3050 = vpack.c.b16 %v2946, %v2944
          %v3051 = vpack.c.b16 %v2947, %v2945
          %v3052 = vpack.c.b16 %v2950, %v2948
          %v3053 = vpack.c.b16 %v2951, %v2949
          %v3054 = vpack.c.b16 %v2954, %v2952
          %v3055 = vpack.c.b16 %v2955, %v2953
          %v3056 = vpack.c.b16 %v2958, %v2956
          %v3057 = vpack.c.b16 %v2959, %v2957
          %v3058 = vpack.c.b16 %v2962, %v2960
          %v3059 = vpack.c.b16 %v2963, %v2961
          %v3060 = vpack.c.b16 %v2966, %v2964
          %v3061 = vpack.c.b16 %v2967, %v2965
          %v3062 = vpack.c.b16 %v2970, %v2968
          %v3063 = vpack.c.b16 %v2971, %v2969
          %v3064 = vpack.c.b16 %v2974, %v2972
          %v3065 = vpack.c.b16 %v2975, %v2973
          %v3066 = vpack.c.b16 %v2978, %v2976
          %v3067 = vpack.c.b16 %v2979, %v2977
          %v3068 = vpack.c.b16 %v2982, %v2980
          %v3069 = vpack.c.b16 %v2983, %v2981
          %v3070 = vpack.c.b16 %v2986, %v2984
          %v3071 = vpack.c.b16 %v2987, %v2985
          %v3072 = vpack.c.b16 %v2990, %v2988
          %v3073 = vpack.c.b16 %v2991, %v2989
          %v3074 = vpack.c.b16 %v2994, %v2992
          %v3075 = vpack.c.b16 %v2995, %v2993
          %v3076 = vpack.c.b16 %v2998, %v2996
          %v3077 = vpack.c.b16 %v2999, %v2997
          %v3078 = vpack.c.b16 %v3002, %v3000
          %v3079 = vpack.c.b16 %v3003, %v3001
          %v3080 = vpack.c.b16 %v3006, %v3004
          %v3081 = vpack.c.b16 %v3007, %v3005
          %v3082 = vpack.c.b16 %v3010, %v3008
          %v3083 = vpack.c.b16 %v3011, %v3009
          %v3084 = vpack.c.b16 %v3014, %v3012
          %v3085 = vpack.c.b16 %v3015, %v3013
          %v3086 = vpack.c.b16 %v3018, %v3016
          %v3087 = vpack.c.b16 %v3019, %v3017
          %v3088 = vpack.c.b16 %v3022, %v3020
          %v3089 = vpack.c.b16 %v3023, %v3021
          %v3090 = vpack.c.b16 %v3026, %v3024
          %v3091 = vpack.c.b16 %v3027, %v3025
          %3156 = vmatprep.subr.bf16.mxu0 %v3029
          %3157 = vmatpush1.bf16.msra.mxu0 %v3028
          %3158 = vmatprep.subr.bf16.mxu0 %v3031
          %3159 = vmatpush1.bf16.msra.mxu0 %v3030
          %3160 = vmatprep.subr.bf16.mxu0 %v3033
          %3161 = vmatpush1.bf16.msra.mxu0 %v3032
          %3162 = vmatprep.subr.bf16.mxu0 %v3035
          %3163 = vmatpush1.bf16.msra.mxu0 %v3034
          %3164 = vmatprep.subr.bf16.mxu0 %v3037
          %3165 = vmatpush1.bf16.msra.mxu0 %v3036
          %3166 = vmatprep.subr.bf16.mxu0 %v3039
          %3167 = vmatpush1.bf16.msra.mxu0 %v3038
          %3168 = vmatprep.subr.bf16.mxu0 %v3041
          %3169 = vmatpush1.bf16.msra.mxu0 %v3040
          %3170 = vmatprep.subr.bf16.mxu0 %v3043
          %3171 = vmatpush1.bf16.msra.mxu0 %v3042
          %3172 = vmatprep.subr.bf16.mxu0 %v3045
          %3173 = vmatpush1.bf16.msra.mxu0 %v3044
          %3174 = vmatprep.subr.bf16.mxu0 %v3047
          %3175 = vmatpush1.bf16.msra.mxu0 %v3046
          %3176 = vmatprep.subr.bf16.mxu0 %v3049
          %3177 = vmatpush1.bf16.msra.mxu0 %v3048
          %3178 = vmatprep.subr.bf16.mxu0 %v3051
          %3179 = vmatpush1.bf16.msra.mxu0 %v3050
          %3180 = vmatprep.subr.bf16.mxu0 %v3053
          %3181 = vmatpush1.bf16.msra.mxu0 %v3052
          %3182 = vmatprep.subr.bf16.mxu0 %v3055
          %3183 = vmatpush1.bf16.msra.mxu0 %v3054
          %3184 = vmatprep.subr.bf16.mxu0 %v3057
          %3185 = vmatpush1.bf16.msra.mxu0 %v3056
          %3186 = vmatprep.subr.bf16.mxu0 %v3059
          %3187 = vmatpush1.bf16.msra.mxu0 %v3058
          %3188 = vmatprep.mubr.bf16.mxu0 %v2757
          %3189 = vmatmul.mubr.bf16.gmra.mrb[0].mxu0 %v2756
          %v3190 = vpop.f32.mrb[0].mxu0
          %v3191 = vadd.f32 %v2829, %v3190
          %v3192 = vpop.f32.mrb[0].mxu0
          %v3193 = vadd.f32 %v2833, %v3192
          %v3194 = vpop.f32.mrb[0].mxu0
          %v3195 = vpop.f32.mrb[0].mxu0
          %3196 = vdwg.mxu0
          %3197 = vmatprep.subr.bf16.mxu0 %v3061
          %3198 = vmatpush1.bf16.msra.mxu0 %v3060
          %3199 = vmatprep.subr.bf16.mxu0 %v3063
          %3200 = vmatpush1.bf16.msra.mxu0 %v3062
          %3201 = vmatprep.subr.bf16.mxu0 %v3065
          %3202 = vmatpush1.bf16.msra.mxu0 %v3064
          %3203 = vmatprep.subr.bf16.mxu0 %v3067
          %3204 = vmatpush1.bf16.msra.mxu0 %v3066
          %3205 = vmatprep.subr.bf16.mxu0 %v3069
          %3206 = vmatpush1.bf16.msra.mxu0 %v3068
          %3207 = vmatprep.subr.bf16.mxu0 %v3071
          %3208 = vmatpush1.bf16.msra.mxu0 %v3070
          %3209 = vmatprep.subr.bf16.mxu0 %v3073
          %3210 = vmatpush1.bf16.msra.mxu0 %v3072
          %3211 = vmatprep.subr.bf16.mxu0 %v3075
          %3212 = vmatpush1.bf16.msra.mxu0 %v3074
          %3213 = vmatprep.subr.bf16.mxu0 %v3077
          %3214 = vmatpush1.bf16.msra.mxu0 %v3076
          %3215 = vmatprep.subr.bf16.mxu0 %v3079
          %3216 = vmatpush1.bf16.msra.mxu0 %v3078
          %3217 = vmatprep.subr.bf16.mxu0 %v3081
          %3218 = vmatpush1.bf16.msra.mxu0 %v3080
          %3219 = vmatprep.subr.bf16.mxu0 %v3083
          %3220 = vmatpush1.bf16.msra.mxu0 %v3082
          %3221 = vmatprep.subr.bf16.mxu0 %v3085
          %3222 = vmatpush1.bf16.msra.mxu0 %v3084
          %3223 = vmatprep.subr.bf16.mxu0 %v3087
          %3224 = vmatpush1.bf16.msra.mxu0 %v3086
          %3225 = vmatprep.subr.bf16.mxu0 %v3089
          %3226 = vmatpush1.bf16.msra.mxu0 %v3088
          %3227 = vmatprep.subr.bf16.mxu0 %v3091
          %3228 = vmatpush1.bf16.msra.mxu0 %v3090
          %3229 = vmatprep.mubr.bf16.mxu0 %v2759
          %3230 = vmatmul.mubr.bf16.gmra.mrb[0].mxu0 %v2758
          %v3231 = vpop.f32.mrb[0].mxu0
          %v3232 = vadd.f32 %v3191, %v3231
          %v3233 = vpop.f32.mrb[0].mxu0
          %v3234 = vadd.f32 %v3193, %v3233
          %v3235 = vpop.f32.mrb[0].mxu0
          %v3236 = vpop.f32.mrb[0].mxu0
          %3237 = vdwg.mxu0
          %v3238 = vmax.f32 %v3232, 0.0
          %v3239 = vmax.f32 %v3234, 0.0
          %v3240 = vpack.c.bf16 %v3238, %v3238
          %v3241 = vpack.c.bf16 %v3239, %v3239
          %v3242 = vld [vmem:[#allocation12] sm:$0xf]
          %v3243 = vld [vmem:[#allocation12 + $0x4] sm:$0xf]
          %v3244 = vld [vmem:[#allocation12 + $0x8] sm:$0xf]
          %v3245 = vld [vmem:[#allocation12 + $0xc] sm:$0xf]
          %v3246 = vld [vmem:[#allocation12 + $0x10] sm:$0xf]
          %v3247 = vld [vmem:[#allocation12 + $0x14] sm:$0xf]
          %v3248 = vld [vmem:[#allocation12 + $0x18] sm:$0xf]
          %v3249 = vld [vmem:[#allocation12 + $0x1c] sm:$0xf]
          %v3250 = vld [vmem:[#allocation12 + $0x20] sm:$0xf]
          %v3251 = vld [vmem:[#allocation12 + $0x24] sm:$0xf]
          %v3252 = vld [vmem:[#allocation12 + $0x28] sm:$0xf]
          %v3253 = vld [vmem:[#allocation12 + $0x2c] sm:$0xf]
          %v3254 = vld [vmem:[#allocation12 + $0x30] sm:$0xf]
          %v3255 = vld [vmem:[#allocation12 + $0x34] sm:$0xf]
          %v3256 = vld [vmem:[#allocation12 + $0x38] sm:$0xf]
          %v3257 = vld [vmem:[#allocation12 + $0x3c] sm:$0xf]
          %v3258 = vld [vmem:[#allocation12 + $0x40] sm:$0xf]
          %v3259 = vld [vmem:[#allocation12 + $0x44] sm:$0xf]
          %v3260 = vld [vmem:[#allocation12 + $0x48] sm:$0xf]
          %v3261 = vld [vmem:[#allocation12 + $0x4c] sm:$0xf]
          %v3262 = vld [vmem:[#allocation12 + $0x50] sm:$0xf]
          %v3263 = vld [vmem:[#allocation12 + $0x54] sm:$0xf]
          %v3264 = vld [vmem:[#allocation12 + $0x58] sm:$0xf]
          %v3265 = vld [vmem:[#allocation12 + $0x5c] sm:$0xf]
          %v3266 = vld [vmem:[#allocation12 + $0x60] sm:$0xf]
          %v3267 = vld [vmem:[#allocation12 + $0x64] sm:$0xf]
          %v3268 = vld [vmem:[#allocation12 + $0x68] sm:$0xf]
          %v3269 = vld [vmem:[#allocation12 + $0x6c] sm:$0xf]
          %v3270 = vld [vmem:[#allocation12 + $0x70] sm:$0xf]
          %v3271 = vld [vmem:[#allocation12 + $0x74] sm:$0xf]
          %v3272 = vld [vmem:[#allocation12 + $0x78] sm:$0xf]
          %v3273 = vld [vmem:[#allocation12 + $0x7c] sm:$0xf]
          %v3274 = vld [vmem:[%s14] sm:$0x1]
          %v3276 = vlaneseq
          %v3277 = vshrl.u32 %v3276, 7
          %v3278 = vsub.s32 0, %v3277
          %v3279 = vrot.slane %v3274, %v3278
          %v3313 = vunpack.c.l.b16 %v3242
          %v3314 = vunpack.c.l.b16 %v3243
          %v3315 = vunpack.c.l.b16 %v3244
          %v3316 = vunpack.c.l.b16 %v3245
          %v3317 = vunpack.c.l.b16 %v3246
          %v3318 = vunpack.c.l.b16 %v3247
          %v3319 = vunpack.c.l.b16 %v3248
          %v3320 = vunpack.c.l.b16 %v3249
          %v3321 = vunpack.c.l.b16 %v3250
          %v3322 = vunpack.c.l.b16 %v3251
          %v3323 = vunpack.c.l.b16 %v3252
          %v3324 = vunpack.c.l.b16 %v3253
          %v3325 = vunpack.c.l.b16 %v3254
          %v3326 = vunpack.c.l.b16 %v3255
          %v3327 = vunpack.c.l.b16 %v3256
          %v3328 = vunpack.c.l.b16 %v3257
          %v3329 = vunpack.c.l.b16 %v3258
          %v3330 = vunpack.c.l.b16 %v3259
          %v3331 = vunpack.c.l.b16 %v3260
          %v3332 = vunpack.c.l.b16 %v3261
          %v3333 = vunpack.c.l.b16 %v3262
          %v3334 = vunpack.c.l.b16 %v3263
          %v3335 = vunpack.c.l.b16 %v3264
          %v3336 = vunpack.c.l.b16 %v3265
          %v3337 = vunpack.c.l.b16 %v3266
          %v3338 = vunpack.c.l.b16 %v3267
          %v3339 = vunpack.c.l.b16 %v3268
          %v3340 = vunpack.c.l.b16 %v3269
          %v3341 = vunpack.c.l.b16 %v3270
          %v3342 = vunpack.c.l.b16 %v3271
          %v3343 = vunpack.c.l.b16 %v3272
          %v3344 = vunpack.c.l.b16 %v3273
          %v3345 = vpack.c.b16 %v3314, %v3313
          %v3346 = vpack.c.b16 %v3316, %v3315
          %v3347 = vpack.c.b16 %v3318, %v3317
          %v3348 = vpack.c.b16 %v3320, %v3319
          %v3349 = vpack.c.b16 %v3322, %v3321
          %v3350 = vpack.c.b16 %v3324, %v3323
          %v3351 = vpack.c.b16 %v3326, %v3325
          %v3352 = vpack.c.b16 %v3328, %v3327
          %v3353 = vpack.c.b16 %v3330, %v3329
          %v3354 = vpack.c.b16 %v3332, %v3331
          %v3355 = vpack.c.b16 %v3334, %v3333
          %v3356 = vpack.c.b16 %v3336, %v3335
          %v3357 = vpack.c.b16 %v3338, %v3337
          %v3358 = vpack.c.b16 %v3340, %v3339
          %v3359 = vpack.c.b16 %v3342, %v3341
          %v3360 = vpack.c.b16 %v3344, %v3343
          %3377 = vmatprep.subr.bf16.mxu0 0
          %3378 = vmatpush1.bf16.msra.mxu0 %v3345
          %3379 = vmatprep.subr.bf16.mxu0 0
          %3380 = vmatpush1.bf16.msra.mxu0 %v3346
          %3381 = vmatprep.subr.bf16.mxu0 0
          %3382 = vmatpush1.bf16.msra.mxu0 %v3347
          %3383 = vmatprep.subr.bf16.mxu0 0
          %3384 = vmatpush1.bf16.msra.mxu0 %v3348
          %3385 = vmatprep.subr.bf16.mxu0 0
          %3386 = vmatpush1.bf16.msra.mxu0 %v3349
          %3387 = vmatprep.subr.bf16.mxu0 0
          %3388 = vmatpush1.bf16.msra.mxu0 %v3350
          %3389 = vmatprep.subr.bf16.mxu0 0
          %3390 = vmatpush1.bf16.msra.mxu0 %v3351
          %3391 = vmatprep.subr.bf16.mxu0 0
          %3392 = vmatpush1.bf16.msra.mxu0 %v3352
          %3393 = vmatprep.subr.bf16.mxu0 0
          %3394 = vmatpush1.bf16.msra.mxu0 %v3353
          %3395 = vmatprep.subr.bf16.mxu0 0
          %3396 = vmatpush1.bf16.msra.mxu0 %v3354
          %3397 = vmatprep.subr.bf16.mxu0 0
          %3398 = vmatpush1.bf16.msra.mxu0 %v3355
          %3399 = vmatprep.subr.bf16.mxu0 0
          %3400 = vmatpush1.bf16.msra.mxu0 %v3356
          %3401 = vmatprep.subr.bf16.mxu0 0
          %3402 = vmatpush1.bf16.msra.mxu0 %v3357
          %3403 = vmatprep.subr.bf16.mxu0 0
          %3404 = vmatpush1.bf16.msra.mxu0 %v3358
          %3405 = vmatprep.subr.bf16.mxu0 0
          %3406 = vmatpush1.bf16.msra.mxu0 %v3359
          %3407 = vmatprep.subr.bf16.mxu0 0
          %3408 = vmatpush1.bf16.msra.mxu0 %v3360
          %3409 = vmatprep.mubr.bf16.mxu0 %v3241
          %3410 = vmatmul.mubr.bf16.gmra.mrb[0].mxu0 %v3240
          %v3411 = vpop.f32.mrb[0].mxu0
          %v3412 = vadd.f32 %v3279, %v3411
          %v3413 = vpop.f32.mrb[0].mxu0
          %v3414 = vpop.f32.mrb[0].mxu0
          %v3415 = vpop.f32.mrb[0].mxu0
          %3416 = vdwg.mxu0
          %3417 = vst [vmem:[%s596] sm:$0xff] %v3412
        $region112: #{tpu_custom_call.1} parent=79 // pred_fallthru
          _
        %s3418 = sand.u32 %s375, 1
        %s3419 = scalar_lea.sflag [#allocation5], %s3418
        %s3420 = sand.u32 %s375, 1
        %s3421 = smul.addr %s3420, 8
        %s3422 = scalar_lea.vmem [#allocation14], %s3421
        // Predicated region
        $region113: #{tpu_custom_call.1} parent=79 // pred_check
          %p3423 = pneg %p385
        $region114: #{tpu_custom_call.1} parent=79 // pred_check_branch
          %3425 = sbr.rel (%p3423) target = $region116
        $region115: #{tpu_custom_call.1} parent=79 // pred_region
          %s3427 = ssub.s32 128, 128
          %3428 = vsyncadd %s3419, %s3427
          %s3429 = smul.addr %s37, 128
          %s3430 = scalar_lea.hbm %s15, %s3429
          %s3432 = sshll.u32 %s3422, 4
          %s3433 = int_to_ptr.vmem [resolvable:$true] %s3432
          %3435 = dma.vmem_to_hbm [thread:$0]  %s3433, 128, %s3430, %s3419
        $region116: #{tpu_custom_call.1} parent=79 // pred_fallthru
          _
      $region80: #{tpu_custom_call.1} parent=5 // pred_fallthru
        _
      %p3436 = scmp.le.s32.totalorder 2, %s28
      // Predicated region
      $region117: #{tpu_custom_call.1} parent=5 // pred_check
        %p3437 = pneg %p3436
      $region118: #{tpu_custom_call.1} parent=5 // pred_check_branch
        %3439 = sbr.rel (%p3437) target = $region120
      $region119: #{tpu_custom_call.1} parent=5 // pred_region
        %s3440 = ssub.s32 %s28, 2
        // Predicated region
        $region121: #{tpu_custom_call.1} parent=119 // pred_check
          %p3441 = pneg %p391
        $region122: #{tpu_custom_call.1} parent=119 // pred_check_branch
          %3443 = sbr.rel (%p3441) target = $region124
        $region123: #{tpu_custom_call.1} parent=119 // pred_region
          %s3444 = sand.u32 %s376, 1
          %s3445 = scalar_lea.sflag [#allocation5], %s3444
          %s3446 = sand.u32 %s376, 1
          %s3447 = smul.addr %s3446, 8
          %s3448 = scalar_lea.vmem [#allocation14], %s3447
          %3449 = dma.done %s3445, 128
        $region124: #{tpu_custom_call.1} parent=119 // pred_fallthru
          _
      $region120: #{tpu_custom_call.1} parent=5 // pred_fallthru
        _
    $region6: #{tpu_custom_call.1} parent=1 // loop_footer
      %s32 = sadd.s32 1, %s28
    $region7: #{tpu_custom_call.1} parent=1 // loop_footer_branch
      %27 = sbr.rel target = $region3
    $region8: #{tpu_custom_call.1} parent=1 // loop_exit
      _
    %3450 = vsyncpa [#allocation4], 1
    %s3451 = scalar_lea.sflag [#allocation4], 1
    %3452 = vsyncpa %s3451, 1
    %3453 = vsyncpa [#allocation7], 1
    %3454 = vsyncpa [#allocation10], 1
    %3455 = vsyncpa [#allocation13], 1
    %3456 = vsyncpa [#allocation5], 1
    %s3457 = scalar_lea.sflag [#allocation5], 1
    %3458 = vsyncpa %s3457, 1

</llo_original>
